<compile_context>
chip_gen: v7x
topology: tpu7x:2x2x1
jax: 0.10.0
libtpu: 0.0.40
codegen_flags: <defaults>
</compile_context>

<pallas_src>
import functools

import jax
import jax.numpy as jnp
from jax import lax
from jax.experimental import pallas as pl
from jax.experimental.pallas import tpu as pltpu

INPUT_SIZE = 977          # fixed by the PyTorch module: nn.LSTM(977, hidden)
K_PAD = 1024              # contraction dim padded to 8*128 (clean MXU tiles)
_UNROLL = 8               # timesteps per unrolled group (one sublane tile)
_MAX_CHUNK = 512          # hard cap on seq rows resident per grid step
_HOIST_WHH_MAX_H = 64     # hoist w_hh into vregs only while it fits in vregs


def _pmf_lstm_kernel(x_ref, w_ih_ref, w_hh_ref, b_ref, w_fc_ref, b_fc_ref,
                     out_ref, xw_sc, h_sc, c_sc, *,
                     seq_len, chunk, hidden, needs_mask, hoist_whh):
    """One grid step: project a seq chunk, run its recurrence, fc at the end."""
    H = hidden
    step = pl.program_id(0)

    @pl.when(step == 0)
    def _init():
        h_sc[...] = jnp.zeros_like(h_sc)   # h0 = 0  (torch.zeros(1,1,H))
        c_sc[...] = jnp.zeros_like(c_sc)   # c0 = 0

    # Phase 1: input projection for this chunk on the MXU, bias folded in.
    # (chunk, 1024) @ (1024, 4H) -> (chunk, 4H), with combined b_ih + b_hh.
    xw_sc[...] = (jnp.dot(x_ref[...], w_ih_ref[...],
                          preferred_element_type=jnp.float32) + b_ref[...])

    # Phase 2: serial recurrence.
    # TODO(synk): remaining per-step lever is explicit MXU staging
    # (pltpu.matmul_push_rhs once per chunk + matmul_acc_lhs/matmul_pop per
    # step) to avoid re-pushing w_hh through the MXU on the critical chain;
    # kept on jnp.dot here for portability/correctness.
    w_hh = w_hh_ref[...] if hoist_whh else None   # small H: a few vregs only
    h = h_sc[...]
    c = c_sc[...]
    t0 = step * chunk

    def cell(gates_row, h, c, t):
        rhs = w_hh if hoist_whh else w_hh_ref[...]
        gates = gates_row + jnp.dot(h, rhs, preferred_element_type=jnp.float32)
        # Two full-width transcendentals instead of four quarter-lane ones.
        sig = jax.nn.sigmoid(gates)
        th = jnp.tanh(gates)
        i = sig[:, 0:H]
        f = sig[:, H:2 * H]
        o = sig[:, 3 * H:4 * H]
        g = th[:, 2 * H:3 * H]
        c_new = f * c + i * g
        h_new = o * jnp.tanh(c_new)
        if needs_mask:                     # padded tail timesteps keep h/c
            valid = t < seq_len
            h_new = jnp.where(valid, h_new, h)
            c_new = jnp.where(valid, c_new, c)
        return h_new, c_new

    def run_group(rows, base_t, h, c):
        # rows: (_UNROLL, 4H) chunk of precomputed projections; static unroll.
        for j in range(_UNROLL):
            h, c = cell(rows[j:j + 1, :], h, c, base_t + j)
        return h, c

    n_groups = chunk // _UNROLL            # chunk is always a multiple of 8
    if n_groups <= 4:
        # Short chunk: fully static, maximally visible to the scheduler.
        for gi in range(n_groups):
            rows = xw_sc[gi * _UNROLL:(gi + 1) * _UNROLL, :]
            h, c = run_group(rows, t0 + gi * _UNROLL, h, c)
    else:
        def group_body(gi, carry):
            h, c = carry
            base = pl.multiple_of(gi * _UNROLL, _UNROLL)
            rows = xw_sc[pl.ds(base, _UNROLL), :]   # one 8-row load per group
            return run_group(rows, t0 + base, h, c)
        h, c = lax.fori_loop(0, n_groups, group_body, (h, c))

    h_sc[...] = h
    c_sc[...] = c

    # Phase 3: fc on the final hidden state (only on the last grid step),
    # stored into a lane-dense (128-multiple) padded output.
    @pl.when(step == pl.num_programs(0) - 1)
    def _final():
        out_ref[...] = (jnp.dot(h, w_fc_ref[...],
                                preferred_element_type=jnp.float32)
                        + b_fc_ref[...])


def _round_up(x, m):
    return ((x + m - 1) // m) * m


def _vmem_capacity_bytes():
    """Per-core VMEM capacity; conservative fallback if the query fails."""
    try:
        cap = int(getattr(pltpu.get_tpu_info(), "vmem_capacity_bytes"))
        if cap > 0:
            return cap
    except Exception:
        pass
    return 64 << 20   # v7x physical VMEM per TensorCore (most restrictive)


def _estimate_vmem(chunk, H, O_pad, proj_itemsize, weight_bufs):
    """Rough per-step VMEM working set (bytes), with slack."""
    x_b = 2 * chunk * K_PAD * proj_itemsize            # double-buffered x slab
    xw_b = chunk * 4 * H * 4                            # projection scratch
    w_ih_b = weight_bufs * K_PAD * 4 * H * proj_itemsize
    w_hh_b = weight_bufs * H * 4 * H * 4
    w_fc_b = weight_bufs * H * O_pad * 4
    misc = (8 * H + 4 * O_pad) * 4 * weight_bufs + (2 << 20)
    return x_b + xw_b + w_ih_b + w_hh_b + w_fc_b + misc


def pmf_forward(x, params, *, proj_dtype=jnp.float32):
    """x: (1, seq, 977) float32 (batch_first; batch must be 1 like the module).

    proj_dtype=jnp.bfloat16 halves the x / w_ih DMA + MXU bytes (keep the
    default f32 when parity with the torch f32 reference is required).
    """
    assert x.ndim == 3 and x.shape[0] == 1 and x.shape[2] == INPUT_SIZE
    # TODO(synk): if batch > 1 ever exists, pack up to 8 sequences into the
    # sublane dim (h/c -> (B, H), xw rows (B, 4H)) instead of asserting B == 1.
    seq = x.shape[1]
    H = params["w_hh_t"].shape[0]
    O = params["w_fc_t"].shape[1]
    O_pad = _round_up(O, 128)                 # lane-dense output store
    proj_itemsize = jnp.dtype(proj_dtype).itemsize

    # Generation-aware chunk: largest multiple-of-8 chunk whose working set
    # fits in ~3/4 of this chip's VMEM (v5e/v6e 128 MiB, v7x 64 MiB).
    budget = (_vmem_capacity_bytes() * 3) // 4
    chunk = min(_round_up(max(seq, _UNROLL), _UNROLL), _MAX_CHUNK)
    while chunk > _UNROLL and _estimate_vmem(chunk, H, O_pad,
                                             proj_itemsize, 2) > budget:
        chunk = max(_UNROLL, _round_up(chunk // 2, _UNROLL))
    seq_pad = _round_up(seq, chunk)
    n_chunks = seq_pad // chunk
    needs_mask = seq_pad != seq
    hoist_whh = H <= _HOIST_WHH_MAX_H

    # Wrapper-side layout plumbing: pad K 977 -> 1024, pad seq to a multiple
    # of `chunk` (padded timesteps are masked in-kernel), pad fc output to 128.
    x2 = jnp.zeros((seq_pad, K_PAD), proj_dtype)
    x2 = x2.at[:seq, :INPUT_SIZE].set(x[0].astype(proj_dtype))
    w_ih = jnp.zeros((K_PAD, 4 * H), proj_dtype)
    w_ih = w_ih.at[:INPUT_SIZE, :].set(params["w_ih_t"].astype(proj_dtype))
    w_hh = params["w_hh_t"].astype(jnp.float32)
    b = (params["b_ih"] + params["b_hh"]).astype(jnp.float32).reshape(1, 4 * H)
    w_fc = jnp.zeros((H, O_pad), jnp.float32).at[:, :O].set(
        params["w_fc_t"].astype(jnp.float32))
    b_fc = jnp.zeros((1, O_pad), jnp.float32).at[0, :O].set(
        params["b_fc"].astype(jnp.float32))

    kernel = functools.partial(
        _pmf_lstm_kernel, seq_len=seq, chunk=chunk, hidden=H,
        needs_mask=needs_mask, hoist_whh=hoist_whh)

    def build(single_buffer_weights):
        if single_buffer_weights:
            # Grid-invariant weights: single-buffer to halve their VMEM cost.
            def w_spec(shape):
                return pl.BlockSpec(shape, lambda i: (0, 0),
                                    pipeline_mode=pl.Buffered(1))
        else:
            def w_spec(shape):
                return pl.BlockSpec(shape, lambda i: (0, 0))
        nbuf = 1 if single_buffer_weights else 2
        vmem_limit = int(min(max(_estimate_vmem(chunk, H, O_pad,
                                                proj_itemsize, nbuf),
                                 32 << 20),
                             budget))
        return pl.pallas_call(
            kernel,
            out_shape=jax.ShapeDtypeStruct((1, O_pad), jnp.float32),
            grid=(n_chunks,),
            in_specs=[
                pl.BlockSpec((chunk, K_PAD), lambda i: (i, 0)),  # x chunk
                w_spec((K_PAD, 4 * H)),                          # w_ih
                w_spec((H, 4 * H)),                              # w_hh
                w_spec((1, 4 * H)),                              # b_ih + b_hh
                w_spec((H, O_pad)),                              # w_fc (padded)
                w_spec((1, O_pad)),                              # b_fc (padded)
            ],
            out_specs=pl.BlockSpec((1, O_pad), lambda i: (0, 0)),
            scratch_shapes=[
                pltpu.VMEM((chunk, 4 * H), jnp.float32),  # chunk projections
                pltpu.VMEM((1, H), jnp.float32),          # h_t (persists)
                pltpu.VMEM((1, H), jnp.float32),          # c_t (persists)
            ],
            compiler_params=pltpu.CompilerParams(
                dimension_semantics=("arbitrary",),       # recurrence is serial
                vmem_limit_bytes=vmem_limit),
        )

    try:
        out = jax.block_until_ready(
            build(single_buffer_weights=True)(x2, w_ih, w_hh, b, w_fc, b_fc))
    except Exception:
        # pl.Buffered(1) single-buffering unsupported on this jax/libtpu:
        # fall back to default double-buffered weight specs (same semantics).
        out = build(single_buffer_weights=False)(x2, w_ih, w_hh, b, w_fc, b_fc)
    return out[:, :O]  # (1, O)


def pmf_reference(x, params):
    """Pure-JAX reference of the same forward pass (for correctness check)."""
    H = params["w_hh_t"].shape[0]
    b = (params["b_ih"] + params["b_hh"])[None, :]
    h = jnp.zeros((1, H), jnp.float32)
    c = jnp.zeros((1, H), jnp.float32)

    def step(carry, xt):
        h, c = carry
        gates = xt[None, :] @ params["w_ih_t"] + h @ params["w_hh_t"] + b
        i = jax.nn.sigmoid(gates[:, 0:H])
        f = jax.nn.sigmoid(gates[:, H:2 * H])
        g = jnp.tanh(gates[:, 2 * H:3 * H])
        o = jax.nn.sigmoid(gates[:, 3 * H:4 * H])
        c = f * c + i * g
        h = o * jnp.tanh(c)
        return (h, c), None

    (h, c), _ = lax.scan(step, (h, c), x[0])
    return h @ params["w_fc_t"] + params["b_fc"][None, :]


def init_params(key, hidden_size, output_size):
    """Deterministic init mirroring PyTorch default U(-1/sqrt(H), 1/sqrt(H))."""
    k = 1.0 / jnp.sqrt(jnp.float32(hidden_size))
    keys = jax.random.split(key, 6)
    u = lambda kk, shape: jax.random.uniform(kk, shape, jnp.float32, -k, k)
    return {
        "w_ih_t": u(keys[0], (INPUT_SIZE, 4 * hidden_size)),
        "w_hh_t": u(keys[1], (hidden_size, 4 * hidden_size)),
        "b_ih":   u(keys[2], (4 * hidden_size,)),
        "b_hh":   u(keys[3], (4 * hidden_size,)),
        "w_fc_t": u(keys[4], (hidden_size, output_size)),
        "b_fc":   u(keys[5], (output_size,)),
    }


if __name__ == "__main__":
    hidden_size = 32
    output_size = 4
    seq_len = 8

    key = jax.random.PRNGKey(0)
    pkey, xkey = jax.random.split(key)
    params = init_params(pkey, hidden_size, output_size)
    x = jax.random.normal(xkey, (1, seq_len, INPUT_SIZE), jnp.float32)

    out = pmf_forward(x, params)
    out = jax.block_until_ready(out)

    ref = pmf_reference(x, params)
    assert out.shape == (1, output_size)
    assert jnp.allclose(out, ref, atol=1e-3, rtol=1e-3), (out, ref)

    print("KERNEL_OK")
</pallas_src>

<mosaic_0001>
module attributes {stable_mosaic.version = 11 : i64} {
  func.func @_pmf_lstm_kernel(%arg0: i32, %arg1: memref<8x1024xf32, #tpu.memory_space<vmem>>, %arg2: memref<1024x128xf32, #tpu.memory_space<vmem>>, %arg3: memref<32x128xf32, #tpu.memory_space<vmem>>, %arg4: memref<1x128xf32, #tpu.memory_space<vmem>>, %arg5: memref<32x128xf32, #tpu.memory_space<vmem>>, %arg6: memref<1x128xf32, #tpu.memory_space<vmem>>, %arg7: memref<1x128xf32, #tpu.memory_space<vmem>>, %arg8: memref<8x128xf32, #tpu.memory_space<vmem>>, %arg9: memref<1x32xf32, #tpu.memory_space<vmem>>, %arg10: memref<1x32xf32, #tpu.memory_space<vmem>>) attributes {dimension_semantics = [#tpu.dimension_semantics<arbitrary>], iteration_bounds = array<i64: 1>, scalar_prefetch = 0 : i64, scratch_operands = 3 : i64, tpu.core_type = #tpu.core_type<tc>, window_params = [{transform_indices = @transform_0, window_bounds = array<i64: 8, 1024>}, {pipeline_mode = #tpu.pipeline_mode<synchronous>, transform_indices = @transform_1, window_bounds = array<i64: 1024, 128>}, {pipeline_mode = #tpu.pipeline_mode<synchronous>, transform_indices = @transform_2, window_bounds = array<i64: 32, 128>}, {pipeline_mode = #tpu.pipeline_mode<synchronous>, transform_indices = @transform_3, window_bounds = array<i64: 1, 128>}, {pipeline_mode = #tpu.pipeline_mode<synchronous>, transform_indices = @transform_4, window_bounds = array<i64: 32, 128>}, {pipeline_mode = #tpu.pipeline_mode<synchronous>, transform_indices = @transform_5, window_bounds = array<i64: 1, 128>}, {pipeline_mode = #tpu.pipeline_mode<synchronous>, transform_indices = @transform_6, window_bounds = array<i64: 1, 128>}]} {
    %c0_i32 = arith.constant 0 : i32
    %0 = arith.cmpi eq, %arg0, %c0_i32 : i32
    %1 = arith.extui %0 : i1 to i32
    %c0_i32_0 = arith.constant 0 : i32
    %2 = arith.cmpi ne, %1, %c0_i32_0 : i32
    scf.if %2 {
      %cst_38 = arith.constant 0.000000e+00 : f32
      %163 = vector.broadcast %cst_38 : f32 to vector<1x32xf32>
      %c0_39 = arith.constant 0 : index
      %c0_40 = arith.constant 0 : index
      %164 = vector.load %arg9[%c0_39, %c0_40] : memref<1x32xf32, #tpu.memory_space<vmem>>, vector<1x32xf32>
      tpu.vector_store %arg9[%c0_39, %c0_40], %163 {strides = array<i32>} : memref<1x32xf32, #tpu.memory_space<vmem>>, vector<1x32xf32>,
      %cst_41 = arith.constant 0.000000e+00 : f32
      %165 = vector.broadcast %cst_41 : f32 to vector<1x32xf32>
      %c0_42 = arith.constant 0 : index
      %c0_43 = arith.constant 0 : index
      %166 = vector.load %arg10[%c0_42, %c0_43] : memref<1x32xf32, #tpu.memory_space<vmem>>, vector<1x32xf32>
      tpu.vector_store %arg10[%c0_42, %c0_43], %165 {strides = array<i32>} : memref<1x32xf32, #tpu.memory_space<vmem>>, vector<1x32xf32>,
    } else {
    }
    %c0 = arith.constant 0 : index
    %c0_1 = arith.constant 0 : index
    %3 = vector.load %arg1[%c0, %c0_1] : memref<8x1024xf32, #tpu.memory_space<vmem>>, vector<8x1024xf32>
    %c0_2 = arith.constant 0 : index
    %c0_3 = arith.constant 0 : index
    %4 = vector.load %arg2[%c0_2, %c0_3] : memref<1024x128xf32, #tpu.memory_space<vmem>>, vector<1024x128xf32>
    %cst = arith.constant dense<0.000000e+00> : vector<8x128xf32>
    %5 = tpu.matmul %3, %4, %cst {dimension_numbers = #tpu.dot_dimension_numbers<[1], [0], [0], [1], [0, 0, 1, 1], [], []>} : vector<8x1024xf32>, vector<1024x128xf32>, vector<8x128xf32> -> vector<8x128xf32>
    %c0_4 = arith.constant 0 : index
    %c0_5 = arith.constant 0 : index
    %6 = vector.load %arg4[%c0_4, %c0_5] : memref<1x128xf32, #tpu.memory_space<vmem>>, vector<1x128xf32>
    %7 = vector.broadcast %6 : vector<1x128xf32> to vector<8x128xf32>
    %8 = arith.addf %5, %7 : vector<8x128xf32>
    %c0_6 = arith.constant 0 : index
    %c0_7 = arith.constant 0 : index
    %9 = vector.load %arg8[%c0_6, %c0_7] : memref<8x128xf32, #tpu.memory_space<vmem>>, vector<8x128xf32>
    tpu.vector_store %arg8[%c0_6, %c0_7], %8 {strides = array<i32>} : memref<8x128xf32, #tpu.memory_space<vmem>>, vector<8x128xf32>,
    %c0_8 = arith.constant 0 : index
    %c0_9 = arith.constant 0 : index
    %10 = vector.load %arg3[%c0_8, %c0_9] : memref<32x128xf32, #tpu.memory_space<vmem>>, vector<32x128xf32>
    %c0_10 = arith.constant 0 : index
    %c0_11 = arith.constant 0 : index
    %11 = vector.load %arg9[%c0_10, %c0_11] : memref<1x32xf32, #tpu.memory_space<vmem>>, vector<1x32xf32>
    %c0_12 = arith.constant 0 : index
    %c0_13 = arith.constant 0 : index
    %12 = vector.load %arg10[%c0_12, %c0_13] : memref<1x32xf32, #tpu.memory_space<vmem>>, vector<1x32xf32>
    %c0_14 = arith.constant 0 : index
    %c0_15 = arith.constant 0 : index
    %13 = vector.load %arg8[%c0_14, %c0_15] : memref<8x128xf32, #tpu.memory_space<vmem>>, vector<8x128xf32>
    %14 = vector.extract_strided_slice %13 {offsets = [0, 0], sizes = [1, 128], strides = [1, 1]} : vector<8x128xf32> to vector<1x128xf32>
    %cst_16 = arith.constant dense<0.000000e+00> : vector<1x128xf32>
    %15 = tpu.matmul %11, %10, %cst_16 {dimension_numbers = #tpu.dot_dimension_numbers<[1], [0], [0], [1], [0, 0, 1, 1], [], []>} : vector<1x32xf32>, vector<32x128xf32>, vector<1x128xf32> -> vector<1x128xf32>
    %16 = arith.addf %14, %15 : vector<1x128xf32>
    %17 = arith.negf %16 : vector<1x128xf32>
    %18 = math.exp %17 : vector<1x128xf32>
    %cst_17 = arith.constant 1.000000e+00 : f32
    %19 = vector.broadcast %cst_17 : f32 to vector<1x128xf32>
    %20 = arith.addf %19, %18 : vector<1x128xf32>
    %21 = arith.divf %19, %20 : vector<1x128xf32>
    %22 = math.tanh %16 : vector<1x128xf32>
    %23 = vector.extract_strided_slice %21 {offsets = [0, 0], sizes = [1, 32], strides = [1, 1]} : vector<1x128xf32> to vector<1x32xf32>
    %24 = vector.extract_strided_slice %21 {offsets = [0, 32], sizes = [1, 32], strides = [1, 1]} : vector<1x128xf32> to vector<1x32xf32>
    %25 = vector.extract_strided_slice %21 {offsets = [0, 96], sizes = [1, 32], strides = [1, 1]} : vector<1x128xf32> to vector<1x32xf32>
    %26 = vector.extract_strided_slice %22 {offsets = [0, 64], sizes = [1, 32], strides = [1, 1]} : vector<1x128xf32> to vector<1x32xf32>
    %27 = arith.mulf %24, %12 : vector<1x32xf32>
    %28 = arith.mulf %23, %26 : vector<1x32xf32>
    %29 = arith.addf %27, %28 : vector<1x32xf32>
    %30 = math.tanh %29 : vector<1x32xf32>
    %31 = arith.mulf %25, %30 : vector<1x32xf32>
    %32 = vector.extract_strided_slice %13 {offsets = [1, 0], sizes = [1, 128], strides = [1, 1]} : vector<8x128xf32> to vector<1x128xf32>
    %cst_18 = arith.constant dense<0.000000e+00> : vector<1x128xf32>
    %33 = tpu.matmul %31, %10, %cst_18 {dimension_numbers = #tpu.dot_dimension_numbers<[1], [0], [0], [1], [0, 0, 1, 1], [], []>} : vector<1x32xf32>, vector<32x128xf32>, vector<1x128xf32> -> vector<1x128xf32>
    %34 = arith.addf %32, %33 : vector<1x128xf32>
    %35 = arith.negf %34 : vector<1x128xf32>
    %36 = math.exp %35 : vector<1x128xf32>
    %cst_19 = arith.constant 1.000000e+00 : f32
    %37 = vector.broadcast %cst_19 : f32 to vector<1x128xf32>
    %38 = arith.addf %37, %36 : vector<1x128xf32>
    %39 = arith.divf %37, %38 : vector<1x128xf32>
    %40 = math.tanh %34 : vector<1x128xf32>
    %41 = vector.extract_strided_slice %39 {offsets = [0, 0], sizes = [1, 32], strides = [1, 1]} : vector<1x128xf32> to vector<1x32xf32>
    %42 = vector.extract_strided_slice %39 {offsets = [0, 32], sizes = [1, 32], strides = [1, 1]} : vector<1x128xf32> to vector<1x32xf32>
    %43 = vector.extract_strided_slice %39 {offsets = [0, 96], sizes = [1, 32], strides = [1, 1]} : vector<1x128xf32> to vector<1x32xf32>
    %44 = vector.extract_strided_slice %40 {offsets = [0, 64], sizes = [1, 32], strides = [1, 1]} : vector<1x128xf32> to vector<1x32xf32>
    %45 = arith.mulf %42, %29 : vector<1x32xf32>
    %46 = arith.mulf %41, %44 : vector<1x32xf32>
    %47 = arith.addf %45, %46 : vector<1x32xf32>
    %48 = math.tanh %47 : vector<1x32xf32>
    %49 = arith.mulf %43, %48 : vector<1x32xf32>
    %50 = vector.extract_strided_slice %13 {offsets = [2, 0], sizes = [1, 128], strides = [1, 1]} : vector<8x128xf32> to vector<1x128xf32>
    %cst_20 = arith.constant dense<0.000000e+00> : vector<1x128xf32>
    %51 = tpu.matmul %49, %10, %cst_20 {dimension_numbers = #tpu.dot_dimension_numbers<[1], [0], [0], [1], [0, 0, 1, 1], [], []>} : vector<1x32xf32>, vector<32x128xf32>, vector<1x128xf32> -> vector<1x128xf32>
    %52 = arith.addf %50, %51 : vector<1x128xf32>
    %53 = arith.negf %52 : vector<1x128xf32>
    %54 = math.exp %53 : vector<1x128xf32>
    %cst_21 = arith.constant 1.000000e+00 : f32
    %55 = vector.broadcast %cst_21 : f32 to vector<1x128xf32>
    %56 = arith.addf %55, %54 : vector<1x128xf32>
    %57 = arith.divf %55, %56 : vector<1x128xf32>
    %58 = math.tanh %52 : vector<1x128xf32>
    %59 = vector.extract_strided_slice %57 {offsets = [0, 0], sizes = [1, 32], strides = [1, 1]} : vector<1x128xf32> to vector<1x32xf32>
    %60 = vector.extract_strided_slice %57 {offsets = [0, 32], sizes = [1, 32], strides = [1, 1]} : vector<1x128xf32> to vector<1x32xf32>
    %61 = vector.extract_strided_slice %57 {offsets = [0, 96], sizes = [1, 32], strides = [1, 1]} : vector<1x128xf32> to vector<1x32xf32>
    %62 = vector.extract_strided_slice %58 {offsets = [0, 64], sizes = [1, 32], strides = [1, 1]} : vector<1x128xf32> to vector<1x32xf32>
    %63 = arith.mulf %60, %47 : vector<1x32xf32>
    %64 = arith.mulf %59, %62 : vector<1x32xf32>
    %65 = arith.addf %63, %64 : vector<1x32xf32>
    %66 = math.tanh %65 : vector<1x32xf32>
    %67 = arith.mulf %61, %66 : vector<1x32xf32>
    %68 = vector.extract_strided_slice %13 {offsets = [3, 0], sizes = [1, 128], strides = [1, 1]} : vector<8x128xf32> to vector<1x128xf32>
    %cst_22 = arith.constant dense<0.000000e+00> : vector<1x128xf32>
    %69 = tpu.matmul %67, %10, %cst_22 {dimension_numbers = #tpu.dot_dimension_numbers<[1], [0], [0], [1], [0, 0, 1, 1], [], []>} : vector<1x32xf32>, vector<32x128xf32>, vector<1x128xf32> -> vector<1x128xf32>
    %70 = arith.addf %68, %69 : vector<1x128xf32>
    %71 = arith.negf %70 : vector<1x128xf32>
    %72 = math.exp %71 : vector<1x128xf32>
    %cst_23 = arith.constant 1.000000e+00 : f32
    %73 = vector.broadcast %cst_23 : f32 to vector<1x128xf32>
    %74 = arith.addf %73, %72 : vector<1x128xf32>
    %75 = arith.divf %73, %74 : vector<1x128xf32>
    %76 = math.tanh %70 : vector<1x128xf32>
    %77 = vector.extract_strided_slice %75 {offsets = [0, 0], sizes = [1, 32], strides = [1, 1]} : vector<1x128xf32> to vector<1x32xf32>
    %78 = vector.extract_strided_slice %75 {offsets = [0, 32], sizes = [1, 32], strides = [1, 1]} : vector<1x128xf32> to vector<1x32xf32>
    %79 = vector.extract_strided_slice %75 {offsets = [0, 96], sizes = [1, 32], strides = [1, 1]} : vector<1x128xf32> to vector<1x32xf32>
    %80 = vector.extract_strided_slice %76 {offsets = [0, 64], sizes = [1, 32], strides = [1, 1]} : vector<1x128xf32> to vector<1x32xf32>
    %81 = arith.mulf %78, %65 : vector<1x32xf32>
    %82 = arith.mulf %77, %80 : vector<1x32xf32>
    %83 = arith.addf %81, %82 : vector<1x32xf32>
    %84 = math.tanh %83 : vector<1x32xf32>
    %85 = arith.mulf %79, %84 : vector<1x32xf32>
    %86 = vector.extract_strided_slice %13 {offsets = [4, 0], sizes = [1, 128], strides = [1, 1]} : vector<8x128xf32> to vector<1x128xf32>
    %cst_24 = arith.constant dense<0.000000e+00> : vector<1x128xf32>
    %87 = tpu.matmul %85, %10, %cst_24 {dimension_numbers = #tpu.dot_dimension_numbers<[1], [0], [0], [1], [0, 0, 1, 1], [], []>} : vector<1x32xf32>, vector<32x128xf32>, vector<1x128xf32> -> vector<1x128xf32>
    %88 = arith.addf %86, %87 : vector<1x128xf32>
    %89 = arith.negf %88 : vector<1x128xf32>
    %90 = math.exp %89 : vector<1x128xf32>
    %cst_25 = arith.constant 1.000000e+00 : f32
    %91 = vector.broadcast %cst_25 : f32 to vector<1x128xf32>
    %92 = arith.addf %91, %90 : vector<1x128xf32>
    %93 = arith.divf %91, %92 : vector<1x128xf32>
    %94 = math.tanh %88 : vector<1x128xf32>
    %95 = vector.extract_strided_slice %93 {offsets = [0, 0], sizes = [1, 32], strides = [1, 1]} : vector<1x128xf32> to vector<1x32xf32>
    %96 = vector.extract_strided_slice %93 {offsets = [0, 32], sizes = [1, 32], strides = [1, 1]} : vector<1x128xf32> to vector<1x32xf32>
    %97 = vector.extract_strided_slice %93 {offsets = [0, 96], sizes = [1, 32], strides = [1, 1]} : vector<1x128xf32> to vector<1x32xf32>
    %98 = vector.extract_strided_slice %94 {offsets = [0, 64], sizes = [1, 32], strides = [1, 1]} : vector<1x128xf32> to vector<1x32xf32>
    %99 = arith.mulf %96, %83 : vector<1x32xf32>
    %100 = arith.mulf %95, %98 : vector<1x32xf32>
    %101 = arith.addf %99, %100 : vector<1x32xf32>
    %102 = math.tanh %101 : vector<1x32xf32>
    %103 = arith.mulf %97, %102 : vector<1x32xf32>
    %104 = vector.extract_strided_slice %13 {offsets = [5, 0], sizes = [1, 128], strides = [1, 1]} : vector<8x128xf32> to vector<1x128xf32>
    %cst_26 = arith.constant dense<0.000000e+00> : vector<1x128xf32>
    %105 = tpu.matmul %103, %10, %cst_26 {dimension_numbers = #tpu.dot_dimension_numbers<[1], [0], [0], [1], [0, 0, 1, 1], [], []>} : vector<1x32xf32>, vector<32x128xf32>, vector<1x128xf32> -> vector<1x128xf32>
    %106 = arith.addf %104, %105 : vector<1x128xf32>
    %107 = arith.negf %106 : vector<1x128xf32>
    %108 = math.exp %107 : vector<1x128xf32>
    %cst_27 = arith.constant 1.000000e+00 : f32
    %109 = vector.broadcast %cst_27 : f32 to vector<1x128xf32>
    %110 = arith.addf %109, %108 : vector<1x128xf32>
    %111 = arith.divf %109, %110 : vector<1x128xf32>
    %112 = math.tanh %106 : vector<1x128xf32>
    %113 = vector.extract_strided_slice %111 {offsets = [0, 0], sizes = [1, 32], strides = [1, 1]} : vector<1x128xf32> to vector<1x32xf32>
    %114 = vector.extract_strided_slice %111 {offsets = [0, 32], sizes = [1, 32], strides = [1, 1]} : vector<1x128xf32> to vector<1x32xf32>
    %115 = vector.extract_strided_slice %111 {offsets = [0, 96], sizes = [1, 32], strides = [1, 1]} : vector<1x128xf32> to vector<1x32xf32>
    %116 = vector.extract_strided_slice %112 {offsets = [0, 64], sizes = [1, 32], strides = [1, 1]} : vector<1x128xf32> to vector<1x32xf32>
    %117 = arith.mulf %114, %101 : vector<1x32xf32>
    %118 = arith.mulf %113, %116 : vector<1x32xf32>
    %119 = arith.addf %117, %118 : vector<1x32xf32>
    %120 = math.tanh %119 : vector<1x32xf32>
    %121 = arith.mulf %115, %120 : vector<1x32xf32>
    %122 = vector.extract_strided_slice %13 {offsets = [6, 0], sizes = [1, 128], strides = [1, 1]} : vector<8x128xf32> to vector<1x128xf32>
    %cst_28 = arith.constant dense<0.000000e+00> : vector<1x128xf32>
    %123 = tpu.matmul %121, %10, %cst_28 {dimension_numbers = #tpu.dot_dimension_numbers<[1], [0], [0], [1], [0, 0, 1, 1], [], []>} : vector<1x32xf32>, vector<32x128xf32>, vector<1x128xf32> -> vector<1x128xf32>
    %124 = arith.addf %122, %123 : vector<1x128xf32>
    %125 = arith.negf %124 : vector<1x128xf32>
    %126 = math.exp %125 : vector<1x128xf32>
    %cst_29 = arith.constant 1.000000e+00 : f32
    %127 = vector.broadcast %cst_29 : f32 to vector<1x128xf32>
    %128 = arith.addf %127, %126 : vector<1x128xf32>
    %129 = arith.divf %127, %128 : vector<1x128xf32>
    %130 = math.tanh %124 : vector<1x128xf32>
    %131 = vector.extract_strided_slice %129 {offsets = [0, 0], sizes = [1, 32], strides = [1, 1]} : vector<1x128xf32> to vector<1x32xf32>
    %132 = vector.extract_strided_slice %129 {offsets = [0, 32], sizes = [1, 32], strides = [1, 1]} : vector<1x128xf32> to vector<1x32xf32>
    %133 = vector.extract_strided_slice %129 {offsets = [0, 96], sizes = [1, 32], strides = [1, 1]} : vector<1x128xf32> to vector<1x32xf32>
    %134 = vector.extract_strided_slice %130 {offsets = [0, 64], sizes = [1, 32], strides = [1, 1]} : vector<1x128xf32> to vector<1x32xf32>
    %135 = arith.mulf %132, %119 : vector<1x32xf32>
    %136 = arith.mulf %131, %134 : vector<1x32xf32>
    %137 = arith.addf %135, %136 : vector<1x32xf32>
    %138 = math.tanh %137 : vector<1x32xf32>
    %139 = arith.mulf %133, %138 : vector<1x32xf32>
    %140 = vector.extract_strided_slice %13 {offsets = [7, 0], sizes = [1, 128], strides = [1, 1]} : vector<8x128xf32> to vector<1x128xf32>
    %cst_30 = arith.constant dense<0.000000e+00> : vector<1x128xf32>
    %141 = tpu.matmul %139, %10, %cst_30 {dimension_numbers = #tpu.dot_dimension_numbers<[1], [0], [0], [1], [0, 0, 1, 1], [], []>} : vector<1x32xf32>, vector<32x128xf32>, vector<1x128xf32> -> vector<1x128xf32>
    %142 = arith.addf %140, %141 : vector<1x128xf32>
    %143 = arith.negf %142 : vector<1x128xf32>
    %144 = math.exp %143 : vector<1x128xf32>
    %cst_31 = arith.constant 1.000000e+00 : f32
    %145 = vector.broadcast %cst_31 : f32 to vector<1x128xf32>
    %146 = arith.addf %145, %144 : vector<1x128xf32>
    %147 = arith.divf %145, %146 : vector<1x128xf32>
    %148 = math.tanh %142 : vector<1x128xf32>
    %149 = vector.extract_strided_slice %147 {offsets = [0, 0], sizes = [1, 32], strides = [1, 1]} : vector<1x128xf32> to vector<1x32xf32>
    %150 = vector.extract_strided_slice %147 {offsets = [0, 32], sizes = [1, 32], strides = [1, 1]} : vector<1x128xf32> to vector<1x32xf32>
    %151 = vector.extract_strided_slice %147 {offsets = [0, 96], sizes = [1, 32], strides = [1, 1]} : vector<1x128xf32> to vector<1x32xf32>
    %152 = vector.extract_strided_slice %148 {offsets = [0, 64], sizes = [1, 32], strides = [1, 1]} : vector<1x128xf32> to vector<1x32xf32>
    %153 = arith.mulf %150, %137 : vector<1x32xf32>
    %154 = arith.mulf %149, %152 : vector<1x32xf32>
    %155 = arith.addf %153, %154 : vector<1x32xf32>
    %156 = math.tanh %155 : vector<1x32xf32>
    %157 = arith.mulf %151, %156 : vector<1x32xf32>
    %c0_32 = arith.constant 0 : index
    %c0_33 = arith.constant 0 : index
    %158 = vector.load %arg9[%c0_32, %c0_33] : memref<1x32xf32, #tpu.memory_space<vmem>>, vector<1x32xf32>
    tpu.vector_store %arg9[%c0_32, %c0_33], %157 {strides = array<i32>} : memref<1x32xf32, #tpu.memory_space<vmem>>, vector<1x32xf32>,
    %c0_34 = arith.constant 0 : index
    %c0_35 = arith.constant 0 : index
    %159 = vector.load %arg10[%c0_34, %c0_35] : memref<1x32xf32, #tpu.memory_space<vmem>>, vector<1x32xf32>
    tpu.vector_store %arg10[%c0_34, %c0_35], %155 {strides = array<i32>} : memref<1x32xf32, #tpu.memory_space<vmem>>, vector<1x32xf32>,
    %c0_i32_36 = arith.constant 0 : i32
    %160 = arith.cmpi eq, %arg0, %c0_i32_36 : i32
    %161 = arith.extui %160 : i1 to i32
    %c0_i32_37 = arith.constant 0 : i32
    %162 = arith.cmpi ne, %161, %c0_i32_37 : i32
    scf.if %162 {
      %c0_38 = arith.constant 0 : index
      %c0_39 = arith.constant 0 : index
      %163 = vector.load %arg5[%c0_38, %c0_39] : memref<32x128xf32, #tpu.memory_space<vmem>>, vector<32x128xf32>
      %cst_40 = arith.constant dense<0.000000e+00> : vector<1x128xf32>
      %164 = tpu.matmul %157, %163, %cst_40 {dimension_numbers = #tpu.dot_dimension_numbers<[1], [0], [0], [1], [0, 0, 1, 1], [], []>} : vector<1x32xf32>, vector<32x128xf32>, vector<1x128xf32> -> vector<1x128xf32>
      %c0_41 = arith.constant 0 : index
      %c0_42 = arith.constant 0 : index
      %165 = vector.load %arg6[%c0_41, %c0_42] : memref<1x128xf32, #tpu.memory_space<vmem>>, vector<1x128xf32>
      %166 = arith.addf %164, %165 : vector<1x128xf32>
      %c0_43 = arith.constant 0 : index
      %c0_44 = arith.constant 0 : index
      %167 = vector.load %arg7[%c0_43, %c0_44] : memref<1x128xf32, #tpu.memory_space<vmem>>, vector<1x128xf32>
      tpu.vector_store %arg7[%c0_43, %c0_44], %166 {strides = array<i32>} : memref<1x128xf32, #tpu.memory_space<vmem>>, vector<1x128xf32>,
    } else {
    }
    return
  }
  func.func @transform_0(%arg0: i32) -> (i32, i32) {
    %c0_i32 = arith.constant 0 : i32
    %c0_i32_0 = arith.constant 0 : i32
    return %arg0, %c0_i32 : i32, i32
  }
  func.func @transform_1(%arg0: i32) -> (i32, i32) {
    %c0_i32 = arith.constant 0 : i32
    %c0_i32_0 = arith.constant 0 : i32
    %c0_i32_1 = arith.constant 0 : i32
    return %c0_i32, %c0_i32_0 : i32, i32
  }
  func.func @transform_2(%arg0: i32) -> (i32, i32) {
    %c0_i32 = arith.constant 0 : i32
    %c0_i32_0 = arith.constant 0 : i32
    %c0_i32_1 = arith.constant 0 : i32
    return %c0_i32, %c0_i32_0 : i32, i32
  }
  func.func @transform_3(%arg0: i32) -> (i32, i32) {
    %c0_i32 = arith.constant 0 : i32
    %c0_i32_0 = arith.constant 0 : i32
    %c0_i32_1 = arith.constant 0 : i32
    return %c0_i32, %c0_i32_0 : i32, i32
  }
  func.func @transform_4(%arg0: i32) -> (i32, i32) {
    %c0_i32 = arith.constant 0 : i32
    %c0_i32_0 = arith.constant 0 : i32
    %c0_i32_1 = arith.constant 0 : i32
    return %c0_i32, %c0_i32_0 : i32, i32
  }
  func.func @transform_5(%arg0: i32) -> (i32, i32) {
    %c0_i32 = arith.constant 0 : i32
    %c0_i32_0 = arith.constant 0 : i32
    %c0_i32_1 = arith.constant 0 : i32
    return %c0_i32, %c0_i32_0 : i32, i32
  }
  func.func @transform_6(%arg0: i32) -> (i32, i32) {
    %c0_i32 = arith.constant 0 : i32
    %c0_i32_0 = arith.constant 0 : i32
    %c0_i32_1 = arith.constant 0 : i32
    return %c0_i32, %c0_i32_0 : i32, i32
  }
}

module attributes {stable_mosaic.version = 11 : i64} {
  func.func @_pmf_lstm_kernel(%arg0: i32, %arg1: memref<8x1024xf32, #tpu.memory_space<vmem>>, %arg2: memref<1024x128xf32, #tpu.memory_space<vmem>>, %arg3: memref<32x128xf32, #tpu.memory_space<vmem>>, %arg4: memref<1x128xf32, #tpu.memory_space<vmem>>, %arg5: memref<32x128xf32, #tpu.memory_space<vmem>>, %arg6: memref<1x128xf32, #tpu.memory_space<vmem>>, %arg7: memref<1x128xf32, #tpu.memory_space<vmem>>, %arg8: memref<8x128xf32, #tpu.memory_space<vmem>>, %arg9: memref<1x32xf32, #tpu.memory_space<vmem>>, %arg10: memref<1x32xf32, #tpu.memory_space<vmem>>) attributes {dimension_semantics = [#tpu.dimension_semantics<arbitrary>], iteration_bounds = array<i64: 1>, scalar_prefetch = 0 : i64, scratch_operands = 3 : i64, tpu.core_type = #tpu.core_type<tc>, window_params = [{transform_indices = @transform_0, window_bounds = array<i64: 8, 1024>}, {pipeline_mode = #tpu.pipeline_mode<synchronous>, transform_indices = @transform_1, window_bounds = array<i64: 1024, 128>}, {pipeline_mode = #tpu.pipeline_mode<synchronous>, transform_indices = @transform_2, window_bounds = array<i64: 32, 128>}, {pipeline_mode = #tpu.pipeline_mode<synchronous>, transform_indices = @transform_3, window_bounds = array<i64: 1, 128>}, {pipeline_mode = #tpu.pipeline_mode<synchronous>, transform_indices = @transform_4, window_bounds = array<i64: 32, 128>}, {pipeline_mode = #tpu.pipeline_mode<synchronous>, transform_indices = @transform_5, window_bounds = array<i64: 1, 128>}, {pipeline_mode = #tpu.pipeline_mode<synchronous>, transform_indices = @transform_6, window_bounds = array<i64: 1, 128>}]} {
    %c0_i32 = arith.constant 0 : i32
    %0 = arith.cmpi eq, %arg0, %c0_i32 : i32
    %1 = arith.extui %0 : i1 to i32
    %c0_i32_0 = arith.constant 0 : i32
    %2 = arith.cmpi ne, %1, %c0_i32_0 : i32
    scf.if %2 {
      %cst_38 = arith.constant 0.000000e+00 : f32
      %163 = vector.broadcast %cst_38 : f32 to vector<1x32xf32>
      %c0_39 = arith.constant 0 : index
      %c0_40 = arith.constant 0 : index
      %164 = vector.load %arg9[%c0_39, %c0_40] : memref<1x32xf32, #tpu.memory_space<vmem>>, vector<1x32xf32>
      tpu.vector_store %arg9[%c0_39, %c0_40], %163 {strides = array<i32>} : memref<1x32xf32, #tpu.memory_space<vmem>>, vector<1x32xf32>,
      %cst_41 = arith.constant 0.000000e+00 : f32
      %165 = vector.broadcast %cst_41 : f32 to vector<1x32xf32>
      %c0_42 = arith.constant 0 : index
      %c0_43 = arith.constant 0 : index
      %166 = vector.load %arg10[%c0_42, %c0_43] : memref<1x32xf32, #tpu.memory_space<vmem>>, vector<1x32xf32>
      tpu.vector_store %arg10[%c0_42, %c0_43], %165 {strides = array<i32>} : memref<1x32xf32, #tpu.memory_space<vmem>>, vector<1x32xf32>,
    } else {
    }
    %c0 = arith.constant 0 : index
    %c0_1 = arith.constant 0 : index
    %3 = vector.load %arg1[%c0, %c0_1] : memref<8x1024xf32, #tpu.memory_space<vmem>>, vector<8x1024xf32>
    %c0_2 = arith.constant 0 : index
    %c0_3 = arith.constant 0 : index
    %4 = vector.load %arg2[%c0_2, %c0_3] : memref<1024x128xf32, #tpu.memory_space<vmem>>, vector<1024x128xf32>
    %cst = arith.constant dense<0.000000e+00> : vector<8x128xf32>
    %5 = tpu.matmul %3, %4, %cst {dimension_numbers = #tpu.dot_dimension_numbers<[1], [0], [0], [1], [0, 0, 1, 1], [], []>} : vector<8x1024xf32>, vector<1024x128xf32>, vector<8x128xf32> -> vector<8x128xf32>
    %c0_4 = arith.constant 0 : index
    %c0_5 = arith.constant 0 : index
    %6 = vector.load %arg4[%c0_4, %c0_5] : memref<1x128xf32, #tpu.memory_space<vmem>>, vector<1x128xf32>
    %7 = vector.broadcast %6 : vector<1x128xf32> to vector<8x128xf32>
    %8 = arith.addf %5, %7 : vector<8x128xf32>
    %c0_6 = arith.constant 0 : index
    %c0_7 = arith.constant 0 : index
    %9 = vector.load %arg8[%c0_6, %c0_7] : memref<8x128xf32, #tpu.memory_space<vmem>>, vector<8x128xf32>
    tpu.vector_store %arg8[%c0_6, %c0_7], %8 {strides = array<i32>} : memref<8x128xf32, #tpu.memory_space<vmem>>, vector<8x128xf32>,
    %c0_8 = arith.constant 0 : index
    %c0_9 = arith.constant 0 : index
    %10 = vector.load %arg3[%c0_8, %c0_9] : memref<32x128xf32, #tpu.memory_space<vmem>>, vector<32x128xf32>
    %c0_10 = arith.constant 0 : index
    %c0_11 = arith.constant 0 : index
    %11 = vector.load %arg9[%c0_10, %c0_11] : memref<1x32xf32, #tpu.memory_space<vmem>>, vector<1x32xf32>
    %c0_12 = arith.constant 0 : index
    %c0_13 = arith.constant 0 : index
    %12 = vector.load %arg10[%c0_12, %c0_13] : memref<1x32xf32, #tpu.memory_space<vmem>>, vector<1x32xf32>
    %c0_14 = arith.constant 0 : index
    %c0_15 = arith.constant 0 : index
    %13 = vector.load %arg8[%c0_14, %c0_15] : memref<8x128xf32, #tpu.memory_space<vmem>>, vector<8x128xf32>
    %14 = vector.extract_strided_slice %13 {offsets = [0, 0], sizes = [1, 128], strides = [1, 1]} : vector<8x128xf32> to vector<1x128xf32>
    %cst_16 = arith.constant dense<0.000000e+00> : vector<1x128xf32>
    %15 = tpu.matmul %11, %10, %cst_16 {dimension_numbers = #tpu.dot_dimension_numbers<[1], [0], [0], [1], [0, 0, 1, 1], [], []>} : vector<1x32xf32>, vector<32x128xf32>, vector<1x128xf32> -> vector<1x128xf32>
    %16 = arith.addf %14, %15 : vector<1x128xf32>
    %17 = arith.negf %16 : vector<1x128xf32>
    %18 = math.exp %17 : vector<1x128xf32>
    %cst_17 = arith.constant 1.000000e+00 : f32
    %19 = vector.broadcast %cst_17 : f32 to vector<1x128xf32>
    %20 = arith.addf %19, %18 : vector<1x128xf32>
    %21 = arith.divf %19, %20 : vector<1x128xf32>
    %22 = math.tanh %16 : vector<1x128xf32>
    %23 = vector.extract_strided_slice %21 {offsets = [0, 0], sizes = [1, 32], strides = [1, 1]} : vector<1x128xf32> to vector<1x32xf32>
    %24 = vector.extract_strided_slice %21 {offsets = [0, 32], sizes = [1, 32], strides = [1, 1]} : vector<1x128xf32> to vector<1x32xf32>
    %25 = vector.extract_strided_slice %21 {offsets = [0, 96], sizes = [1, 32], strides = [1, 1]} : vector<1x128xf32> to vector<1x32xf32>
    %26 = vector.extract_strided_slice %22 {offsets = [0, 64], sizes = [1, 32], strides = [1, 1]} : vector<1x128xf32> to vector<1x32xf32>
    %27 = arith.mulf %24, %12 : vector<1x32xf32>
    %28 = arith.mulf %23, %26 : vector<1x32xf32>
    %29 = arith.addf %27, %28 : vector<1x32xf32>
    %30 = math.tanh %29 : vector<1x32xf32>
    %31 = arith.mulf %25, %30 : vector<1x32xf32>
    %32 = vector.extract_strided_slice %13 {offsets = [1, 0], sizes = [1, 128], strides = [1, 1]} : vector<8x128xf32> to vector<1x128xf32>
    %cst_18 = arith.constant dense<0.000000e+00> : vector<1x128xf32>
    %33 = tpu.matmul %31, %10, %cst_18 {dimension_numbers = #tpu.dot_dimension_numbers<[1], [0], [0], [1], [0, 0, 1, 1], [], []>} : vector<1x32xf32>, vector<32x128xf32>, vector<1x128xf32> -> vector<1x128xf32>
    %34 = arith.addf %32, %33 : vector<1x128xf32>
    %35 = arith.negf %34 : vector<1x128xf32>
    %36 = math.exp %35 : vector<1x128xf32>
    %cst_19 = arith.constant 1.000000e+00 : f32
    %37 = vector.broadcast %cst_19 : f32 to vector<1x128xf32>
    %38 = arith.addf %37, %36 : vector<1x128xf32>
    %39 = arith.divf %37, %38 : vector<1x128xf32>
    %40 = math.tanh %34 : vector<1x128xf32>
    %41 = vector.extract_strided_slice %39 {offsets = [0, 0], sizes = [1, 32], strides = [1, 1]} : vector<1x128xf32> to vector<1x32xf32>
    %42 = vector.extract_strided_slice %39 {offsets = [0, 32], sizes = [1, 32], strides = [1, 1]} : vector<1x128xf32> to vector<1x32xf32>
    %43 = vector.extract_strided_slice %39 {offsets = [0, 96], sizes = [1, 32], strides = [1, 1]} : vector<1x128xf32> to vector<1x32xf32>
    %44 = vector.extract_strided_slice %40 {offsets = [0, 64], sizes = [1, 32], strides = [1, 1]} : vector<1x128xf32> to vector<1x32xf32>
    %45 = arith.mulf %42, %29 : vector<1x32xf32>
    %46 = arith.mulf %41, %44 : vector<1x32xf32>
    %47 = arith.addf %45, %46 : vector<1x32xf32>
    %48 = math.tanh %47 : vector<1x32xf32>
    %49 = arith.mulf %43, %48 : vector<1x32xf32>
    %50 = vector.extract_strided_slice %13 {offsets = [2, 0], sizes = [1, 128], strides = [1, 1]} : vector<8x128xf32> to vector<1x128xf32>
    %cst_20 = arith.constant dense<0.000000e+00> : vector<1x128xf32>
    %51 = tpu.matmul %49, %10, %cst_20 {dimension_numbers = #tpu.dot_dimension_numbers<[1], [0], [0], [1], [0, 0, 1, 1], [], []>} : vector<1x32xf32>, vector<32x128xf32>, vector<1x128xf32> -> vector<1x128xf32>
    %52 = arith.addf %50, %51 : vector<1x128xf32>
    %53 = arith.negf %52 : vector<1x128xf32>
    %54 = math.exp %53 : vector<1x128xf32>
    %cst_21 = arith.constant 1.000000e+00 : f32
    %55 = vector.broadcast %cst_21 : f32 to vector<1x128xf32>
    %56 = arith.addf %55, %54 : vector<1x128xf32>
    %57 = arith.divf %55, %56 : vector<1x128xf32>
    %58 = math.tanh %52 : vector<1x128xf32>
    %59 = vector.extract_strided_slice %57 {offsets = [0, 0], sizes = [1, 32], strides = [1, 1]} : vector<1x128xf32> to vector<1x32xf32>
    %60 = vector.extract_strided_slice %57 {offsets = [0, 32], sizes = [1, 32], strides = [1, 1]} : vector<1x128xf32> to vector<1x32xf32>
    %61 = vector.extract_strided_slice %57 {offsets = [0, 96], sizes = [1, 32], strides = [1, 1]} : vector<1x128xf32> to vector<1x32xf32>
    %62 = vector.extract_strided_slice %58 {offsets = [0, 64], sizes = [1, 32], strides = [1, 1]} : vector<1x128xf32> to vector<1x32xf32>
    %63 = arith.mulf %60, %47 : vector<1x32xf32>
    %64 = arith.mulf %59, %62 : vector<1x32xf32>
    %65 = arith.addf %63, %64 : vector<1x32xf32>
    %66 = math.tanh %65 : vector<1x32xf32>
    %67 = arith.mulf %61, %66 : vector<1x32xf32>
    %68 = vector.extract_strided_slice %13 {offsets = [3, 0], sizes = [1, 128], strides = [1, 1]} : vector<8x128xf32> to vector<1x128xf32>
    %cst_22 = arith.constant dense<0.000000e+00> : vector<1x128xf32>
    %69 = tpu.matmul %67, %10, %cst_22 {dimension_numbers = #tpu.dot_dimension_numbers<[1], [0], [0], [1], [0, 0, 1, 1], [], []>} : vector<1x32xf32>, vector<32x128xf32>, vector<1x128xf32> -> vector<1x128xf32>
    %70 = arith.addf %68, %69 : vector<1x128xf32>
    %71 = arith.negf %70 : vector<1x128xf32>
    %72 = math.exp %71 : vector<1x128xf32>
    %cst_23 = arith.constant 1.000000e+00 : f32
    %73 = vector.broadcast %cst_23 : f32 to vector<1x128xf32>
    %74 = arith.addf %73, %72 : vector<1x128xf32>
    %75 = arith.divf %73, %74 : vector<1x128xf32>
    %76 = math.tanh %70 : vector<1x128xf32>
    %77 = vector.extract_strided_slice %75 {offsets = [0, 0], sizes = [1, 32], strides = [1, 1]} : vector<1x128xf32> to vector<1x32xf32>
    %78 = vector.extract_strided_slice %75 {offsets = [0, 32], sizes = [1, 32], strides = [1, 1]} : vector<1x128xf32> to vector<1x32xf32>
    %79 = vector.extract_strided_slice %75 {offsets = [0, 96], sizes = [1, 32], strides = [1, 1]} : vector<1x128xf32> to vector<1x32xf32>
    %80 = vector.extract_strided_slice %76 {offsets = [0, 64], sizes = [1, 32], strides = [1, 1]} : vector<1x128xf32> to vector<1x32xf32>
    %81 = arith.mulf %78, %65 : vector<1x32xf32>
    %82 = arith.mulf %77, %80 : vector<1x32xf32>
    %83 = arith.addf %81, %82 : vector<1x32xf32>
    %84 = math.tanh %83 : vector<1x32xf32>
    %85 = arith.mulf %79, %84 : vector<1x32xf32>
    %86 = vector.extract_strided_slice %13 {offsets = [4, 0], sizes = [1, 128], strides = [1, 1]} : vector<8x128xf32> to vector<1x128xf32>
    %cst_24 = arith.constant dense<0.000000e+00> : vector<1x128xf32>
    %87 = tpu.matmul %85, %10, %cst_24 {dimension_numbers = #tpu.dot_dimension_numbers<[1], [0], [0], [1], [0, 0, 1, 1], [], []>} : vector<1x32xf32>, vector<32x128xf32>, vector<1x128xf32> -> vector<1x128xf32>
    %88 = arith.addf %86, %87 : vector<1x128xf32>
    %89 = arith.negf %88 : vector<1x128xf32>
    %90 = math.exp %89 : vector<1x128xf32>
    %cst_25 = arith.constant 1.000000e+00 : f32
    %91 = vector.broadcast %cst_25 : f32 to vector<1x128xf32>
    %92 = arith.addf %91, %90 : vector<1x128xf32>
    %93 = arith.divf %91, %92 : vector<1x128xf32>
    %94 = math.tanh %88 : vector<1x128xf32>
    %95 = vector.extract_strided_slice %93 {offsets = [0, 0], sizes = [1, 32], strides = [1, 1]} : vector<1x128xf32> to vector<1x32xf32>
    %96 = vector.extract_strided_slice %93 {offsets = [0, 32], sizes = [1, 32], strides = [1, 1]} : vector<1x128xf32> to vector<1x32xf32>
    %97 = vector.extract_strided_slice %93 {offsets = [0, 96], sizes = [1, 32], strides = [1, 1]} : vector<1x128xf32> to vector<1x32xf32>
    %98 = vector.extract_strided_slice %94 {offsets = [0, 64], sizes = [1, 32], strides = [1, 1]} : vector<1x128xf32> to vector<1x32xf32>
    %99 = arith.mulf %96, %83 : vector<1x32xf32>
    %100 = arith.mulf %95, %98 : vector<1x32xf32>
    %101 = arith.addf %99, %100 : vector<1x32xf32>
    %102 = math.tanh %101 : vector<1x32xf32>
    %103 = arith.mulf %97, %102 : vector<1x32xf32>
    %104 = vector.extract_strided_slice %13 {offsets = [5, 0], sizes = [1, 128], strides = [1, 1]} : vector<8x128xf32> to vector<1x128xf32>
    %cst_26 = arith.constant dense<0.000000e+00> : vector<1x128xf32>
    %105 = tpu.matmul %103, %10, %cst_26 {dimension_numbers = #tpu.dot_dimension_numbers<[1], [0], [0], [1], [0, 0, 1, 1], [], []>} : vector<1x32xf32>, vector<32x128xf32>, vector<1x128xf32> -> vector<1x128xf32>
    %106 = arith.addf %104, %105 : vector<1x128xf32>
    %107 = arith.negf %106 : vector<1x128xf32>
    %108 = math.exp %107 : vector<1x128xf32>
    %cst_27 = arith.constant 1.000000e+00 : f32
    %109 = vector.broadcast %cst_27 : f32 to vector<1x128xf32>
    %110 = arith.addf %109, %108 : vector<1x128xf32>
    %111 = arith.divf %109, %110 : vector<1x128xf32>
    %112 = math.tanh %106 : vector<1x128xf32>
    %113 = vector.extract_strided_slice %111 {offsets = [0, 0], sizes = [1, 32], strides = [1, 1]} : vector<1x128xf32> to vector<1x32xf32>
    %114 = vector.extract_strided_slice %111 {offsets = [0, 32], sizes = [1, 32], strides = [1, 1]} : vector<1x128xf32> to vector<1x32xf32>
    %115 = vector.extract_strided_slice %111 {offsets = [0, 96], sizes = [1, 32], strides = [1, 1]} : vector<1x128xf32> to vector<1x32xf32>
    %116 = vector.extract_strided_slice %112 {offsets = [0, 64], sizes = [1, 32], strides = [1, 1]} : vector<1x128xf32> to vector<1x32xf32>
    %117 = arith.mulf %114, %101 : vector<1x32xf32>
    %118 = arith.mulf %113, %116 : vector<1x32xf32>
    %119 = arith.addf %117, %118 : vector<1x32xf32>
    %120 = math.tanh %119 : vector<1x32xf32>
    %121 = arith.mulf %115, %120 : vector<1x32xf32>
    %122 = vector.extract_strided_slice %13 {offsets = [6, 0], sizes = [1, 128], strides = [1, 1]} : vector<8x128xf32> to vector<1x128xf32>
    %cst_28 = arith.constant dense<0.000000e+00> : vector<1x128xf32>
    %123 = tpu.matmul %121, %10, %cst_28 {dimension_numbers = #tpu.dot_dimension_numbers<[1], [0], [0], [1], [0, 0, 1, 1], [], []>} : vector<1x32xf32>, vector<32x128xf32>, vector<1x128xf32> -> vector<1x128xf32>
    %124 = arith.addf %122, %123 : vector<1x128xf32>
    %125 = arith.negf %124 : vector<1x128xf32>
    %126 = math.exp %125 : vector<1x128xf32>
    %cst_29 = arith.constant 1.000000e+00 : f32
    %127 = vector.broadcast %cst_29 : f32 to vector<1x128xf32>
    %128 = arith.addf %127, %126 : vector<1x128xf32>
    %129 = arith.divf %127, %128 : vector<1x128xf32>
    %130 = math.tanh %124 : vector<1x128xf32>
    %131 = vector.extract_strided_slice %129 {offsets = [0, 0], sizes = [1, 32], strides = [1, 1]} : vector<1x128xf32> to vector<1x32xf32>
    %132 = vector.extract_strided_slice %129 {offsets = [0, 32], sizes = [1, 32], strides = [1, 1]} : vector<1x128xf32> to vector<1x32xf32>
    %133 = vector.extract_strided_slice %129 {offsets = [0, 96], sizes = [1, 32], strides = [1, 1]} : vector<1x128xf32> to vector<1x32xf32>
    %134 = vector.extract_strided_slice %130 {offsets = [0, 64], sizes = [1, 32], strides = [1, 1]} : vector<1x128xf32> to vector<1x32xf32>
    %135 = arith.mulf %132, %119 : vector<1x32xf32>
    %136 = arith.mulf %131, %134 : vector<1x32xf32>
    %137 = arith.addf %135, %136 : vector<1x32xf32>
    %138 = math.tanh %137 : vector<1x32xf32>
    %139 = arith.mulf %133, %138 : vector<1x32xf32>
    %140 = vector.extract_strided_slice %13 {offsets = [7, 0], sizes = [1, 128], strides = [1, 1]} : vector<8x128xf32> to vector<1x128xf32>
    %cst_30 = arith.constant dense<0.000000e+00> : vector<1x128xf32>
    %141 = tpu.matmul %139, %10, %cst_30 {dimension_numbers = #tpu.dot_dimension_numbers<[1], [0], [0], [1], [0, 0, 1, 1], [], []>} : vector<1x32xf32>, vector<32x128xf32>, vector<1x128xf32> -> vector<1x128xf32>
    %142 = arith.addf %140, %141 : vector<1x128xf32>
    %143 = arith.negf %142 : vector<1x128xf32>
    %144 = math.exp %143 : vector<1x128xf32>
    %cst_31 = arith.constant 1.000000e+00 : f32
    %145 = vector.broadcast %cst_31 : f32 to vector<1x128xf32>
    %146 = arith.addf %145, %144 : vector<1x128xf32>
    %147 = arith.divf %145, %146 : vector<1x128xf32>
    %148 = math.tanh %142 : vector<1x128xf32>
    %149 = vector.extract_strided_slice %147 {offsets = [0, 0], sizes = [1, 32], strides = [1, 1]} : vector<1x128xf32> to vector<1x32xf32>
    %150 = vector.extract_strided_slice %147 {offsets = [0, 32], sizes = [1, 32], strides = [1, 1]} : vector<1x128xf32> to vector<1x32xf32>
    %151 = vector.extract_strided_slice %147 {offsets = [0, 96], sizes = [1, 32], strides = [1, 1]} : vector<1x128xf32> to vector<1x32xf32>
    %152 = vector.extract_strided_slice %148 {offsets = [0, 64], sizes = [1, 32], strides = [1, 1]} : vector<1x128xf32> to vector<1x32xf32>
    %153 = arith.mulf %150, %137 : vector<1x32xf32>
    %154 = arith.mulf %149, %152 : vector<1x32xf32>
    %155 = arith.addf %153, %154 : vector<1x32xf32>
    %156 = math.tanh %155 : vector<1x32xf32>
    %157 = arith.mulf %151, %156 : vector<1x32xf32>
    %c0_32 = arith.constant 0 : index
    %c0_33 = arith.constant 0 : index
    %158 = vector.load %arg9[%c0_32, %c0_33] : memref<1x32xf32, #tpu.memory_space<vmem>>, vector<1x32xf32>
    tpu.vector_store %arg9[%c0_32, %c0_33], %157 {strides = array<i32>} : memref<1x32xf32, #tpu.memory_space<vmem>>, vector<1x32xf32>,
    %c0_34 = arith.constant 0 : index
    %c0_35 = arith.constant 0 : index
    %159 = vector.load %arg10[%c0_34, %c0_35] : memref<1x32xf32, #tpu.memory_space<vmem>>, vector<1x32xf32>
    tpu.vector_store %arg10[%c0_34, %c0_35], %155 {strides = array<i32>} : memref<1x32xf32, #tpu.memory_space<vmem>>, vector<1x32xf32>,
    %c0_i32_36 = arith.constant 0 : i32
    %160 = arith.cmpi eq, %arg0, %c0_i32_36 : i32
    %161 = arith.extui %160 : i1 to i32
    %c0_i32_37 = arith.constant 0 : i32
    %162 = arith.cmpi ne, %161, %c0_i32_37 : i32
    scf.if %162 {
      %c0_38 = arith.constant 0 : index
      %c0_39 = arith.constant 0 : index
      %163 = vector.load %arg5[%c0_38, %c0_39] : memref<32x128xf32, #tpu.memory_space<vmem>>, vector<32x128xf32>
      %cst_40 = arith.constant dense<0.000000e+00> : vector<1x128xf32>
      %164 = tpu.matmul %157, %163, %cst_40 {dimension_numbers = #tpu.dot_dimension_numbers<[1], [0], [0], [1], [0, 0, 1, 1], [], []>} : vector<1x32xf32>, vector<32x128xf32>, vector<1x128xf32> -> vector<1x128xf32>
      %c0_41 = arith.constant 0 : index
      %c0_42 = arith.constant 0 : index
      %165 = vector.load %arg6[%c0_41, %c0_42] : memref<1x128xf32, #tpu.memory_space<vmem>>, vector<1x128xf32>
      %166 = arith.addf %164, %165 : vector<1x128xf32>
      %c0_43 = arith.constant 0 : index
      %c0_44 = arith.constant 0 : index
      %167 = vector.load %arg7[%c0_43, %c0_44] : memref<1x128xf32, #tpu.memory_space<vmem>>, vector<1x128xf32>
      tpu.vector_store %arg7[%c0_43, %c0_44], %166 {strides = array<i32>} : memref<1x128xf32, #tpu.memory_space<vmem>>, vector<1x128xf32>,
    } else {
    }
    return
  }
  func.func @transform_0(%arg0: i32) -> (i32, i32) {
    %c0_i32 = arith.constant 0 : i32
    %c0_i32_0 = arith.constant 0 : i32
    return %arg0, %c0_i32 : i32, i32
  }
  func.func @transform_1(%arg0: i32) -> (i32, i32) {
    %c0_i32 = arith.constant 0 : i32
    %c0_i32_0 = arith.constant 0 : i32
    %c0_i32_1 = arith.constant 0 : i32
    return %c0_i32, %c0_i32_0 : i32, i32
  }
  func.func @transform_2(%arg0: i32) -> (i32, i32) {
    %c0_i32 = arith.constant 0 : i32
    %c0_i32_0 = arith.constant 0 : i32
    %c0_i32_1 = arith.constant 0 : i32
    return %c0_i32, %c0_i32_0 : i32, i32
  }
  func.func @transform_3(%arg0: i32) -> (i32, i32) {
    %c0_i32 = arith.constant 0 : i32
    %c0_i32_0 = arith.constant 0 : i32
    %c0_i32_1 = arith.constant 0 : i32
    return %c0_i32, %c0_i32_0 : i32, i32
  }
  func.func @transform_4(%arg0: i32) -> (i32, i32) {
    %c0_i32 = arith.constant 0 : i32
    %c0_i32_0 = arith.constant 0 : i32
    %c0_i32_1 = arith.constant 0 : i32
    return %c0_i32, %c0_i32_0 : i32, i32
  }
  func.func @transform_5(%arg0: i32) -> (i32, i32) {
    %c0_i32 = arith.constant 0 : i32
    %c0_i32_0 = arith.constant 0 : i32
    %c0_i32_1 = arith.constant 0 : i32
    return %c0_i32, %c0_i32_0 : i32, i32
  }
  func.func @transform_6(%arg0: i32) -> (i32, i32) {
    %c0_i32 = arith.constant 0 : i32
    %c0_i32_0 = arith.constant 0 : i32
    %c0_i32_1 = arith.constant 0 : i32
    return %c0_i32, %c0_i32_0 : i32, i32
  }
}

</mosaic_0001>

<llo_original>
// kernel: tpu_custom_call.1
$region0: #{tpu_custom_call.1}
  #allocation0 [shape = 'u32[]', space=smem, size = 0x4, offset = 0x4, fixed_abs, tag = 'smem constant byte address 0x4 - core index']
  #allocation1 [shape = 'u32[144,128]{1,0:T(1,128)}', space=vmem, size = 0x12000, scoped, tag = 'internal scratch']
  #allocation2 [shape = 'f32[8,128]{1,0:T(8,128)}', space=vmem, size = 0x1000, scoped, tag = 'scratch operand']
  #allocation3 [shape = 'f32[1,32]{1,0:T(1,128)}', space=vmem, size = 0x200, scoped, tag = 'scratch operand']
  #allocation4 [shape = 'f32[1,32]{1,0:T(1,128)}', space=vmem, size = 0x200, scoped, tag = 'scratch operand']
  %s0 = inlined_call_operand.hbm [shape: f32[8,1024], index: 0, kind: input, shape index: {}]
  %s1 = inlined_call_operand.hbm [shape: f32[1024,128], index: 1, kind: input, shape index: {}]
  %s2 = inlined_call_operand.hbm [shape: f32[32,128], index: 2, kind: input, shape index: {}]
  %s3 = inlined_call_operand.vmem [shape: f32[1,128], index: 3, kind: input, shape index: {}]
  %s4 = inlined_call_operand.hbm [shape: f32[32,128], index: 4, kind: input, shape index: {}]
  %s5 = inlined_call_operand.vmem [shape: f32[1,128], index: 5, kind: input, shape index: {}]
  %s6 = inlined_call_operand.hbm [shape: f32[1,128], index: 6, kind: output, shape index: {}]
  %s7 = sld [smem:[#allocation0]]
  $region58: #{tpu_custom_call.1} parent=0
    _
  %s9 = ssub.s32 1, %s7
  %s10 = scalar_select 0, %s9, %s7
  $region1: #{tpu_custom_call.1} parent=0
    #allocation5 [shape = 'u8[32768]{0}', space=vmem, size = 0x8000, scoped, tag = 'input window, operand 0, single buffered']
    #allocation6 [shape = 's32[1]{0}', space=sflag, size = 0x4, scoped, tag = 'scoped memory for tpu_custom_call.1']
    #allocation7 [shape = 's32[1]{0}', space=sflag, size = 0x4, scoped, tag = 'scoped memory for tpu_custom_call.1']
    #allocation8 [shape = 'u8[524288]{0}', space=vmem, size = 0x80000, scoped, tag = 'input window, operand 1, single buffered']
    #allocation9 [shape = 's32[1]{0}', space=sflag, size = 0x4, scoped, tag = 'scoped memory for tpu_custom_call.1']
    #allocation10 [shape = 'u8[16384]{0}', space=vmem, size = 0x4000, scoped, tag = 'input window, operand 2, single buffered']
    #allocation11 [shape = 'u8[16384]{0}', space=vmem, size = 0x4000, scoped, tag = 'input window, operand 4, single buffered']
    #allocation12 [shape = 's32[1]{0}', space=sflag, size = 0x4, scoped, tag = 'scoped memory for tpu_custom_call.1']
    #allocation13 [shape = 'u8[512]{0}', space=vmem, size = 0x400, scoped, tag = 'output window, operand 0, single buffered']
    %11 = vsyncpa [#allocation6], 0
    %12 = vsyncpa [#allocation9], 0
    %13 = vsyncpa [#allocation12], 0
    %14 = vsyncpa [#allocation7], 0
    // Predicated region
    $region2: #{tpu_custom_call.1} parent=1 // pred_check
      _
    $region3: #{tpu_custom_call.1} parent=1 // pred_check_branch
      %16 = sbr.rel (0) target = $region5
    $region4: #{tpu_custom_call.1} parent=1 // pred_region
      %s18 = ssub.s32 1024, 1024
      %19 = vsyncadd [#allocation6], %s18
      %s21 = sshll.u32 [#allocation5], 4
      %s22 = int_to_ptr.vmem [resolvable:$true] %s21
      %24 = dma.hbm_to_vmem [thread:$0]  %s0, 1024, %s22, [#allocation6]
    $region5: #{tpu_custom_call.1} parent=1 // pred_fallthru
      _
    // Predicated region
    $region6: #{tpu_custom_call.1} parent=1 // pred_check
      _
    $region7: #{tpu_custom_call.1} parent=1 // pred_check_branch
      %26 = sbr.rel (0) target = $region9
    $region8: #{tpu_custom_call.1} parent=1 // pred_region
      %s28 = ssub.s32 16384, 16384
      %29 = vsyncadd [#allocation9], %s28
      %s30 = sshll.u32 [#allocation8], 4
      %s31 = int_to_ptr.vmem [resolvable:$true] %s30
      %36 = dma.hbm_to_vmem [thread:$0]  %s1, 16384, %s31, [#allocation9], 128, 128, 8
    $region9: #{tpu_custom_call.1} parent=1 // pred_fallthru
      _
    // Predicated region
    $region10: #{tpu_custom_call.1} parent=1 // pred_check
      _
    $region11: #{tpu_custom_call.1} parent=1 // pred_check_branch
      %38 = sbr.rel (0) target = $region13
    $region12: #{tpu_custom_call.1} parent=1 // pred_region
      %s40 = ssub.s32 512, 512
      %41 = vsyncadd [#allocation9], %s40
      %s42 = sshll.u32 [#allocation10], 4
      %s43 = int_to_ptr.vmem [resolvable:$true] %s42
      %48 = dma.hbm_to_vmem [thread:$0]  %s2, 512, %s43, [#allocation9], 128, 128, 8
    $region13: #{tpu_custom_call.1} parent=1 // pred_fallthru
      _
    // Predicated region
    $region14: #{tpu_custom_call.1} parent=1 // pred_check
      _
    $region15: #{tpu_custom_call.1} parent=1 // pred_check_branch
      %50 = sbr.rel (0) target = $region17
    $region16: #{tpu_custom_call.1} parent=1 // pred_region
      _
    $region17: #{tpu_custom_call.1} parent=1 // pred_fallthru
      _
    // Predicated region
    $region18: #{tpu_custom_call.1} parent=1 // pred_check
      _
    $region19: #{tpu_custom_call.1} parent=1 // pred_check_branch
      %52 = sbr.rel (0) target = $region21
    $region20: #{tpu_custom_call.1} parent=1 // pred_region
      %s54 = ssub.s32 512, 512
      %55 = vsyncadd [#allocation12], %s54
      %s56 = sshll.u32 [#allocation11], 4
      %s57 = int_to_ptr.vmem [resolvable:$true] %s56
      %62 = dma.hbm_to_vmem [thread:$0]  %s4, 512, %s57, [#allocation12], 128, 128, 8
    $region21: #{tpu_custom_call.1} parent=1 // pred_fallthru
      _
    // Predicated region
    $region22: #{tpu_custom_call.1} parent=1 // pred_check
      _
    $region23: #{tpu_custom_call.1} parent=1 // pred_check_branch
      %64 = sbr.rel (0) target = $region25
    $region24: #{tpu_custom_call.1} parent=1 // pred_region
      _
    $region25: #{tpu_custom_call.1} parent=1 // pred_fallthru
      _
    // Predicated region
    $region26: #{tpu_custom_call.1} parent=1 // pred_check
      _
    $region27: #{tpu_custom_call.1} parent=1 // pred_check_branch
      %66 = sbr.rel (0) target = $region29
    $region28: #{tpu_custom_call.1} parent=1 // pred_region
      %67 = dma.done [#allocation6], 1024
    $region29: #{tpu_custom_call.1} parent=1 // pred_fallthru
      _
    // Predicated region
    $region30: #{tpu_custom_call.1} parent=1 // pred_check
      _
    $region31: #{tpu_custom_call.1} parent=1 // pred_check_branch
      %69 = sbr.rel (0) target = $region33
    $region32: #{tpu_custom_call.1} parent=1 // pred_region
      %70 = dma.done [#allocation9], 16384
    $region33: #{tpu_custom_call.1} parent=1 // pred_fallthru
      _
    // Predicated region
    $region34: #{tpu_custom_call.1} parent=1 // pred_check
      _
    $region35: #{tpu_custom_call.1} parent=1 // pred_check_branch
      %72 = sbr.rel (0) target = $region37
    $region36: #{tpu_custom_call.1} parent=1 // pred_region
      %73 = dma.done [#allocation9], 512
    $region37: #{tpu_custom_call.1} parent=1 // pred_fallthru
      _
    // Predicated region
    $region38: #{tpu_custom_call.1} parent=1 // pred_check
      _
    $region39: #{tpu_custom_call.1} parent=1 // pred_check_branch
      %75 = sbr.rel (0) target = $region41
    $region40: #{tpu_custom_call.1} parent=1 // pred_region
      %76 = dma.done [#allocation12], 512
    $region41: #{tpu_custom_call.1} parent=1 // pred_fallthru
      _
    %p77 = scmp.eq.s32.totalorder 0, 0
    // Predicated region
    $region42: #{tpu_custom_call.1} parent=1 // pred_check
      %p78 = pneg %p77
    $region43: #{tpu_custom_call.1} parent=1 // pred_check_branch
      %80 = sbr.rel (%p78) target = $region45
    $region44: #{tpu_custom_call.1} parent=1 // pred_region
      %vm81 = vcmask 253952
      %82 = vst.msk [vmem:[#allocation3] sm:$0x1] %vm81, 0.0
      %83 = vst.msk [vmem:[#allocation4] sm:$0x1] %vm81, 0.0
    $region45: #{tpu_custom_call.1} parent=1 // pred_fallthru
      _
    %v84 = vld [vmem:[#allocation5] sm:$0xff]
    %v85 = vld [vmem:[#allocation5 + $0x8] sm:$0xff]
    %v86 = vld [vmem:[#allocation5 + $0x10] sm:$0xff]
    %v87 = vld [vmem:[#allocation5 + $0x18] sm:$0xff]
    %v88 = vld [vmem:[#allocation5 + $0x20] sm:$0xff]
    %v89 = vld [vmem:[#allocation5 + $0x28] sm:$0xff]
    %v90 = vld [vmem:[#allocation5 + $0x30] sm:$0xff]
    %v91 = vld [vmem:[#allocation5 + $0x38] sm:$0xff]
    %v92 = vld [vmem:[#allocation8] sm:$0xff]
    %v93 = vld [vmem:[#allocation8 + $0x8] sm:$0xff]
    %v94 = vld [vmem:[#allocation8 + $0x10] sm:$0xff]
    %v95 = vld [vmem:[#allocation8 + $0x18] sm:$0xff]
    %v96 = vld [vmem:[#allocation8 + $0x20] sm:$0xff]
    %v97 = vld [vmem:[#allocation8 + $0x28] sm:$0xff]
    %v98 = vld [vmem:[#allocation8 + $0x30] sm:$0xff]
    %v99 = vld [vmem:[#allocation8 + $0x38] sm:$0xff]
    %v100 = vld [vmem:[#allocation8 + $0x40] sm:$0xff]
    %v101 = vld [vmem:[#allocation8 + $0x48] sm:$0xff]
    %v102 = vld [vmem:[#allocation8 + $0x50] sm:$0xff]
    %v103 = vld [vmem:[#allocation8 + $0x58] sm:$0xff]
    %v104 = vld [vmem:[#allocation8 + $0x60] sm:$0xff]
    %v105 = vld [vmem:[#allocation8 + $0x68] sm:$0xff]
    %v106 = vld [vmem:[#allocation8 + $0x70] sm:$0xff]
    %v107 = vld [vmem:[#allocation8 + $0x78] sm:$0xff]
    %v108 = vld [vmem:[#allocation8 + $0x80] sm:$0xff]
    %v109 = vld [vmem:[#allocation8 + $0x88] sm:$0xff]
    %v110 = vld [vmem:[#allocation8 + $0x90] sm:$0xff]
    %v111 = vld [vmem:[#allocation8 + $0x98] sm:$0xff]
    %v112 = vld [vmem:[#allocation8 + $0xa0] sm:$0xff]
    %v113 = vld [vmem:[#allocation8 + $0xa8] sm:$0xff]
    %v114 = vld [vmem:[#allocation8 + $0xb0] sm:$0xff]
    %v115 = vld [vmem:[#allocation8 + $0xb8] sm:$0xff]
    %v116 = vld [vmem:[#allocation8 + $0xc0] sm:$0xff]
    %v117 = vld [vmem:[#allocation8 + $0xc8] sm:$0xff]
    %v118 = vld [vmem:[#allocation8 + $0xd0] sm:$0xff]
    %v119 = vld [vmem:[#allocation8 + $0xd8] sm:$0xff]
    %v120 = vld [vmem:[#allocation8 + $0xe0] sm:$0xff]
    %v121 = vld [vmem:[#allocation8 + $0xe8] sm:$0xff]
    %v122 = vld [vmem:[#allocation8 + $0xf0] sm:$0xff]
    %v123 = vld [vmem:[#allocation8 + $0xf8] sm:$0xff]
    %v124 = vld [vmem:[#allocation8 + $0x100] sm:$0xff]
    %v125 = vld [vmem:[#allocation8 + $0x108] sm:$0xff]
    %v126 = vld [vmem:[#allocation8 + $0x110] sm:$0xff]
    %v127 = vld [vmem:[#allocation8 + $0x118] sm:$0xff]
    %v128 = vld [vmem:[#allocation8 + $0x120] sm:$0xff]
    %v129 = vld [vmem:[#allocation8 + $0x128] sm:$0xff]
    %v130 = vld [vmem:[#allocation8 + $0x130] sm:$0xff]
    %v131 = vld [vmem:[#allocation8 + $0x138] sm:$0xff]
    %v132 = vld [vmem:[#allocation8 + $0x140] sm:$0xff]
    %v133 = vld [vmem:[#allocation8 + $0x148] sm:$0xff]
    %v134 = vld [vmem:[#allocation8 + $0x150] sm:$0xff]
    %v135 = vld [vmem:[#allocation8 + $0x158] sm:$0xff]
    %v136 = vld [vmem:[#allocation8 + $0x160] sm:$0xff]
    %v137 = vld [vmem:[#allocation8 + $0x168] sm:$0xff]
    %v138 = vld [vmem:[#allocation8 + $0x170] sm:$0xff]
    %v139 = vld [vmem:[#allocation8 + $0x178] sm:$0xff]
    %v140 = vld [vmem:[#allocation8 + $0x180] sm:$0xff]
    %v141 = vld [vmem:[#allocation8 + $0x188] sm:$0xff]
    %v142 = vld [vmem:[#allocation8 + $0x190] sm:$0xff]
    %v143 = vld [vmem:[#allocation8 + $0x198] sm:$0xff]
    %v144 = vld [vmem:[#allocation8 + $0x1a0] sm:$0xff]
    %v145 = vld [vmem:[#allocation8 + $0x1a8] sm:$0xff]
    %v146 = vld [vmem:[#allocation8 + $0x1b0] sm:$0xff]
    %v147 = vld [vmem:[#allocation8 + $0x1b8] sm:$0xff]
    %v148 = vld [vmem:[#allocation8 + $0x1c0] sm:$0xff]
    %v149 = vld [vmem:[#allocation8 + $0x1c8] sm:$0xff]
    %v150 = vld [vmem:[#allocation8 + $0x1d0] sm:$0xff]
    %v151 = vld [vmem:[#allocation8 + $0x1d8] sm:$0xff]
    %v152 = vld [vmem:[#allocation8 + $0x1e0] sm:$0xff]
    %v153 = vld [vmem:[#allocation8 + $0x1e8] sm:$0xff]
    %v154 = vld [vmem:[#allocation8 + $0x1f0] sm:$0xff]
    %v155 = vld [vmem:[#allocation8 + $0x1f8] sm:$0xff]
    %v156 = vld [vmem:[#allocation8 + $0x200] sm:$0xff]
    %v157 = vld [vmem:[#allocation8 + $0x208] sm:$0xff]
    %v158 = vld [vmem:[#allocation8 + $0x210] sm:$0xff]
    %v159 = vld [vmem:[#allocation8 + $0x218] sm:$0xff]
    %v160 = vld [vmem:[#allocation8 + $0x220] sm:$0xff]
    %v161 = vld [vmem:[#allocation8 + $0x228] sm:$0xff]
    %v162 = vld [vmem:[#allocation8 + $0x230] sm:$0xff]
    %v163 = vld [vmem:[#allocation8 + $0x238] sm:$0xff]
    %v164 = vld [vmem:[#allocation8 + $0x240] sm:$0xff]
    %v165 = vld [vmem:[#allocation8 + $0x248] sm:$0xff]
    %v166 = vld [vmem:[#allocation8 + $0x250] sm:$0xff]
    %v167 = vld [vmem:[#allocation8 + $0x258] sm:$0xff]
    %v168 = vld [vmem:[#allocation8 + $0x260] sm:$0xff]
    %v169 = vld [vmem:[#allocation8 + $0x268] sm:$0xff]
    %v170 = vld [vmem:[#allocation8 + $0x270] sm:$0xff]
    %v171 = vld [vmem:[#allocation8 + $0x278] sm:$0xff]
    %v172 = vld [vmem:[#allocation8 + $0x280] sm:$0xff]
    %v173 = vld [vmem:[#allocation8 + $0x288] sm:$0xff]
    %v174 = vld [vmem:[#allocation8 + $0x290] sm:$0xff]
    %v175 = vld [vmem:[#allocation8 + $0x298] sm:$0xff]
    %v176 = vld [vmem:[#allocation8 + $0x2a0] sm:$0xff]
    %v177 = vld [vmem:[#allocation8 + $0x2a8] sm:$0xff]
    %v178 = vld [vmem:[#allocation8 + $0x2b0] sm:$0xff]
    %v179 = vld [vmem:[#allocation8 + $0x2b8] sm:$0xff]
    %v180 = vld [vmem:[#allocation8 + $0x2c0] sm:$0xff]
    %v181 = vld [vmem:[#allocation8 + $0x2c8] sm:$0xff]
    %v182 = vld [vmem:[#allocation8 + $0x2d0] sm:$0xff]
    %v183 = vld [vmem:[#allocation8 + $0x2d8] sm:$0xff]
    %v184 = vld [vmem:[#allocation8 + $0x2e0] sm:$0xff]
    %v185 = vld [vmem:[#allocation8 + $0x2e8] sm:$0xff]
    %v186 = vld [vmem:[#allocation8 + $0x2f0] sm:$0xff]
    %v187 = vld [vmem:[#allocation8 + $0x2f8] sm:$0xff]
    %v188 = vld [vmem:[#allocation8 + $0x300] sm:$0xff]
    %v189 = vld [vmem:[#allocation8 + $0x308] sm:$0xff]
    %v190 = vld [vmem:[#allocation8 + $0x310] sm:$0xff]
    %v191 = vld [vmem:[#allocation8 + $0x318] sm:$0xff]
    %v192 = vld [vmem:[#allocation8 + $0x320] sm:$0xff]
    %v193 = vld [vmem:[#allocation8 + $0x328] sm:$0xff]
    %v194 = vld [vmem:[#allocation8 + $0x330] sm:$0xff]
    %v195 = vld [vmem:[#allocation8 + $0x338] sm:$0xff]
    %v196 = vld [vmem:[#allocation8 + $0x340] sm:$0xff]
    %v197 = vld [vmem:[#allocation8 + $0x348] sm:$0xff]
    %v198 = vld [vmem:[#allocation8 + $0x350] sm:$0xff]
    %v199 = vld [vmem:[#allocation8 + $0x358] sm:$0xff]
    %v200 = vld [vmem:[#allocation8 + $0x360] sm:$0xff]
    %v201 = vld [vmem:[#allocation8 + $0x368] sm:$0xff]
    %v202 = vld [vmem:[#allocation8 + $0x370] sm:$0xff]
    %v203 = vld [vmem:[#allocation8 + $0x378] sm:$0xff]
    %v204 = vld [vmem:[#allocation8 + $0x380] sm:$0xff]
    %v205 = vld [vmem:[#allocation8 + $0x388] sm:$0xff]
    %v206 = vld [vmem:[#allocation8 + $0x390] sm:$0xff]
    %v207 = vld [vmem:[#allocation8 + $0x398] sm:$0xff]
    %v208 = vld [vmem:[#allocation8 + $0x3a0] sm:$0xff]
    %v209 = vld [vmem:[#allocation8 + $0x3a8] sm:$0xff]
    %v210 = vld [vmem:[#allocation8 + $0x3b0] sm:$0xff]
    %v211 = vld [vmem:[#allocation8 + $0x3b8] sm:$0xff]
    %v212 = vld [vmem:[#allocation8 + $0x3c0] sm:$0xff]
    %v213 = vld [vmem:[#allocation8 + $0x3c8] sm:$0xff]
    %v214 = vld [vmem:[#allocation8 + $0x3d0] sm:$0xff]
    %v215 = vld [vmem:[#allocation8 + $0x3d8] sm:$0xff]
    %v216 = vld [vmem:[#allocation8 + $0x3e0] sm:$0xff]
    %v217 = vld [vmem:[#allocation8 + $0x3e8] sm:$0xff]
    %v218 = vld [vmem:[#allocation8 + $0x3f0] sm:$0xff]
    %v219 = vld [vmem:[#allocation8 + $0x3f8] sm:$0xff]
    %v220 = vld [vmem:[%s3] sm:$0x1]
    %v222 = vlaneseq
    %v223 = vshrl.u32 %v222, 7
    %v224 = vsub.s32 0, %v223
    %v225 = vrot.slane %v220, %v224
    %227 = vmatprep.subr.mxu0 0.0
    %228 = vmatpush1.msra.mxu0 %v92
    %229 = vmatprep.subr.mxu0 0.0
    %230 = vmatpush1.msra.mxu0 %v93
    %231 = vmatprep.subr.mxu0 0.0
    %232 = vmatpush1.msra.mxu0 %v94
    %233 = vmatprep.subr.mxu0 0.0
    %234 = vmatpush1.msra.mxu0 %v95
    %235 = vmatprep.subr.mxu0 0.0
    %236 = vmatpush1.msra.mxu0 %v96
    %237 = vmatprep.subr.mxu0 0.0
    %238 = vmatpush1.msra.mxu0 %v97
    %239 = vmatprep.subr.mxu0 0.0
    %240 = vmatpush1.msra.mxu0 %v98
    %241 = vmatprep.subr.mxu0 0.0
    %242 = vmatpush1.msra.mxu0 %v99
    %243 = vmatprep.subr.mxu0 0.0
    %244 = vmatpush1.msra.mxu0 %v100
    %245 = vmatprep.subr.mxu0 0.0
    %246 = vmatpush1.msra.mxu0 %v101
    %247 = vmatprep.subr.mxu0 0.0
    %248 = vmatpush1.msra.mxu0 %v102
    %249 = vmatprep.subr.mxu0 0.0
    %250 = vmatpush1.msra.mxu0 %v103
    %251 = vmatprep.subr.mxu0 0.0
    %252 = vmatpush1.msra.mxu0 %v104
    %253 = vmatprep.subr.mxu0 0.0
    %254 = vmatpush1.msra.mxu0 %v105
    %255 = vmatprep.subr.mxu0 0.0
    %256 = vmatpush1.msra.mxu0 %v106
    %257 = vmatprep.subr.mxu0 0.0
    %258 = vmatpush1.msra.mxu0 %v107
    %259 = vmatprep.subr.mxu0 0.0
    %260 = vmatpush1.msra.mxu0 %v108
    %261 = vmatprep.subr.mxu0 0.0
    %262 = vmatpush1.msra.mxu0 %v109
    %263 = vmatprep.subr.mxu0 0.0
    %264 = vmatpush1.msra.mxu0 %v110
    %265 = vmatprep.subr.mxu0 0.0
    %266 = vmatpush1.msra.mxu0 %v111
    %267 = vmatprep.subr.mxu0 0.0
    %268 = vmatpush1.msra.mxu0 %v112
    %269 = vmatprep.subr.mxu0 0.0
    %270 = vmatpush1.msra.mxu0 %v113
    %271 = vmatprep.subr.mxu0 0.0
    %272 = vmatpush1.msra.mxu0 %v114
    %273 = vmatprep.subr.mxu0 0.0
    %274 = vmatpush1.msra.mxu0 %v115
    %275 = vmatprep.subr.mxu0 0.0
    %276 = vmatpush1.msra.mxu0 %v116
    %277 = vmatprep.subr.mxu0 0.0
    %278 = vmatpush1.msra.mxu0 %v117
    %279 = vmatprep.subr.mxu0 0.0
    %280 = vmatpush1.msra.mxu0 %v118
    %281 = vmatprep.subr.mxu0 0.0
    %282 = vmatpush1.msra.mxu0 %v119
    %283 = vmatprep.subr.mxu0 0.0
    %284 = vmatpush1.msra.mxu0 %v120
    %285 = vmatprep.subr.mxu0 0.0
    %286 = vmatpush1.msra.mxu0 %v121
    %287 = vmatprep.subr.mxu0 0.0
    %288 = vmatpush1.msra.mxu0 %v122
    %289 = vmatprep.subr.mxu0 0.0
    %290 = vmatpush1.msra.mxu0 %v123
    %291 = vmatprep.mubr.f32.mxu0 %v85
    %292 = vmatmul.mubr.f32.gmra.mrb[0].mxu0 %v84
    %v293 = vpop.f32.mrb[0].mxu0
    %v294 = vadd.f32 %v225, %v293
    %v295 = vpop.f32.mrb[0].mxu0
    %296 = vdwg.mxu0
    %297 = vmatprep.subr.mxu0 0.0
    %298 = vmatpush1.msra.mxu0 %v124
    %299 = vmatprep.subr.mxu0 0.0
    %300 = vmatpush1.msra.mxu0 %v125
    %301 = vmatprep.subr.mxu0 0.0
    %302 = vmatpush1.msra.mxu0 %v126
    %303 = vmatprep.subr.mxu0 0.0
    %304 = vmatpush1.msra.mxu0 %v127
    %305 = vmatprep.subr.mxu0 0.0
    %306 = vmatpush1.msra.mxu0 %v128
    %307 = vmatprep.subr.mxu0 0.0
    %308 = vmatpush1.msra.mxu0 %v129
    %309 = vmatprep.subr.mxu0 0.0
    %310 = vmatpush1.msra.mxu0 %v130
    %311 = vmatprep.subr.mxu0 0.0
    %312 = vmatpush1.msra.mxu0 %v131
    %313 = vmatprep.subr.mxu0 0.0
    %314 = vmatpush1.msra.mxu0 %v132
    %315 = vmatprep.subr.mxu0 0.0
    %316 = vmatpush1.msra.mxu0 %v133
    %317 = vmatprep.subr.mxu0 0.0
    %318 = vmatpush1.msra.mxu0 %v134
    %319 = vmatprep.subr.mxu0 0.0
    %320 = vmatpush1.msra.mxu0 %v135
    %321 = vmatprep.subr.mxu0 0.0
    %322 = vmatpush1.msra.mxu0 %v136
    %323 = vmatprep.subr.mxu0 0.0
    %324 = vmatpush1.msra.mxu0 %v137
    %325 = vmatprep.subr.mxu0 0.0
    %326 = vmatpush1.msra.mxu0 %v138
    %327 = vmatprep.subr.mxu0 0.0
    %328 = vmatpush1.msra.mxu0 %v139
    %329 = vmatprep.subr.mxu0 0.0
    %330 = vmatpush1.msra.mxu0 %v140
    %331 = vmatprep.subr.mxu0 0.0
    %332 = vmatpush1.msra.mxu0 %v141
    %333 = vmatprep.subr.mxu0 0.0
    %334 = vmatpush1.msra.mxu0 %v142
    %335 = vmatprep.subr.mxu0 0.0
    %336 = vmatpush1.msra.mxu0 %v143
    %337 = vmatprep.subr.mxu0 0.0
    %338 = vmatpush1.msra.mxu0 %v144
    %339 = vmatprep.subr.mxu0 0.0
    %340 = vmatpush1.msra.mxu0 %v145
    %341 = vmatprep.subr.mxu0 0.0
    %342 = vmatpush1.msra.mxu0 %v146
    %343 = vmatprep.subr.mxu0 0.0
    %344 = vmatpush1.msra.mxu0 %v147
    %345 = vmatprep.subr.mxu0 0.0
    %346 = vmatpush1.msra.mxu0 %v148
    %347 = vmatprep.subr.mxu0 0.0
    %348 = vmatpush1.msra.mxu0 %v149
    %349 = vmatprep.subr.mxu0 0.0
    %350 = vmatpush1.msra.mxu0 %v150
    %351 = vmatprep.subr.mxu0 0.0
    %352 = vmatpush1.msra.mxu0 %v151
    %353 = vmatprep.subr.mxu0 0.0
    %354 = vmatpush1.msra.mxu0 %v152
    %355 = vmatprep.subr.mxu0 0.0
    %356 = vmatpush1.msra.mxu0 %v153
    %357 = vmatprep.subr.mxu0 0.0
    %358 = vmatpush1.msra.mxu0 %v154
    %359 = vmatprep.subr.mxu0 0.0
    %360 = vmatpush1.msra.mxu0 %v155
    %361 = vmatprep.mubr.f32.mxu0 %v87
    %362 = vmatmul.mubr.f32.gmra.mrb[0].mxu0 %v86
    %v363 = vpop.f32.mrb[0].mxu0
    %v364 = vadd.f32 %v294, %v363
    %v365 = vpop.f32.mrb[0].mxu0
    %366 = vdwg.mxu0
    %367 = vmatprep.subr.mxu0 0.0
    %368 = vmatpush1.msra.mxu0 %v156
    %369 = vmatprep.subr.mxu0 0.0
    %370 = vmatpush1.msra.mxu0 %v157
    %371 = vmatprep.subr.mxu0 0.0
    %372 = vmatpush1.msra.mxu0 %v158
    %373 = vmatprep.subr.mxu0 0.0
    %374 = vmatpush1.msra.mxu0 %v159
    %375 = vmatprep.subr.mxu0 0.0
    %376 = vmatpush1.msra.mxu0 %v160
    %377 = vmatprep.subr.mxu0 0.0
    %378 = vmatpush1.msra.mxu0 %v161
    %379 = vmatprep.subr.mxu0 0.0
    %380 = vmatpush1.msra.mxu0 %v162
    %381 = vmatprep.subr.mxu0 0.0
    %382 = vmatpush1.msra.mxu0 %v163
    %383 = vmatprep.subr.mxu0 0.0
    %384 = vmatpush1.msra.mxu0 %v164
    %385 = vmatprep.subr.mxu0 0.0
    %386 = vmatpush1.msra.mxu0 %v165
    %387 = vmatprep.subr.mxu0 0.0
    %388 = vmatpush1.msra.mxu0 %v166
    %389 = vmatprep.subr.mxu0 0.0
    %390 = vmatpush1.msra.mxu0 %v167
    %391 = vmatprep.subr.mxu0 0.0
    %392 = vmatpush1.msra.mxu0 %v168
    %393 = vmatprep.subr.mxu0 0.0
    %394 = vmatpush1.msra.mxu0 %v169
    %395 = vmatprep.subr.mxu0 0.0
    %396 = vmatpush1.msra.mxu0 %v170
    %397 = vmatprep.subr.mxu0 0.0
    %398 = vmatpush1.msra.mxu0 %v171
    %399 = vmatprep.subr.mxu0 0.0
    %400 = vmatpush1.msra.mxu0 %v172
    %401 = vmatprep.subr.mxu0 0.0
    %402 = vmatpush1.msra.mxu0 %v173
    %403 = vmatprep.subr.mxu0 0.0
    %404 = vmatpush1.msra.mxu0 %v174
    %405 = vmatprep.subr.mxu0 0.0
    %406 = vmatpush1.msra.mxu0 %v175
    %407 = vmatprep.subr.mxu0 0.0
    %408 = vmatpush1.msra.mxu0 %v176
    %409 = vmatprep.subr.mxu0 0.0
    %410 = vmatpush1.msra.mxu0 %v177
    %411 = vmatprep.subr.mxu0 0.0
    %412 = vmatpush1.msra.mxu0 %v178
    %413 = vmatprep.subr.mxu0 0.0
    %414 = vmatpush1.msra.mxu0 %v179
    %415 = vmatprep.subr.mxu0 0.0
    %416 = vmatpush1.msra.mxu0 %v180
    %417 = vmatprep.subr.mxu0 0.0
    %418 = vmatpush1.msra.mxu0 %v181
    %419 = vmatprep.subr.mxu0 0.0
    %420 = vmatpush1.msra.mxu0 %v182
    %421 = vmatprep.subr.mxu0 0.0
    %422 = vmatpush1.msra.mxu0 %v183
    %423 = vmatprep.subr.mxu0 0.0
    %424 = vmatpush1.msra.mxu0 %v184
    %425 = vmatprep.subr.mxu0 0.0
    %426 = vmatpush1.msra.mxu0 %v185
    %427 = vmatprep.subr.mxu0 0.0
    %428 = vmatpush1.msra.mxu0 %v186
    %429 = vmatprep.subr.mxu0 0.0
    %430 = vmatpush1.msra.mxu0 %v187
    %431 = vmatprep.mubr.f32.mxu0 %v89
    %432 = vmatmul.mubr.f32.gmra.mrb[0].mxu0 %v88
    %v433 = vpop.f32.mrb[0].mxu0
    %v434 = vadd.f32 %v364, %v433
    %v435 = vpop.f32.mrb[0].mxu0
    %436 = vdwg.mxu0
    %437 = vmatprep.subr.mxu0 0.0
    %438 = vmatpush1.msra.mxu0 %v188
    %439 = vmatprep.subr.mxu0 0.0
    %440 = vmatpush1.msra.mxu0 %v189
    %441 = vmatprep.subr.mxu0 0.0
    %442 = vmatpush1.msra.mxu0 %v190
    %443 = vmatprep.subr.mxu0 0.0
    %444 = vmatpush1.msra.mxu0 %v191
    %445 = vmatprep.subr.mxu0 0.0
    %446 = vmatpush1.msra.mxu0 %v192
    %447 = vmatprep.subr.mxu0 0.0
    %448 = vmatpush1.msra.mxu0 %v193
    %449 = vmatprep.subr.mxu0 0.0
    %450 = vmatpush1.msra.mxu0 %v194
    %451 = vmatprep.subr.mxu0 0.0
    %452 = vmatpush1.msra.mxu0 %v195
    %453 = vmatprep.subr.mxu0 0.0
    %454 = vmatpush1.msra.mxu0 %v196
    %455 = vmatprep.subr.mxu0 0.0
    %456 = vmatpush1.msra.mxu0 %v197
    %457 = vmatprep.subr.mxu0 0.0
    %458 = vmatpush1.msra.mxu0 %v198
    %459 = vmatprep.subr.mxu0 0.0
    %460 = vmatpush1.msra.mxu0 %v199
    %461 = vmatprep.subr.mxu0 0.0
    %462 = vmatpush1.msra.mxu0 %v200
    %463 = vmatprep.subr.mxu0 0.0
    %464 = vmatpush1.msra.mxu0 %v201
    %465 = vmatprep.subr.mxu0 0.0
    %466 = vmatpush1.msra.mxu0 %v202
    %467 = vmatprep.subr.mxu0 0.0
    %468 = vmatpush1.msra.mxu0 %v203
    %469 = vmatprep.subr.mxu0 0.0
    %470 = vmatpush1.msra.mxu0 %v204
    %471 = vmatprep.subr.mxu0 0.0
    %472 = vmatpush1.msra.mxu0 %v205
    %473 = vmatprep.subr.mxu0 0.0
    %474 = vmatpush1.msra.mxu0 %v206
    %475 = vmatprep.subr.mxu0 0.0
    %476 = vmatpush1.msra.mxu0 %v207
    %477 = vmatprep.subr.mxu0 0.0
    %478 = vmatpush1.msra.mxu0 %v208
    %479 = vmatprep.subr.mxu0 0.0
    %480 = vmatpush1.msra.mxu0 %v209
    %481 = vmatprep.subr.mxu0 0.0
    %482 = vmatpush1.msra.mxu0 %v210
    %483 = vmatprep.subr.mxu0 0.0
    %484 = vmatpush1.msra.mxu0 %v211
    %485 = vmatprep.subr.mxu0 0.0
    %486 = vmatpush1.msra.mxu0 %v212
    %487 = vmatprep.subr.mxu0 0.0
    %488 = vmatpush1.msra.mxu0 %v213
    %489 = vmatprep.subr.mxu0 0.0
    %490 = vmatpush1.msra.mxu0 %v214
    %491 = vmatprep.subr.mxu0 0.0
    %492 = vmatpush1.msra.mxu0 %v215
    %493 = vmatprep.subr.mxu0 0.0
    %494 = vmatpush1.msra.mxu0 %v216
    %495 = vmatprep.subr.mxu0 0.0
    %496 = vmatpush1.msra.mxu0 %v217
    %497 = vmatprep.subr.mxu0 0.0
    %498 = vmatpush1.msra.mxu0 %v218
    %499 = vmatprep.subr.mxu0 0.0
    %500 = vmatpush1.msra.mxu0 %v219
    %501 = vmatprep.mubr.f32.mxu0 %v91
    %502 = vmatmul.mubr.f32.gmra.mrb[0].mxu0 %v90
    %v503 = vpop.f32.mrb[0].mxu0
    %v504 = vadd.f32 %v434, %v503
    %v505 = vpop.f32.mrb[0].mxu0
    %506 = vdwg.mxu0
    %507 = vst [vmem:[#allocation2] sm:$0xff] %v504
    %v508 = vld [vmem:[#allocation10] sm:$0xff]
    %v509 = vld [vmem:[#allocation10 + $0x8] sm:$0xff]
    %v510 = vld [vmem:[#allocation10 + $0x10] sm:$0xff]
    %v511 = vld [vmem:[#allocation10 + $0x18] sm:$0xff]
    %v512 = vld [vmem:[#allocation3] sm:$0x1]
    %v513 = vld [vmem:[#allocation4] sm:$0x1]
    %v514 = vld [vmem:[#allocation2] sm:$0xff]
    %vm515 = vcmask 261120
    %v517 = vsel %vm515, %v512, 0
    %519 = vmatprep.subr.mxu0 0.0
    %520 = vmatpush1.msra.mxu0 %v508
    %521 = vmatprep.subr.mxu0 0.0
    %522 = vmatpush1.msra.mxu0 %v509
    %523 = vmatprep.subr.mxu0 0.0
    %524 = vmatpush1.msra.mxu0 %v510
    %525 = vmatprep.subr.mxu0 0.0
    %526 = vmatpush1.msra.mxu0 %v511
    %527 = vmatprep.subr.mxu0 0.0
    %528 = vmatpush1.msra.mxu0 0.0
    %529 = vmatprep.subr.mxu0 0.0
    %530 = vmatpush1.msra.mxu0 0.0
    %531 = vmatprep.subr.mxu0 0.0
    %532 = vmatpush1.msra.mxu0 0.0
    %533 = vmatprep.subr.mxu0 0.0
    %534 = vmatpush1.msra.mxu0 0.0
    %535 = vmatprep.subr.mxu0 0.0
    %536 = vmatpush1.msra.mxu0 0.0
    %537 = vmatprep.subr.mxu0 0.0
    %538 = vmatpush1.msra.mxu0 0.0
    %539 = vmatprep.subr.mxu0 0.0
    %540 = vmatpush1.msra.mxu0 0.0
    %541 = vmatprep.subr.mxu0 0.0
    %542 = vmatpush1.msra.mxu0 0.0
    %543 = vmatprep.subr.mxu0 0.0
    %544 = vmatpush1.msra.mxu0 0.0
    %545 = vmatprep.subr.mxu0 0.0
    %546 = vmatpush1.msra.mxu0 0.0
    %547 = vmatprep.subr.mxu0 0.0
    %548 = vmatpush1.msra.mxu0 0.0
    %549 = vmatprep.subr.mxu0 0.0
    %550 = vmatpush1.msra.mxu0 0.0
    %551 = vmatprep.subr.mxu0 0.0
    %552 = vmatpush1.msra.mxu0 0.0
    %553 = vmatprep.subr.mxu0 0.0
    %554 = vmatpush1.msra.mxu0 0.0
    %555 = vmatprep.subr.mxu0 0.0
    %556 = vmatpush1.msra.mxu0 0.0
    %557 = vmatprep.subr.mxu0 0.0
    %558 = vmatpush1.msra.mxu0 0.0
    %559 = vmatprep.subr.mxu0 0.0
    %560 = vmatpush1.msra.mxu0 0.0
    %561 = vmatprep.subr.mxu0 0.0
    %562 = vmatpush1.msra.mxu0 0.0
    %563 = vmatprep.subr.mxu0 0.0
    %564 = vmatpush1.msra.mxu0 0.0
    %565 = vmatprep.subr.mxu0 0.0
    %566 = vmatpush1.msra.mxu0 0.0
    %567 = vmatprep.subr.mxu0 0.0
    %568 = vmatpush1.msra.mxu0 0.0
    %569 = vmatprep.subr.mxu0 0.0
    %570 = vmatpush1.msra.mxu0 0.0
    %571 = vmatprep.subr.mxu0 0.0
    %572 = vmatpush1.msra.mxu0 0.0
    %573 = vmatprep.subr.mxu0 0.0
    %574 = vmatpush1.msra.mxu0 0.0
    %575 = vmatprep.subr.mxu0 0.0
    %576 = vmatpush1.msra.mxu0 0.0
    %577 = vmatprep.subr.mxu0 0.0
    %578 = vmatpush1.msra.mxu0 0.0
    %579 = vmatprep.subr.mxu0 0.0
    %580 = vmatpush1.msra.mxu0 0.0
    %581 = vmatprep.subr.mxu0 0.0
    %582 = vmatpush1.msra.mxu0 0.0
    %583 = vmatprep.mubr.f32.mxu0 0.0
    %584 = vmatmul.mubr.f32.gmra.mrb[0].mxu0 %v517
    %v585 = vpop.f32.mrb[0].mxu0
    %v586 = vadd.f32 0.0, %v585
    %v587 = vpop.f32.mrb[0].mxu0
    %588 = vdwg.mxu0
    %v589 = vadd.f32 %v514, %v586
    %v590 = vxor.u32 %v589, 2147483648
    %v591 = vmul.f32 %v590, 1.442695
    %v592 = vpow.pop %v591
    %v593 = vadd.f32 %v592, 1.0
    %v594 = vrcp.pop %v593
    %v595 = vmul.f32 1.0, %v594
    %v596 = vtanh.pop %v589
    %v598 = vlaneseq
    %v599 = vshrl.u32 %v598, 7
    %v600 = vsub.s32 0, %v599
    %v601 = vrot.slane %v513, %v600
    %602 = vrot.lane.b32.xlu0 %v601, 32
    %v603 = vpop.permute.xlu0 %602
    %v605 = vmul.f32 %v595, %v603
    %607 = vrot.lane.b32.xlu0 %v596, 64
    %v608 = vpop.permute.xlu0 %607
    %v610 = vmul.f32 %v595, %v608
    %612 = vrot.lane.b32.xlu0 %v610, 32
    %v613 = vpop.permute.xlu0 %612
    %v615 = vadd.f32 %v605, %v613
    %v616 = vtanh.pop %v615
    %618 = vrot.lane.b32.xlu0 %v616, 64
    %v619 = vpop.permute.xlu0 %618
    %v621 = vmul.f32 %v595, %v619
    %623 = vrot.lane.b32.xlu0 %v621, 32
    %v624 = vpop.permute.xlu0 %623
    %v625 = vsel %vm515, %v624, 0
    %627 = vmatprep.subr.mxu0 0.0
    %628 = vmatpush1.msra.mxu0 %v508
    %629 = vmatprep.subr.mxu0 0.0
    %630 = vmatpush1.msra.mxu0 %v509
    %631 = vmatprep.subr.mxu0 0.0
    %632 = vmatpush1.msra.mxu0 %v510
    %633 = vmatprep.subr.mxu0 0.0
    %634 = vmatpush1.msra.mxu0 %v511
    %635 = vmatprep.subr.mxu0 0.0
    %636 = vmatpush1.msra.mxu0 0.0
    %637 = vmatprep.subr.mxu0 0.0
    %638 = vmatpush1.msra.mxu0 0.0
    %639 = vmatprep.subr.mxu0 0.0
    %640 = vmatpush1.msra.mxu0 0.0
    %641 = vmatprep.subr.mxu0 0.0
    %642 = vmatpush1.msra.mxu0 0.0
    %643 = vmatprep.subr.mxu0 0.0
    %644 = vmatpush1.msra.mxu0 0.0
    %645 = vmatprep.subr.mxu0 0.0
    %646 = vmatpush1.msra.mxu0 0.0
    %647 = vmatprep.subr.mxu0 0.0
    %648 = vmatpush1.msra.mxu0 0.0
    %649 = vmatprep.subr.mxu0 0.0
    %650 = vmatpush1.msra.mxu0 0.0
    %651 = vmatprep.subr.mxu0 0.0
    %652 = vmatpush1.msra.mxu0 0.0
    %653 = vmatprep.subr.mxu0 0.0
    %654 = vmatpush1.msra.mxu0 0.0
    %655 = vmatprep.subr.mxu0 0.0
    %656 = vmatpush1.msra.mxu0 0.0
    %657 = vmatprep.subr.mxu0 0.0
    %658 = vmatpush1.msra.mxu0 0.0
    %659 = vmatprep.subr.mxu0 0.0
    %660 = vmatpush1.msra.mxu0 0.0
    %661 = vmatprep.subr.mxu0 0.0
    %662 = vmatpush1.msra.mxu0 0.0
    %663 = vmatprep.subr.mxu0 0.0
    %664 = vmatpush1.msra.mxu0 0.0
    %665 = vmatprep.subr.mxu0 0.0
    %666 = vmatpush1.msra.mxu0 0.0
    %667 = vmatprep.subr.mxu0 0.0
    %668 = vmatpush1.msra.mxu0 0.0
    %669 = vmatprep.subr.mxu0 0.0
    %670 = vmatpush1.msra.mxu0 0.0
    %671 = vmatprep.subr.mxu0 0.0
    %672 = vmatpush1.msra.mxu0 0.0
    %673 = vmatprep.subr.mxu0 0.0
    %674 = vmatpush1.msra.mxu0 0.0
    %675 = vmatprep.subr.mxu0 0.0
    %676 = vmatpush1.msra.mxu0 0.0
    %677 = vmatprep.subr.mxu0 0.0
    %678 = vmatpush1.msra.mxu0 0.0
    %679 = vmatprep.subr.mxu0 0.0
    %680 = vmatpush1.msra.mxu0 0.0
    %681 = vmatprep.subr.mxu0 0.0
    %682 = vmatpush1.msra.mxu0 0.0
    %683 = vmatprep.subr.mxu0 0.0
    %684 = vmatpush1.msra.mxu0 0.0
    %685 = vmatprep.subr.mxu0 0.0
    %686 = vmatpush1.msra.mxu0 0.0
    %687 = vmatprep.subr.mxu0 0.0
    %688 = vmatpush1.msra.mxu0 0.0
    %689 = vmatprep.subr.mxu0 0.0
    %690 = vmatpush1.msra.mxu0 0.0
    %691 = vmatprep.mubr.f32.mxu0 0.0
    %692 = vmatmul.mubr.f32.gmra.mrb[0].mxu0 %v625
    %v693 = vpop.f32.mrb[0].mxu0
    %v694 = vadd.f32 0.0, %v693
    %v695 = vpop.f32.mrb[0].mxu0
    %696 = vdwg.mxu0
    %v698 = vrot.slane %v694, 7
    %v700 = vadd.f32 %v514, %v698
    %v701 = vxor.u32 %v700, 2147483648
    %v702 = vmul.f32 %v701, 1.442695
    %v703 = vpow.pop %v702
    %v704 = vadd.f32 %v703, 1.0
    %v705 = vrcp.pop %v704
    %v706 = vmul.f32 1.0, %v705
    %v707 = vtanh.pop %v700
    %v709 = vrot.slane %v615, 7
    %v711 = vmul.f32 %v706, %v709
    %713 = vrot.lane.b32.xlu0 %v707, 64
    %v714 = vpop.permute.xlu0 %713
    %v716 = vmul.f32 %v706, %v714
    %718 = vrot.lane.b32.xlu0 %v716, 32
    %v719 = vpop.permute.xlu0 %718
    %v721 = vadd.f32 %v711, %v719
    %v722 = vtanh.pop %v721
    %724 = vrot.lane.b32.xlu0 %v722, 64
    %v725 = vpop.permute.xlu0 %724
    %v727 = vmul.f32 %v706, %v725
    %v729 = vrot.slane %v727, 1
    %730 = vrot.lane.b32.xlu0 %v729, 32
    %v731 = vpop.permute.xlu0 %730
    %v732 = vsel %vm515, %v731, 0
    %734 = vmatprep.subr.mxu0 0.0
    %735 = vmatpush1.msra.mxu0 %v508
    %736 = vmatprep.subr.mxu0 0.0
    %737 = vmatpush1.msra.mxu0 %v509
    %738 = vmatprep.subr.mxu0 0.0
    %739 = vmatpush1.msra.mxu0 %v510
    %740 = vmatprep.subr.mxu0 0.0
    %741 = vmatpush1.msra.mxu0 %v511
    %742 = vmatprep.subr.mxu0 0.0
    %743 = vmatpush1.msra.mxu0 0.0
    %744 = vmatprep.subr.mxu0 0.0
    %745 = vmatpush1.msra.mxu0 0.0
    %746 = vmatprep.subr.mxu0 0.0
    %747 = vmatpush1.msra.mxu0 0.0
    %748 = vmatprep.subr.mxu0 0.0
    %749 = vmatpush1.msra.mxu0 0.0
    %750 = vmatprep.subr.mxu0 0.0
    %751 = vmatpush1.msra.mxu0 0.0
    %752 = vmatprep.subr.mxu0 0.0
    %753 = vmatpush1.msra.mxu0 0.0
    %754 = vmatprep.subr.mxu0 0.0
    %755 = vmatpush1.msra.mxu0 0.0
    %756 = vmatprep.subr.mxu0 0.0
    %757 = vmatpush1.msra.mxu0 0.0
    %758 = vmatprep.subr.mxu0 0.0
    %759 = vmatpush1.msra.mxu0 0.0
    %760 = vmatprep.subr.mxu0 0.0
    %761 = vmatpush1.msra.mxu0 0.0
    %762 = vmatprep.subr.mxu0 0.0
    %763 = vmatpush1.msra.mxu0 0.0
    %764 = vmatprep.subr.mxu0 0.0
    %765 = vmatpush1.msra.mxu0 0.0
    %766 = vmatprep.subr.mxu0 0.0
    %767 = vmatpush1.msra.mxu0 0.0
    %768 = vmatprep.subr.mxu0 0.0
    %769 = vmatpush1.msra.mxu0 0.0
    %770 = vmatprep.subr.mxu0 0.0
    %771 = vmatpush1.msra.mxu0 0.0
    %772 = vmatprep.subr.mxu0 0.0
    %773 = vmatpush1.msra.mxu0 0.0
    %774 = vmatprep.subr.mxu0 0.0
    %775 = vmatpush1.msra.mxu0 0.0
    %776 = vmatprep.subr.mxu0 0.0
    %777 = vmatpush1.msra.mxu0 0.0
    %778 = vmatprep.subr.mxu0 0.0
    %779 = vmatpush1.msra.mxu0 0.0
    %780 = vmatprep.subr.mxu0 0.0
    %781 = vmatpush1.msra.mxu0 0.0
    %782 = vmatprep.subr.mxu0 0.0
    %783 = vmatpush1.msra.mxu0 0.0
    %784 = vmatprep.subr.mxu0 0.0
    %785 = vmatpush1.msra.mxu0 0.0
    %786 = vmatprep.subr.mxu0 0.0
    %787 = vmatpush1.msra.mxu0 0.0
    %788 = vmatprep.subr.mxu0 0.0
    %789 = vmatpush1.msra.mxu0 0.0
    %790 = vmatprep.subr.mxu0 0.0
    %791 = vmatpush1.msra.mxu0 0.0
    %792 = vmatprep.subr.mxu0 0.0
    %793 = vmatpush1.msra.mxu0 0.0
    %794 = vmatprep.subr.mxu0 0.0
    %795 = vmatpush1.msra.mxu0 0.0
    %796 = vmatprep.subr.mxu0 0.0
    %797 = vmatpush1.msra.mxu0 0.0
    %798 = vmatprep.mubr.f32.mxu0 0.0
    %799 = vmatmul.mubr.f32.gmra.mrb[0].mxu0 %v732
    %v800 = vpop.f32.mrb[0].mxu0
    %v801 = vadd.f32 0.0, %v800
    %v802 = vpop.f32.mrb[0].mxu0
    %803 = vdwg.mxu0
    %v805 = vrot.slane %v801, 6
    %v807 = vadd.f32 %v514, %v805
    %v808 = vxor.u32 %v807, 2147483648
    %v809 = vmul.f32 %v808, 1.442695
    %v810 = vpow.pop %v809
    %v811 = vadd.f32 %v810, 1.0
    %v812 = vrcp.pop %v811
    %v813 = vmul.f32 1.0, %v812
    %v814 = vtanh.pop %v807
    %v816 = vrot.slane %v721, 7
    %v818 = vmul.f32 %v813, %v816
    %820 = vrot.lane.b32.xlu0 %v814, 64
    %v821 = vpop.permute.xlu0 %820
    %v823 = vmul.f32 %v813, %v821
    %825 = vrot.lane.b32.xlu0 %v823, 32
    %v826 = vpop.permute.xlu0 %825
    %v828 = vadd.f32 %v818, %v826
    %v829 = vtanh.pop %v828
    %831 = vrot.lane.b32.xlu0 %v829, 64
    %v832 = vpop.permute.xlu0 %831
    %v834 = vmul.f32 %v813, %v832
    %v836 = vrot.slane %v834, 2
    %837 = vrot.lane.b32.xlu0 %v836, 32
    %v838 = vpop.permute.xlu0 %837
    %v839 = vsel %vm515, %v838, 0
    %841 = vmatprep.subr.mxu0 0.0
    %842 = vmatpush1.msra.mxu0 %v508
    %843 = vmatprep.subr.mxu0 0.0
    %844 = vmatpush1.msra.mxu0 %v509
    %845 = vmatprep.subr.mxu0 0.0
    %846 = vmatpush1.msra.mxu0 %v510
    %847 = vmatprep.subr.mxu0 0.0
    %848 = vmatpush1.msra.mxu0 %v511
    %849 = vmatprep.subr.mxu0 0.0
    %850 = vmatpush1.msra.mxu0 0.0
    %851 = vmatprep.subr.mxu0 0.0
    %852 = vmatpush1.msra.mxu0 0.0
    %853 = vmatprep.subr.mxu0 0.0
    %854 = vmatpush1.msra.mxu0 0.0
    %855 = vmatprep.subr.mxu0 0.0
    %856 = vmatpush1.msra.mxu0 0.0
    %857 = vmatprep.subr.mxu0 0.0
    %858 = vmatpush1.msra.mxu0 0.0
    %859 = vmatprep.subr.mxu0 0.0
    %860 = vmatpush1.msra.mxu0 0.0
    %861 = vmatprep.subr.mxu0 0.0
    %862 = vmatpush1.msra.mxu0 0.0
    %863 = vmatprep.subr.mxu0 0.0
    %864 = vmatpush1.msra.mxu0 0.0
    %865 = vmatprep.subr.mxu0 0.0
    %866 = vmatpush1.msra.mxu0 0.0
    %867 = vmatprep.subr.mxu0 0.0
    %868 = vmatpush1.msra.mxu0 0.0
    %869 = vmatprep.subr.mxu0 0.0
    %870 = vmatpush1.msra.mxu0 0.0
    %871 = vmatprep.subr.mxu0 0.0
    %872 = vmatpush1.msra.mxu0 0.0
    %873 = vmatprep.subr.mxu0 0.0
    %874 = vmatpush1.msra.mxu0 0.0
    %875 = vmatprep.subr.mxu0 0.0
    %876 = vmatpush1.msra.mxu0 0.0
    %877 = vmatprep.subr.mxu0 0.0
    %878 = vmatpush1.msra.mxu0 0.0
    %879 = vmatprep.subr.mxu0 0.0
    %880 = vmatpush1.msra.mxu0 0.0
    %881 = vmatprep.subr.mxu0 0.0
    %882 = vmatpush1.msra.mxu0 0.0
    %883 = vmatprep.subr.mxu0 0.0
    %884 = vmatpush1.msra.mxu0 0.0
    %885 = vmatprep.subr.mxu0 0.0
    %886 = vmatpush1.msra.mxu0 0.0
    %887 = vmatprep.subr.mxu0 0.0
    %888 = vmatpush1.msra.mxu0 0.0
    %889 = vmatprep.subr.mxu0 0.0
    %890 = vmatpush1.msra.mxu0 0.0
    %891 = vmatprep.subr.mxu0 0.0
    %892 = vmatpush1.msra.mxu0 0.0
    %893 = vmatprep.subr.mxu0 0.0
    %894 = vmatpush1.msra.mxu0 0.0
    %895 = vmatprep.subr.mxu0 0.0
    %896 = vmatpush1.msra.mxu0 0.0
    %897 = vmatprep.subr.mxu0 0.0
    %898 = vmatpush1.msra.mxu0 0.0
    %899 = vmatprep.subr.mxu0 0.0
    %900 = vmatpush1.msra.mxu0 0.0
    %901 = vmatprep.subr.mxu0 0.0
    %902 = vmatpush1.msra.mxu0 0.0
    %903 = vmatprep.subr.mxu0 0.0
    %904 = vmatpush1.msra.mxu0 0.0
    %905 = vmatprep.mubr.f32.mxu0 0.0
    %906 = vmatmul.mubr.f32.gmra.mrb[0].mxu0 %v839
    %v907 = vpop.f32.mrb[0].mxu0
    %v908 = vadd.f32 0.0, %v907
    %v909 = vpop.f32.mrb[0].mxu0
    %910 = vdwg.mxu0
    %v912 = vrot.slane %v908, 5
    %v914 = vadd.f32 %v514, %v912
    %v915 = vxor.u32 %v914, 2147483648
    %v916 = vmul.f32 %v915, 1.442695
    %v917 = vpow.pop %v916
    %v918 = vadd.f32 %v917, 1.0
    %v919 = vrcp.pop %v918
    %v920 = vmul.f32 1.0, %v919
    %v921 = vtanh.pop %v914
    %v923 = vrot.slane %v828, 7
    %v925 = vmul.f32 %v920, %v923
    %927 = vrot.lane.b32.xlu0 %v921, 64
    %v928 = vpop.permute.xlu0 %927
    %v930 = vmul.f32 %v920, %v928
    %932 = vrot.lane.b32.xlu0 %v930, 32
    %v933 = vpop.permute.xlu0 %932
    %v935 = vadd.f32 %v925, %v933
    %v936 = vtanh.pop %v935
    %938 = vrot.lane.b32.xlu0 %v936, 64
    %v939 = vpop.permute.xlu0 %938
    %v941 = vmul.f32 %v920, %v939
    %v943 = vrot.slane %v941, 3
    %944 = vrot.lane.b32.xlu0 %v943, 32
    %v945 = vpop.permute.xlu0 %944
    %v946 = vsel %vm515, %v945, 0
    %948 = vmatprep.subr.mxu0 0.0
    %949 = vmatpush1.msra.mxu0 %v508
    %950 = vmatprep.subr.mxu0 0.0
    %951 = vmatpush1.msra.mxu0 %v509
    %952 = vmatprep.subr.mxu0 0.0
    %953 = vmatpush1.msra.mxu0 %v510
    %954 = vmatprep.subr.mxu0 0.0
    %955 = vmatpush1.msra.mxu0 %v511
    %956 = vmatprep.subr.mxu0 0.0
    %957 = vmatpush1.msra.mxu0 0.0
    %958 = vmatprep.subr.mxu0 0.0
    %959 = vmatpush1.msra.mxu0 0.0
    %960 = vmatprep.subr.mxu0 0.0
    %961 = vmatpush1.msra.mxu0 0.0
    %962 = vmatprep.subr.mxu0 0.0
    %963 = vmatpush1.msra.mxu0 0.0
    %964 = vmatprep.subr.mxu0 0.0
    %965 = vmatpush1.msra.mxu0 0.0
    %966 = vmatprep.subr.mxu0 0.0
    %967 = vmatpush1.msra.mxu0 0.0
    %968 = vmatprep.subr.mxu0 0.0
    %969 = vmatpush1.msra.mxu0 0.0
    %970 = vmatprep.subr.mxu0 0.0
    %971 = vmatpush1.msra.mxu0 0.0
    %972 = vmatprep.subr.mxu0 0.0
    %973 = vmatpush1.msra.mxu0 0.0
    %974 = vmatprep.subr.mxu0 0.0
    %975 = vmatpush1.msra.mxu0 0.0
    %976 = vmatprep.subr.mxu0 0.0
    %977 = vmatpush1.msra.mxu0 0.0
    %978 = vmatprep.subr.mxu0 0.0
    %979 = vmatpush1.msra.mxu0 0.0
    %980 = vmatprep.subr.mxu0 0.0
    %981 = vmatpush1.msra.mxu0 0.0
    %982 = vmatprep.subr.mxu0 0.0
    %983 = vmatpush1.msra.mxu0 0.0
    %984 = vmatprep.subr.mxu0 0.0
    %985 = vmatpush1.msra.mxu0 0.0
    %986 = vmatprep.subr.mxu0 0.0
    %987 = vmatpush1.msra.mxu0 0.0
    %988 = vmatprep.subr.mxu0 0.0
    %989 = vmatpush1.msra.mxu0 0.0
    %990 = vmatprep.subr.mxu0 0.0
    %991 = vmatpush1.msra.mxu0 0.0
    %992 = vmatprep.subr.mxu0 0.0
    %993 = vmatpush1.msra.mxu0 0.0
    %994 = vmatprep.subr.mxu0 0.0
    %995 = vmatpush1.msra.mxu0 0.0
    %996 = vmatprep.subr.mxu0 0.0
    %997 = vmatpush1.msra.mxu0 0.0
    %998 = vmatprep.subr.mxu0 0.0
    %999 = vmatpush1.msra.mxu0 0.0
    %1000 = vmatprep.subr.mxu0 0.0
    %1001 = vmatpush1.msra.mxu0 0.0
    %1002 = vmatprep.subr.mxu0 0.0
    %1003 = vmatpush1.msra.mxu0 0.0
    %1004 = vmatprep.subr.mxu0 0.0
    %1005 = vmatpush1.msra.mxu0 0.0
    %1006 = vmatprep.subr.mxu0 0.0
    %1007 = vmatpush1.msra.mxu0 0.0
    %1008 = vmatprep.subr.mxu0 0.0
    %1009 = vmatpush1.msra.mxu0 0.0
    %1010 = vmatprep.subr.mxu0 0.0
    %1011 = vmatpush1.msra.mxu0 0.0
    %1012 = vmatprep.mubr.f32.mxu0 0.0
    %1013 = vmatmul.mubr.f32.gmra.mrb[0].mxu0 %v946
    %v1014 = vpop.f32.mrb[0].mxu0
    %v1015 = vadd.f32 0.0, %v1014
    %v1016 = vpop.f32.mrb[0].mxu0
    %1017 = vdwg.mxu0
    %v1019 = vrot.slane %v1015, 4
    %v1021 = vadd.f32 %v514, %v1019
    %v1022 = vxor.u32 %v1021, 2147483648
    %v1023 = vmul.f32 %v1022, 1.442695
    %v1024 = vpow.pop %v1023
    %v1025 = vadd.f32 %v1024, 1.0
    %v1026 = vrcp.pop %v1025
    %v1027 = vmul.f32 1.0, %v1026
    %v1028 = vtanh.pop %v1021
    %v1030 = vrot.slane %v935, 7
    %v1032 = vmul.f32 %v1027, %v1030
    %1034 = vrot.lane.b32.xlu0 %v1028, 64
    %v1035 = vpop.permute.xlu0 %1034
    %v1037 = vmul.f32 %v1027, %v1035
    %1039 = vrot.lane.b32.xlu0 %v1037, 32
    %v1040 = vpop.permute.xlu0 %1039
    %v1042 = vadd.f32 %v1032, %v1040
    %v1043 = vtanh.pop %v1042
    %1045 = vrot.lane.b32.xlu0 %v1043, 64
    %v1046 = vpop.permute.xlu0 %1045
    %v1048 = vmul.f32 %v1027, %v1046
    %v1050 = vrot.slane %v1048, 4
    %1051 = vrot.lane.b32.xlu0 %v1050, 32
    %v1052 = vpop.permute.xlu0 %1051
    %v1053 = vsel %vm515, %v1052, 0
    %1055 = vmatprep.subr.mxu0 0.0
    %1056 = vmatpush1.msra.mxu0 %v508
    %1057 = vmatprep.subr.mxu0 0.0
    %1058 = vmatpush1.msra.mxu0 %v509
    %1059 = vmatprep.subr.mxu0 0.0
    %1060 = vmatpush1.msra.mxu0 %v510
    %1061 = vmatprep.subr.mxu0 0.0
    %1062 = vmatpush1.msra.mxu0 %v511
    %1063 = vmatprep.subr.mxu0 0.0
    %1064 = vmatpush1.msra.mxu0 0.0
    %1065 = vmatprep.subr.mxu0 0.0
    %1066 = vmatpush1.msra.mxu0 0.0
    %1067 = vmatprep.subr.mxu0 0.0
    %1068 = vmatpush1.msra.mxu0 0.0
    %1069 = vmatprep.subr.mxu0 0.0
    %1070 = vmatpush1.msra.mxu0 0.0
    %1071 = vmatprep.subr.mxu0 0.0
    %1072 = vmatpush1.msra.mxu0 0.0
    %1073 = vmatprep.subr.mxu0 0.0
    %1074 = vmatpush1.msra.mxu0 0.0
    %1075 = vmatprep.subr.mxu0 0.0
    %1076 = vmatpush1.msra.mxu0 0.0
    %1077 = vmatprep.subr.mxu0 0.0
    %1078 = vmatpush1.msra.mxu0 0.0
    %1079 = vmatprep.subr.mxu0 0.0
    %1080 = vmatpush1.msra.mxu0 0.0
    %1081 = vmatprep.subr.mxu0 0.0
    %1082 = vmatpush1.msra.mxu0 0.0
    %1083 = vmatprep.subr.mxu0 0.0
    %1084 = vmatpush1.msra.mxu0 0.0
    %1085 = vmatprep.subr.mxu0 0.0
    %1086 = vmatpush1.msra.mxu0 0.0
    %1087 = vmatprep.subr.mxu0 0.0
    %1088 = vmatpush1.msra.mxu0 0.0
    %1089 = vmatprep.subr.mxu0 0.0
    %1090 = vmatpush1.msra.mxu0 0.0
    %1091 = vmatprep.subr.mxu0 0.0
    %1092 = vmatpush1.msra.mxu0 0.0
    %1093 = vmatprep.subr.mxu0 0.0
    %1094 = vmatpush1.msra.mxu0 0.0
    %1095 = vmatprep.subr.mxu0 0.0
    %1096 = vmatpush1.msra.mxu0 0.0
    %1097 = vmatprep.subr.mxu0 0.0
    %1098 = vmatpush1.msra.mxu0 0.0
    %1099 = vmatprep.subr.mxu0 0.0
    %1100 = vmatpush1.msra.mxu0 0.0
    %1101 = vmatprep.subr.mxu0 0.0
    %1102 = vmatpush1.msra.mxu0 0.0
    %1103 = vmatprep.subr.mxu0 0.0
    %1104 = vmatpush1.msra.mxu0 0.0
    %1105 = vmatprep.subr.mxu0 0.0
    %1106 = vmatpush1.msra.mxu0 0.0
    %1107 = vmatprep.subr.mxu0 0.0
    %1108 = vmatpush1.msra.mxu0 0.0
    %1109 = vmatprep.subr.mxu0 0.0
    %1110 = vmatpush1.msra.mxu0 0.0
    %1111 = vmatprep.subr.mxu0 0.0
    %1112 = vmatpush1.msra.mxu0 0.0
    %1113 = vmatprep.subr.mxu0 0.0
    %1114 = vmatpush1.msra.mxu0 0.0
    %1115 = vmatprep.subr.mxu0 0.0
    %1116 = vmatpush1.msra.mxu0 0.0
    %1117 = vmatprep.subr.mxu0 0.0
    %1118 = vmatpush1.msra.mxu0 0.0
    %1119 = vmatprep.mubr.f32.mxu0 0.0
    %1120 = vmatmul.mubr.f32.gmra.mrb[0].mxu0 %v1053
    %v1121 = vpop.f32.mrb[0].mxu0
    %v1122 = vadd.f32 0.0, %v1121
    %v1123 = vpop.f32.mrb[0].mxu0
    %1124 = vdwg.mxu0
    %v1126 = vrot.slane %v1122, 3
    %v1128 = vadd.f32 %v514, %v1126
    %v1129 = vxor.u32 %v1128, 2147483648
    %v1130 = vmul.f32 %v1129, 1.442695
    %v1131 = vpow.pop %v1130
    %v1132 = vadd.f32 %v1131, 1.0
    %v1133 = vrcp.pop %v1132
    %v1134 = vmul.f32 1.0, %v1133
    %v1135 = vtanh.pop %v1128
    %v1137 = vrot.slane %v1042, 7
    %v1139 = vmul.f32 %v1134, %v1137
    %1141 = vrot.lane.b32.xlu0 %v1135, 64
    %v1142 = vpop.permute.xlu0 %1141
    %v1144 = vmul.f32 %v1134, %v1142
    %1146 = vrot.lane.b32.xlu0 %v1144, 32
    %v1147 = vpop.permute.xlu0 %1146
    %v1149 = vadd.f32 %v1139, %v1147
    %v1150 = vtanh.pop %v1149
    %1152 = vrot.lane.b32.xlu0 %v1150, 64
    %v1153 = vpop.permute.xlu0 %1152
    %v1155 = vmul.f32 %v1134, %v1153
    %v1157 = vrot.slane %v1155, 5
    %1158 = vrot.lane.b32.xlu0 %v1157, 32
    %v1159 = vpop.permute.xlu0 %1158
    %v1160 = vsel %vm515, %v1159, 0
    %1162 = vmatprep.subr.mxu0 0.0
    %1163 = vmatpush1.msra.mxu0 %v508
    %1164 = vmatprep.subr.mxu0 0.0
    %1165 = vmatpush1.msra.mxu0 %v509
    %1166 = vmatprep.subr.mxu0 0.0
    %1167 = vmatpush1.msra.mxu0 %v510
    %1168 = vmatprep.subr.mxu0 0.0
    %1169 = vmatpush1.msra.mxu0 %v511
    %1170 = vmatprep.subr.mxu0 0.0
    %1171 = vmatpush1.msra.mxu0 0.0
    %1172 = vmatprep.subr.mxu0 0.0
    %1173 = vmatpush1.msra.mxu0 0.0
    %1174 = vmatprep.subr.mxu0 0.0
    %1175 = vmatpush1.msra.mxu0 0.0
    %1176 = vmatprep.subr.mxu0 0.0
    %1177 = vmatpush1.msra.mxu0 0.0
    %1178 = vmatprep.subr.mxu0 0.0
    %1179 = vmatpush1.msra.mxu0 0.0
    %1180 = vmatprep.subr.mxu0 0.0
    %1181 = vmatpush1.msra.mxu0 0.0
    %1182 = vmatprep.subr.mxu0 0.0
    %1183 = vmatpush1.msra.mxu0 0.0
    %1184 = vmatprep.subr.mxu0 0.0
    %1185 = vmatpush1.msra.mxu0 0.0
    %1186 = vmatprep.subr.mxu0 0.0
    %1187 = vmatpush1.msra.mxu0 0.0
    %1188 = vmatprep.subr.mxu0 0.0
    %1189 = vmatpush1.msra.mxu0 0.0
    %1190 = vmatprep.subr.mxu0 0.0
    %1191 = vmatpush1.msra.mxu0 0.0
    %1192 = vmatprep.subr.mxu0 0.0
    %1193 = vmatpush1.msra.mxu0 0.0
    %1194 = vmatprep.subr.mxu0 0.0
    %1195 = vmatpush1.msra.mxu0 0.0
    %1196 = vmatprep.subr.mxu0 0.0
    %1197 = vmatpush1.msra.mxu0 0.0
    %1198 = vmatprep.subr.mxu0 0.0
    %1199 = vmatpush1.msra.mxu0 0.0
    %1200 = vmatprep.subr.mxu0 0.0
    %1201 = vmatpush1.msra.mxu0 0.0
    %1202 = vmatprep.subr.mxu0 0.0
    %1203 = vmatpush1.msra.mxu0 0.0
    %1204 = vmatprep.subr.mxu0 0.0
    %1205 = vmatpush1.msra.mxu0 0.0
    %1206 = vmatprep.subr.mxu0 0.0
    %1207 = vmatpush1.msra.mxu0 0.0
    %1208 = vmatprep.subr.mxu0 0.0
    %1209 = vmatpush1.msra.mxu0 0.0
    %1210 = vmatprep.subr.mxu0 0.0
    %1211 = vmatpush1.msra.mxu0 0.0
    %1212 = vmatprep.subr.mxu0 0.0
    %1213 = vmatpush1.msra.mxu0 0.0
    %1214 = vmatprep.subr.mxu0 0.0
    %1215 = vmatpush1.msra.mxu0 0.0
    %1216 = vmatprep.subr.mxu0 0.0
    %1217 = vmatpush1.msra.mxu0 0.0
    %1218 = vmatprep.subr.mxu0 0.0
    %1219 = vmatpush1.msra.mxu0 0.0
    %1220 = vmatprep.subr.mxu0 0.0
    %1221 = vmatpush1.msra.mxu0 0.0
    %1222 = vmatprep.subr.mxu0 0.0
    %1223 = vmatpush1.msra.mxu0 0.0
    %1224 = vmatprep.subr.mxu0 0.0
    %1225 = vmatpush1.msra.mxu0 0.0
    %1226 = vmatprep.mubr.f32.mxu0 0.0
    %1227 = vmatmul.mubr.f32.gmra.mrb[0].mxu0 %v1160
    %v1228 = vpop.f32.mrb[0].mxu0
    %v1229 = vadd.f32 0.0, %v1228
    %v1230 = vpop.f32.mrb[0].mxu0
    %1231 = vdwg.mxu0
    %v1233 = vrot.slane %v1229, 2
    %v1235 = vadd.f32 %v514, %v1233
    %v1236 = vxor.u32 %v1235, 2147483648
    %v1237 = vmul.f32 %v1236, 1.442695
    %v1238 = vpow.pop %v1237
    %v1239 = vadd.f32 %v1238, 1.0
    %v1240 = vrcp.pop %v1239
    %v1241 = vmul.f32 1.0, %v1240
    %v1242 = vtanh.pop %v1235
    %v1244 = vrot.slane %v1149, 7
    %v1246 = vmul.f32 %v1241, %v1244
    %1248 = vrot.lane.b32.xlu0 %v1242, 64
    %v1249 = vpop.permute.xlu0 %1248
    %v1251 = vmul.f32 %v1241, %v1249
    %1253 = vrot.lane.b32.xlu0 %v1251, 32
    %v1254 = vpop.permute.xlu0 %1253
    %v1256 = vadd.f32 %v1246, %v1254
    %v1257 = vtanh.pop %v1256
    %1259 = vrot.lane.b32.xlu0 %v1257, 64
    %v1260 = vpop.permute.xlu0 %1259
    %v1262 = vmul.f32 %v1241, %v1260
    %v1264 = vrot.slane %v1262, 6
    %1265 = vrot.lane.b32.xlu0 %v1264, 32
    %v1266 = vpop.permute.xlu0 %1265
    %v1267 = vsel %vm515, %v1266, 0
    %1269 = vmatprep.subr.mxu0 0.0
    %1270 = vmatpush1.msra.mxu0 %v508
    %1271 = vmatprep.subr.mxu0 0.0
    %1272 = vmatpush1.msra.mxu0 %v509
    %1273 = vmatprep.subr.mxu0 0.0
    %1274 = vmatpush1.msra.mxu0 %v510
    %1275 = vmatprep.subr.mxu0 0.0
    %1276 = vmatpush1.msra.mxu0 %v511
    %1277 = vmatprep.subr.mxu0 0.0
    %1278 = vmatpush1.msra.mxu0 0.0
    %1279 = vmatprep.subr.mxu0 0.0
    %1280 = vmatpush1.msra.mxu0 0.0
    %1281 = vmatprep.subr.mxu0 0.0
    %1282 = vmatpush1.msra.mxu0 0.0
    %1283 = vmatprep.subr.mxu0 0.0
    %1284 = vmatpush1.msra.mxu0 0.0
    %1285 = vmatprep.subr.mxu0 0.0
    %1286 = vmatpush1.msra.mxu0 0.0
    %1287 = vmatprep.subr.mxu0 0.0
    %1288 = vmatpush1.msra.mxu0 0.0
    %1289 = vmatprep.subr.mxu0 0.0
    %1290 = vmatpush1.msra.mxu0 0.0
    %1291 = vmatprep.subr.mxu0 0.0
    %1292 = vmatpush1.msra.mxu0 0.0
    %1293 = vmatprep.subr.mxu0 0.0
    %1294 = vmatpush1.msra.mxu0 0.0
    %1295 = vmatprep.subr.mxu0 0.0
    %1296 = vmatpush1.msra.mxu0 0.0
    %1297 = vmatprep.subr.mxu0 0.0
    %1298 = vmatpush1.msra.mxu0 0.0
    %1299 = vmatprep.subr.mxu0 0.0
    %1300 = vmatpush1.msra.mxu0 0.0
    %1301 = vmatprep.subr.mxu0 0.0
    %1302 = vmatpush1.msra.mxu0 0.0
    %1303 = vmatprep.subr.mxu0 0.0
    %1304 = vmatpush1.msra.mxu0 0.0
    %1305 = vmatprep.subr.mxu0 0.0
    %1306 = vmatpush1.msra.mxu0 0.0
    %1307 = vmatprep.subr.mxu0 0.0
    %1308 = vmatpush1.msra.mxu0 0.0
    %1309 = vmatprep.subr.mxu0 0.0
    %1310 = vmatpush1.msra.mxu0 0.0
    %1311 = vmatprep.subr.mxu0 0.0
    %1312 = vmatpush1.msra.mxu0 0.0
    %1313 = vmatprep.subr.mxu0 0.0
    %1314 = vmatpush1.msra.mxu0 0.0
    %1315 = vmatprep.subr.mxu0 0.0
    %1316 = vmatpush1.msra.mxu0 0.0
    %1317 = vmatprep.subr.mxu0 0.0
    %1318 = vmatpush1.msra.mxu0 0.0
    %1319 = vmatprep.subr.mxu0 0.0
    %1320 = vmatpush1.msra.mxu0 0.0
    %1321 = vmatprep.subr.mxu0 0.0
    %1322 = vmatpush1.msra.mxu0 0.0
    %1323 = vmatprep.subr.mxu0 0.0
    %1324 = vmatpush1.msra.mxu0 0.0
    %1325 = vmatprep.subr.mxu0 0.0
    %1326 = vmatpush1.msra.mxu0 0.0
    %1327 = vmatprep.subr.mxu0 0.0
    %1328 = vmatpush1.msra.mxu0 0.0
    %1329 = vmatprep.subr.mxu0 0.0
    %1330 = vmatpush1.msra.mxu0 0.0
    %1331 = vmatprep.subr.mxu0 0.0
    %1332 = vmatpush1.msra.mxu0 0.0
    %1333 = vmatprep.mubr.f32.mxu0 0.0
    %1334 = vmatmul.mubr.f32.gmra.mrb[0].mxu0 %v1267
    %v1335 = vpop.f32.mrb[0].mxu0
    %v1336 = vadd.f32 0.0, %v1335
    %v1337 = vpop.f32.mrb[0].mxu0
    %1338 = vdwg.mxu0
    %v1340 = vrot.slane %v1336, 1
    %v1342 = vadd.f32 %v514, %v1340
    %v1343 = vxor.u32 %v1342, 2147483648
    %v1344 = vmul.f32 %v1343, 1.442695
    %v1345 = vpow.pop %v1344
    %v1346 = vadd.f32 %v1345, 1.0
    %v1347 = vrcp.pop %v1346
    %v1348 = vmul.f32 1.0, %v1347
    %v1349 = vtanh.pop %v1342
    %v1351 = vrot.slane %v1256, 7
    %v1353 = vmul.f32 %v1348, %v1351
    %1355 = vrot.lane.b32.xlu0 %v1349, 64
    %v1356 = vpop.permute.xlu0 %1355
    %v1358 = vmul.f32 %v1348, %v1356
    %1360 = vrot.lane.b32.xlu0 %v1358, 32
    %v1361 = vpop.permute.xlu0 %1360
    %v1363 = vadd.f32 %v1353, %v1361
    %v1364 = vtanh.pop %v1363
    %1366 = vrot.lane.b32.xlu0 %v1364, 64
    %v1367 = vpop.permute.xlu0 %1366
    %v1369 = vmul.f32 %v1348, %v1367
    %1371 = vrot.lane.b32.xlu0 %v1369, 32
    %v1372 = vpop.permute.xlu0 %1371
    %vm1374 = vcmask 261127
    %1375 = vst.msk [vmem:[#allocation3 - $0x7] sm:$0x80] %vm1374, %v1372
    %1377 = vrot.lane.b32.xlu0 %v1363, 96
    %v1378 = vpop.permute.xlu0 %1377
    %1380 = vst.msk [vmem:[#allocation4 - $0x7] sm:$0x80] %vm1374, %v1378
    // Predicated region
    $region46: #{tpu_custom_call.1} parent=1 // pred_check
      %p1381 = pneg %p77
    $region47: #{tpu_custom_call.1} parent=1 // pred_check_branch
      %1383 = sbr.rel (%p1381) target = $region49
    $region48: #{tpu_custom_call.1} parent=1 // pred_region
      %v1384 = vld [vmem:[#allocation11] sm:$0xff]
      %v1385 = vld [vmem:[#allocation11 + $0x8] sm:$0xff]
      %v1386 = vld [vmem:[#allocation11 + $0x10] sm:$0xff]
      %v1387 = vld [vmem:[#allocation11 + $0x18] sm:$0xff]
      %v1388 = vld [vmem:[%s5] sm:$0x1]
      %v1389 = vrot.slane %v1369, 7
      %1390 = vrot.lane.b32.xlu0 %v1389, 32
      %v1391 = vpop.permute.xlu0 %1390
      %v1392 = vsel %vm515, %v1391, 0
      %1394 = vmatprep.subr.mxu0 0.0
      %1395 = vmatpush1.msra.mxu0 %v1384
      %1396 = vmatprep.subr.mxu0 0.0
      %1397 = vmatpush1.msra.mxu0 %v1385
      %1398 = vmatprep.subr.mxu0 0.0
      %1399 = vmatpush1.msra.mxu0 %v1386
      %1400 = vmatprep.subr.mxu0 0.0
      %1401 = vmatpush1.msra.mxu0 %v1387
      %1402 = vmatprep.subr.mxu0 0.0
      %1403 = vmatpush1.msra.mxu0 0.0
      %1404 = vmatprep.subr.mxu0 0.0
      %1405 = vmatpush1.msra.mxu0 0.0
      %1406 = vmatprep.subr.mxu0 0.0
      %1407 = vmatpush1.msra.mxu0 0.0
      %1408 = vmatprep.subr.mxu0 0.0
      %1409 = vmatpush1.msra.mxu0 0.0
      %1410 = vmatprep.subr.mxu0 0.0
      %1411 = vmatpush1.msra.mxu0 0.0
      %1412 = vmatprep.subr.mxu0 0.0
      %1413 = vmatpush1.msra.mxu0 0.0
      %1414 = vmatprep.subr.mxu0 0.0
      %1415 = vmatpush1.msra.mxu0 0.0
      %1416 = vmatprep.subr.mxu0 0.0
      %1417 = vmatpush1.msra.mxu0 0.0
      %1418 = vmatprep.subr.mxu0 0.0
      %1419 = vmatpush1.msra.mxu0 0.0
      %1420 = vmatprep.subr.mxu0 0.0
      %1421 = vmatpush1.msra.mxu0 0.0
      %1422 = vmatprep.subr.mxu0 0.0
      %1423 = vmatpush1.msra.mxu0 0.0
      %1424 = vmatprep.subr.mxu0 0.0
      %1425 = vmatpush1.msra.mxu0 0.0
      %1426 = vmatprep.subr.mxu0 0.0
      %1427 = vmatpush1.msra.mxu0 0.0
      %1428 = vmatprep.subr.mxu0 0.0
      %1429 = vmatpush1.msra.mxu0 0.0
      %1430 = vmatprep.subr.mxu0 0.0
      %1431 = vmatpush1.msra.mxu0 0.0
      %1432 = vmatprep.subr.mxu0 0.0
      %1433 = vmatpush1.msra.mxu0 0.0
      %1434 = vmatprep.subr.mxu0 0.0
      %1435 = vmatpush1.msra.mxu0 0.0
      %1436 = vmatprep.subr.mxu0 0.0
      %1437 = vmatpush1.msra.mxu0 0.0
      %1438 = vmatprep.subr.mxu0 0.0
      %1439 = vmatpush1.msra.mxu0 0.0
      %1440 = vmatprep.subr.mxu0 0.0
      %1441 = vmatpush1.msra.mxu0 0.0
      %1442 = vmatprep.subr.mxu0 0.0
      %1443 = vmatpush1.msra.mxu0 0.0
      %1444 = vmatprep.subr.mxu0 0.0
      %1445 = vmatpush1.msra.mxu0 0.0
      %1446 = vmatprep.subr.mxu0 0.0
      %1447 = vmatpush1.msra.mxu0 0.0
      %1448 = vmatprep.subr.mxu0 0.0
      %1449 = vmatpush1.msra.mxu0 0.0
      %1450 = vmatprep.subr.mxu0 0.0
      %1451 = vmatpush1.msra.mxu0 0.0
      %1452 = vmatprep.subr.mxu0 0.0
      %1453 = vmatpush1.msra.mxu0 0.0
      %1454 = vmatprep.subr.mxu0 0.0
      %1455 = vmatpush1.msra.mxu0 0.0
      %1456 = vmatprep.subr.mxu0 0.0
      %1457 = vmatpush1.msra.mxu0 0.0
      %1458 = vmatprep.mubr.f32.mxu0 0.0
      %1459 = vmatmul.mubr.f32.gmra.mrb[0].mxu0 %v1392
      %v1460 = vpop.f32.mrb[0].mxu0
      %v1461 = vadd.f32 %v1388, %v1460
      %v1462 = vpop.f32.mrb[0].mxu0
      %1463 = vdwg.mxu0
      %1464 = vst [vmem:[#allocation13] sm:$0x1] %v1461
    $region49: #{tpu_custom_call.1} parent=1 // pred_fallthru
      _
    // Predicated region
    $region50: #{tpu_custom_call.1} parent=1 // pred_check
      _
    $region51: #{tpu_custom_call.1} parent=1 // pred_check_branch
      %1466 = sbr.rel (0) target = $region53
    $region52: #{tpu_custom_call.1} parent=1 // pred_region
      %s1468 = ssub.s32 16, 16
      %1469 = vsyncadd [#allocation7], %s1468
      %s1471 = sshll.u32 [#allocation13], 4
      %s1472 = int_to_ptr.vmem [resolvable:$true] %s1471
      %1474 = dma.vmem_to_hbm [thread:$0]  %s1472, 16, %s6, [#allocation7]
    $region53: #{tpu_custom_call.1} parent=1 // pred_fallthru
      _
    // Predicated region
    $region54: #{tpu_custom_call.1} parent=1 // pred_check
      _
    $region55: #{tpu_custom_call.1} parent=1 // pred_check_branch
      %1476 = sbr.rel (0) target = $region57
    $region56: #{tpu_custom_call.1} parent=1 // pred_region
      %1477 = dma.done [#allocation7], 16
    $region57: #{tpu_custom_call.1} parent=1 // pred_fallthru
      _
    %1478 = vsyncpa [#allocation6], 1
    %1479 = vsyncpa [#allocation9], 1
    %1480 = vsyncpa [#allocation12], 1
    %1481 = vsyncpa [#allocation7], 1

// kernel: tpu_custom_call.1
$region0: #{tpu_custom_call.1}
  #allocation0 [shape = 'u32[]', space=smem, size = 0x4, offset = 0x4, fixed_abs, tag = 'smem constant byte address 0x4 - core index']
  #allocation1 [shape = 'u32[144,128]{1,0:T(1,128)}', space=vmem, size = 0x12000, scoped, tag = 'internal scratch']
  #allocation2 [shape = 'f32[8,128]{1,0:T(8,128)}', space=vmem, size = 0x1000, scoped, tag = 'scratch operand']
  #allocation3 [shape = 'f32[1,32]{1,0:T(1,128)}', space=vmem, size = 0x200, scoped, tag = 'scratch operand']
  #allocation4 [shape = 'f32[1,32]{1,0:T(1,128)}', space=vmem, size = 0x200, scoped, tag = 'scratch operand']
  %s0 = inlined_call_operand.hbm [shape: f32[8,1024], index: 0, kind: input, shape index: {}]
  %s1 = inlined_call_operand.hbm [shape: f32[1024,128], index: 1, kind: input, shape index: {}]
  %s2 = inlined_call_operand.hbm [shape: f32[32,128], index: 2, kind: input, shape index: {}]
  %s3 = inlined_call_operand.vmem [shape: f32[1,128], index: 3, kind: input, shape index: {}]
  %s4 = inlined_call_operand.hbm [shape: f32[32,128], index: 4, kind: input, shape index: {}]
  %s5 = inlined_call_operand.vmem [shape: f32[1,128], index: 5, kind: input, shape index: {}]
  %s6 = inlined_call_operand.hbm [shape: f32[1,128], index: 6, kind: output, shape index: {}]
  %s7 = sld [smem:[#allocation0]]
  $region58: #{tpu_custom_call.1} parent=0
    _
  %s9 = ssub.s32 1, %s7
  %s10 = scalar_select 0, %s9, %s7
  $region1: #{tpu_custom_call.1} parent=0
    #allocation5 [shape = 'u8[32768]{0}', space=vmem, size = 0x8000, scoped, tag = 'input window, operand 0, single buffered']
    #allocation6 [shape = 's32[1]{0}', space=sflag, size = 0x4, scoped, tag = 'scoped memory for tpu_custom_call.1']
    #allocation7 [shape = 's32[1]{0}', space=sflag, size = 0x4, scoped, tag = 'scoped memory for tpu_custom_call.1']
    #allocation8 [shape = 'u8[524288]{0}', space=vmem, size = 0x80000, scoped, tag = 'input window, operand 1, single buffered']
    #allocation9 [shape = 's32[1]{0}', space=sflag, size = 0x4, scoped, tag = 'scoped memory for tpu_custom_call.1']
    #allocation10 [shape = 'u8[16384]{0}', space=vmem, size = 0x4000, scoped, tag = 'input window, operand 2, single buffered']
    #allocation11 [shape = 'u8[16384]{0}', space=vmem, size = 0x4000, scoped, tag = 'input window, operand 4, single buffered']
    #allocation12 [shape = 's32[1]{0}', space=sflag, size = 0x4, scoped, tag = 'scoped memory for tpu_custom_call.1']
    #allocation13 [shape = 'u8[512]{0}', space=vmem, size = 0x400, scoped, tag = 'output window, operand 0, single buffered']
    %11 = vsyncpa [#allocation6], 0
    %12 = vsyncpa [#allocation9], 0
    %13 = vsyncpa [#allocation12], 0
    %14 = vsyncpa [#allocation7], 0
    // Predicated region
    $region2: #{tpu_custom_call.1} parent=1 // pred_check
      _
    $region3: #{tpu_custom_call.1} parent=1 // pred_check_branch
      %16 = sbr.rel (0) target = $region5
    $region4: #{tpu_custom_call.1} parent=1 // pred_region
      %s18 = ssub.s32 1024, 1024
      %19 = vsyncadd [#allocation6], %s18
      %s21 = sshll.u32 [#allocation5], 4
      %s22 = int_to_ptr.vmem [resolvable:$true] %s21
      %24 = dma.hbm_to_vmem [thread:$0]  %s0, 1024, %s22, [#allocation6]
    $region5: #{tpu_custom_call.1} parent=1 // pred_fallthru
      _
    // Predicated region
    $region6: #{tpu_custom_call.1} parent=1 // pred_check
      _
    $region7: #{tpu_custom_call.1} parent=1 // pred_check_branch
      %26 = sbr.rel (0) target = $region9
    $region8: #{tpu_custom_call.1} parent=1 // pred_region
      %s28 = ssub.s32 16384, 16384
      %29 = vsyncadd [#allocation9], %s28
      %s30 = sshll.u32 [#allocation8], 4
      %s31 = int_to_ptr.vmem [resolvable:$true] %s30
      %36 = dma.hbm_to_vmem [thread:$0]  %s1, 16384, %s31, [#allocation9], 128, 128, 8
    $region9: #{tpu_custom_call.1} parent=1 // pred_fallthru
      _
    // Predicated region
    $region10: #{tpu_custom_call.1} parent=1 // pred_check
      _
    $region11: #{tpu_custom_call.1} parent=1 // pred_check_branch
      %38 = sbr.rel (0) target = $region13
    $region12: #{tpu_custom_call.1} parent=1 // pred_region
      %s40 = ssub.s32 512, 512
      %41 = vsyncadd [#allocation9], %s40
      %s42 = sshll.u32 [#allocation10], 4
      %s43 = int_to_ptr.vmem [resolvable:$true] %s42
      %48 = dma.hbm_to_vmem [thread:$0]  %s2, 512, %s43, [#allocation9], 128, 128, 8
    $region13: #{tpu_custom_call.1} parent=1 // pred_fallthru
      _
    // Predicated region
    $region14: #{tpu_custom_call.1} parent=1 // pred_check
      _
    $region15: #{tpu_custom_call.1} parent=1 // pred_check_branch
      %50 = sbr.rel (0) target = $region17
    $region16: #{tpu_custom_call.1} parent=1 // pred_region
      _
    $region17: #{tpu_custom_call.1} parent=1 // pred_fallthru
      _
    // Predicated region
    $region18: #{tpu_custom_call.1} parent=1 // pred_check
      _
    $region19: #{tpu_custom_call.1} parent=1 // pred_check_branch
      %52 = sbr.rel (0) target = $region21
    $region20: #{tpu_custom_call.1} parent=1 // pred_region
      %s54 = ssub.s32 512, 512
      %55 = vsyncadd [#allocation12], %s54
      %s56 = sshll.u32 [#allocation11], 4
      %s57 = int_to_ptr.vmem [resolvable:$true] %s56
      %62 = dma.hbm_to_vmem [thread:$0]  %s4, 512, %s57, [#allocation12], 128, 128, 8
    $region21: #{tpu_custom_call.1} parent=1 // pred_fallthru
      _
    // Predicated region
    $region22: #{tpu_custom_call.1} parent=1 // pred_check
      _
    $region23: #{tpu_custom_call.1} parent=1 // pred_check_branch
      %64 = sbr.rel (0) target = $region25
    $region24: #{tpu_custom_call.1} parent=1 // pred_region
      _
    $region25: #{tpu_custom_call.1} parent=1 // pred_fallthru
      _
    // Predicated region
    $region26: #{tpu_custom_call.1} parent=1 // pred_check
      _
    $region27: #{tpu_custom_call.1} parent=1 // pred_check_branch
      %66 = sbr.rel (0) target = $region29
    $region28: #{tpu_custom_call.1} parent=1 // pred_region
      %67 = dma.done [#allocation6], 1024
    $region29: #{tpu_custom_call.1} parent=1 // pred_fallthru
      _
    // Predicated region
    $region30: #{tpu_custom_call.1} parent=1 // pred_check
      _
    $region31: #{tpu_custom_call.1} parent=1 // pred_check_branch
      %69 = sbr.rel (0) target = $region33
    $region32: #{tpu_custom_call.1} parent=1 // pred_region
      %70 = dma.done [#allocation9], 16384
    $region33: #{tpu_custom_call.1} parent=1 // pred_fallthru
      _
    // Predicated region
    $region34: #{tpu_custom_call.1} parent=1 // pred_check
      _
    $region35: #{tpu_custom_call.1} parent=1 // pred_check_branch
      %72 = sbr.rel (0) target = $region37
    $region36: #{tpu_custom_call.1} parent=1 // pred_region
      %73 = dma.done [#allocation9], 512
    $region37: #{tpu_custom_call.1} parent=1 // pred_fallthru
      _
    // Predicated region
    $region38: #{tpu_custom_call.1} parent=1 // pred_check
      _
    $region39: #{tpu_custom_call.1} parent=1 // pred_check_branch
      %75 = sbr.rel (0) target = $region41
    $region40: #{tpu_custom_call.1} parent=1 // pred_region
      %76 = dma.done [#allocation12], 512
    $region41: #{tpu_custom_call.1} parent=1 // pred_fallthru
      _
    %p77 = scmp.eq.s32.totalorder 0, 0
    // Predicated region
    $region42: #{tpu_custom_call.1} parent=1 // pred_check
      %p78 = pneg %p77
    $region43: #{tpu_custom_call.1} parent=1 // pred_check_branch
      %80 = sbr.rel (%p78) target = $region45
    $region44: #{tpu_custom_call.1} parent=1 // pred_region
      %vm81 = vcmask 253952
      %82 = vst.msk [vmem:[#allocation3] sm:$0x1] %vm81, 0.0
      %83 = vst.msk [vmem:[#allocation4] sm:$0x1] %vm81, 0.0
    $region45: #{tpu_custom_call.1} parent=1 // pred_fallthru
      _
    %v84 = vld [vmem:[#allocation5] sm:$0xff]
    %v85 = vld [vmem:[#allocation5 + $0x8] sm:$0xff]
    %v86 = vld [vmem:[#allocation5 + $0x10] sm:$0xff]
    %v87 = vld [vmem:[#allocation5 + $0x18] sm:$0xff]
    %v88 = vld [vmem:[#allocation5 + $0x20] sm:$0xff]
    %v89 = vld [vmem:[#allocation5 + $0x28] sm:$0xff]
    %v90 = vld [vmem:[#allocation5 + $0x30] sm:$0xff]
    %v91 = vld [vmem:[#allocation5 + $0x38] sm:$0xff]
    %v92 = vld [vmem:[#allocation8] sm:$0xff]
    %v93 = vld [vmem:[#allocation8 + $0x8] sm:$0xff]
    %v94 = vld [vmem:[#allocation8 + $0x10] sm:$0xff]
    %v95 = vld [vmem:[#allocation8 + $0x18] sm:$0xff]
    %v96 = vld [vmem:[#allocation8 + $0x20] sm:$0xff]
    %v97 = vld [vmem:[#allocation8 + $0x28] sm:$0xff]
    %v98 = vld [vmem:[#allocation8 + $0x30] sm:$0xff]
    %v99 = vld [vmem:[#allocation8 + $0x38] sm:$0xff]
    %v100 = vld [vmem:[#allocation8 + $0x40] sm:$0xff]
    %v101 = vld [vmem:[#allocation8 + $0x48] sm:$0xff]
    %v102 = vld [vmem:[#allocation8 + $0x50] sm:$0xff]
    %v103 = vld [vmem:[#allocation8 + $0x58] sm:$0xff]
    %v104 = vld [vmem:[#allocation8 + $0x60] sm:$0xff]
    %v105 = vld [vmem:[#allocation8 + $0x68] sm:$0xff]
    %v106 = vld [vmem:[#allocation8 + $0x70] sm:$0xff]
    %v107 = vld [vmem:[#allocation8 + $0x78] sm:$0xff]
    %v108 = vld [vmem:[#allocation8 + $0x80] sm:$0xff]
    %v109 = vld [vmem:[#allocation8 + $0x88] sm:$0xff]
    %v110 = vld [vmem:[#allocation8 + $0x90] sm:$0xff]
    %v111 = vld [vmem:[#allocation8 + $0x98] sm:$0xff]
    %v112 = vld [vmem:[#allocation8 + $0xa0] sm:$0xff]
    %v113 = vld [vmem:[#allocation8 + $0xa8] sm:$0xff]
    %v114 = vld [vmem:[#allocation8 + $0xb0] sm:$0xff]
    %v115 = vld [vmem:[#allocation8 + $0xb8] sm:$0xff]
    %v116 = vld [vmem:[#allocation8 + $0xc0] sm:$0xff]
    %v117 = vld [vmem:[#allocation8 + $0xc8] sm:$0xff]
    %v118 = vld [vmem:[#allocation8 + $0xd0] sm:$0xff]
    %v119 = vld [vmem:[#allocation8 + $0xd8] sm:$0xff]
    %v120 = vld [vmem:[#allocation8 + $0xe0] sm:$0xff]
    %v121 = vld [vmem:[#allocation8 + $0xe8] sm:$0xff]
    %v122 = vld [vmem:[#allocation8 + $0xf0] sm:$0xff]
    %v123 = vld [vmem:[#allocation8 + $0xf8] sm:$0xff]
    %v124 = vld [vmem:[#allocation8 + $0x100] sm:$0xff]
    %v125 = vld [vmem:[#allocation8 + $0x108] sm:$0xff]
    %v126 = vld [vmem:[#allocation8 + $0x110] sm:$0xff]
    %v127 = vld [vmem:[#allocation8 + $0x118] sm:$0xff]
    %v128 = vld [vmem:[#allocation8 + $0x120] sm:$0xff]
    %v129 = vld [vmem:[#allocation8 + $0x128] sm:$0xff]
    %v130 = vld [vmem:[#allocation8 + $0x130] sm:$0xff]
    %v131 = vld [vmem:[#allocation8 + $0x138] sm:$0xff]
    %v132 = vld [vmem:[#allocation8 + $0x140] sm:$0xff]
    %v133 = vld [vmem:[#allocation8 + $0x148] sm:$0xff]
    %v134 = vld [vmem:[#allocation8 + $0x150] sm:$0xff]
    %v135 = vld [vmem:[#allocation8 + $0x158] sm:$0xff]
    %v136 = vld [vmem:[#allocation8 + $0x160] sm:$0xff]
    %v137 = vld [vmem:[#allocation8 + $0x168] sm:$0xff]
    %v138 = vld [vmem:[#allocation8 + $0x170] sm:$0xff]
    %v139 = vld [vmem:[#allocation8 + $0x178] sm:$0xff]
    %v140 = vld [vmem:[#allocation8 + $0x180] sm:$0xff]
    %v141 = vld [vmem:[#allocation8 + $0x188] sm:$0xff]
    %v142 = vld [vmem:[#allocation8 + $0x190] sm:$0xff]
    %v143 = vld [vmem:[#allocation8 + $0x198] sm:$0xff]
    %v144 = vld [vmem:[#allocation8 + $0x1a0] sm:$0xff]
    %v145 = vld [vmem:[#allocation8 + $0x1a8] sm:$0xff]
    %v146 = vld [vmem:[#allocation8 + $0x1b0] sm:$0xff]
    %v147 = vld [vmem:[#allocation8 + $0x1b8] sm:$0xff]
    %v148 = vld [vmem:[#allocation8 + $0x1c0] sm:$0xff]
    %v149 = vld [vmem:[#allocation8 + $0x1c8] sm:$0xff]
    %v150 = vld [vmem:[#allocation8 + $0x1d0] sm:$0xff]
    %v151 = vld [vmem:[#allocation8 + $0x1d8] sm:$0xff]
    %v152 = vld [vmem:[#allocation8 + $0x1e0] sm:$0xff]
    %v153 = vld [vmem:[#allocation8 + $0x1e8] sm:$0xff]
    %v154 = vld [vmem:[#allocation8 + $0x1f0] sm:$0xff]
    %v155 = vld [vmem:[#allocation8 + $0x1f8] sm:$0xff]
    %v156 = vld [vmem:[#allocation8 + $0x200] sm:$0xff]
    %v157 = vld [vmem:[#allocation8 + $0x208] sm:$0xff]
    %v158 = vld [vmem:[#allocation8 + $0x210] sm:$0xff]
    %v159 = vld [vmem:[#allocation8 + $0x218] sm:$0xff]
    %v160 = vld [vmem:[#allocation8 + $0x220] sm:$0xff]
    %v161 = vld [vmem:[#allocation8 + $0x228] sm:$0xff]
    %v162 = vld [vmem:[#allocation8 + $0x230] sm:$0xff]
    %v163 = vld [vmem:[#allocation8 + $0x238] sm:$0xff]
    %v164 = vld [vmem:[#allocation8 + $0x240] sm:$0xff]
    %v165 = vld [vmem:[#allocation8 + $0x248] sm:$0xff]
    %v166 = vld [vmem:[#allocation8 + $0x250] sm:$0xff]
    %v167 = vld [vmem:[#allocation8 + $0x258] sm:$0xff]
    %v168 = vld [vmem:[#allocation8 + $0x260] sm:$0xff]
    %v169 = vld [vmem:[#allocation8 + $0x268] sm:$0xff]
    %v170 = vld [vmem:[#allocation8 + $0x270] sm:$0xff]
    %v171 = vld [vmem:[#allocation8 + $0x278] sm:$0xff]
    %v172 = vld [vmem:[#allocation8 + $0x280] sm:$0xff]
    %v173 = vld [vmem:[#allocation8 + $0x288] sm:$0xff]
    %v174 = vld [vmem:[#allocation8 + $0x290] sm:$0xff]
    %v175 = vld [vmem:[#allocation8 + $0x298] sm:$0xff]
    %v176 = vld [vmem:[#allocation8 + $0x2a0] sm:$0xff]
    %v177 = vld [vmem:[#allocation8 + $0x2a8] sm:$0xff]
    %v178 = vld [vmem:[#allocation8 + $0x2b0] sm:$0xff]
    %v179 = vld [vmem:[#allocation8 + $0x2b8] sm:$0xff]
    %v180 = vld [vmem:[#allocation8 + $0x2c0] sm:$0xff]
    %v181 = vld [vmem:[#allocation8 + $0x2c8] sm:$0xff]
    %v182 = vld [vmem:[#allocation8 + $0x2d0] sm:$0xff]
    %v183 = vld [vmem:[#allocation8 + $0x2d8] sm:$0xff]
    %v184 = vld [vmem:[#allocation8 + $0x2e0] sm:$0xff]
    %v185 = vld [vmem:[#allocation8 + $0x2e8] sm:$0xff]
    %v186 = vld [vmem:[#allocation8 + $0x2f0] sm:$0xff]
    %v187 = vld [vmem:[#allocation8 + $0x2f8] sm:$0xff]
    %v188 = vld [vmem:[#allocation8 + $0x300] sm:$0xff]
    %v189 = vld [vmem:[#allocation8 + $0x308] sm:$0xff]
    %v190 = vld [vmem:[#allocation8 + $0x310] sm:$0xff]
    %v191 = vld [vmem:[#allocation8 + $0x318] sm:$0xff]
    %v192 = vld [vmem:[#allocation8 + $0x320] sm:$0xff]
    %v193 = vld [vmem:[#allocation8 + $0x328] sm:$0xff]
    %v194 = vld [vmem:[#allocation8 + $0x330] sm:$0xff]
    %v195 = vld [vmem:[#allocation8 + $0x338] sm:$0xff]
    %v196 = vld [vmem:[#allocation8 + $0x340] sm:$0xff]
    %v197 = vld [vmem:[#allocation8 + $0x348] sm:$0xff]
    %v198 = vld [vmem:[#allocation8 + $0x350] sm:$0xff]
    %v199 = vld [vmem:[#allocation8 + $0x358] sm:$0xff]
    %v200 = vld [vmem:[#allocation8 + $0x360] sm:$0xff]
    %v201 = vld [vmem:[#allocation8 + $0x368] sm:$0xff]
    %v202 = vld [vmem:[#allocation8 + $0x370] sm:$0xff]
    %v203 = vld [vmem:[#allocation8 + $0x378] sm:$0xff]
    %v204 = vld [vmem:[#allocation8 + $0x380] sm:$0xff]
    %v205 = vld [vmem:[#allocation8 + $0x388] sm:$0xff]
    %v206 = vld [vmem:[#allocation8 + $0x390] sm:$0xff]
    %v207 = vld [vmem:[#allocation8 + $0x398] sm:$0xff]
    %v208 = vld [vmem:[#allocation8 + $0x3a0] sm:$0xff]
    %v209 = vld [vmem:[#allocation8 + $0x3a8] sm:$0xff]
    %v210 = vld [vmem:[#allocation8 + $0x3b0] sm:$0xff]
    %v211 = vld [vmem:[#allocation8 + $0x3b8] sm:$0xff]
    %v212 = vld [vmem:[#allocation8 + $0x3c0] sm:$0xff]
    %v213 = vld [vmem:[#allocation8 + $0x3c8] sm:$0xff]
    %v214 = vld [vmem:[#allocation8 + $0x3d0] sm:$0xff]
    %v215 = vld [vmem:[#allocation8 + $0x3d8] sm:$0xff]
    %v216 = vld [vmem:[#allocation8 + $0x3e0] sm:$0xff]
    %v217 = vld [vmem:[#allocation8 + $0x3e8] sm:$0xff]
    %v218 = vld [vmem:[#allocation8 + $0x3f0] sm:$0xff]
    %v219 = vld [vmem:[#allocation8 + $0x3f8] sm:$0xff]
    %v220 = vld [vmem:[%s3] sm:$0x1]
    %v222 = vlaneseq
    %v223 = vshrl.u32 %v222, 7
    %v224 = vsub.s32 0, %v223
    %v225 = vrot.slane %v220, %v224
    %227 = vmatprep.subr.mxu0 0.0
    %228 = vmatpush1.msra.mxu0 %v92
    %229 = vmatprep.subr.mxu0 0.0
    %230 = vmatpush1.msra.mxu0 %v93
    %231 = vmatprep.subr.mxu0 0.0
    %232 = vmatpush1.msra.mxu0 %v94
    %233 = vmatprep.subr.mxu0 0.0
    %234 = vmatpush1.msra.mxu0 %v95
    %235 = vmatprep.subr.mxu0 0.0
    %236 = vmatpush1.msra.mxu0 %v96
    %237 = vmatprep.subr.mxu0 0.0
    %238 = vmatpush1.msra.mxu0 %v97
    %239 = vmatprep.subr.mxu0 0.0
    %240 = vmatpush1.msra.mxu0 %v98
    %241 = vmatprep.subr.mxu0 0.0
    %242 = vmatpush1.msra.mxu0 %v99
    %243 = vmatprep.subr.mxu0 0.0
    %244 = vmatpush1.msra.mxu0 %v100
    %245 = vmatprep.subr.mxu0 0.0
    %246 = vmatpush1.msra.mxu0 %v101
    %247 = vmatprep.subr.mxu0 0.0
    %248 = vmatpush1.msra.mxu0 %v102
    %249 = vmatprep.subr.mxu0 0.0
    %250 = vmatpush1.msra.mxu0 %v103
    %251 = vmatprep.subr.mxu0 0.0
    %252 = vmatpush1.msra.mxu0 %v104
    %253 = vmatprep.subr.mxu0 0.0
    %254 = vmatpush1.msra.mxu0 %v105
    %255 = vmatprep.subr.mxu0 0.0
    %256 = vmatpush1.msra.mxu0 %v106
    %257 = vmatprep.subr.mxu0 0.0
    %258 = vmatpush1.msra.mxu0 %v107
    %259 = vmatprep.subr.mxu0 0.0
    %260 = vmatpush1.msra.mxu0 %v108
    %261 = vmatprep.subr.mxu0 0.0
    %262 = vmatpush1.msra.mxu0 %v109
    %263 = vmatprep.subr.mxu0 0.0
    %264 = vmatpush1.msra.mxu0 %v110
    %265 = vmatprep.subr.mxu0 0.0
    %266 = vmatpush1.msra.mxu0 %v111
    %267 = vmatprep.subr.mxu0 0.0
    %268 = vmatpush1.msra.mxu0 %v112
    %269 = vmatprep.subr.mxu0 0.0
    %270 = vmatpush1.msra.mxu0 %v113
    %271 = vmatprep.subr.mxu0 0.0
    %272 = vmatpush1.msra.mxu0 %v114
    %273 = vmatprep.subr.mxu0 0.0
    %274 = vmatpush1.msra.mxu0 %v115
    %275 = vmatprep.subr.mxu0 0.0
    %276 = vmatpush1.msra.mxu0 %v116
    %277 = vmatprep.subr.mxu0 0.0
    %278 = vmatpush1.msra.mxu0 %v117
    %279 = vmatprep.subr.mxu0 0.0
    %280 = vmatpush1.msra.mxu0 %v118
    %281 = vmatprep.subr.mxu0 0.0
    %282 = vmatpush1.msra.mxu0 %v119
    %283 = vmatprep.subr.mxu0 0.0
    %284 = vmatpush1.msra.mxu0 %v120
    %285 = vmatprep.subr.mxu0 0.0
    %286 = vmatpush1.msra.mxu0 %v121
    %287 = vmatprep.subr.mxu0 0.0
    %288 = vmatpush1.msra.mxu0 %v122
    %289 = vmatprep.subr.mxu0 0.0
    %290 = vmatpush1.msra.mxu0 %v123
    %291 = vmatprep.mubr.f32.mxu0 %v85
    %292 = vmatmul.mubr.f32.gmra.mrb[0].mxu0 %v84
    %v293 = vpop.f32.mrb[0].mxu0
    %v294 = vadd.f32 %v225, %v293
    %v295 = vpop.f32.mrb[0].mxu0
    %296 = vdwg.mxu0
    %297 = vmatprep.subr.mxu0 0.0
    %298 = vmatpush1.msra.mxu0 %v124
    %299 = vmatprep.subr.mxu0 0.0
    %300 = vmatpush1.msra.mxu0 %v125
    %301 = vmatprep.subr.mxu0 0.0
    %302 = vmatpush1.msra.mxu0 %v126
    %303 = vmatprep.subr.mxu0 0.0
    %304 = vmatpush1.msra.mxu0 %v127
    %305 = vmatprep.subr.mxu0 0.0
    %306 = vmatpush1.msra.mxu0 %v128
    %307 = vmatprep.subr.mxu0 0.0
    %308 = vmatpush1.msra.mxu0 %v129
    %309 = vmatprep.subr.mxu0 0.0
    %310 = vmatpush1.msra.mxu0 %v130
    %311 = vmatprep.subr.mxu0 0.0
    %312 = vmatpush1.msra.mxu0 %v131
    %313 = vmatprep.subr.mxu0 0.0
    %314 = vmatpush1.msra.mxu0 %v132
    %315 = vmatprep.subr.mxu0 0.0
    %316 = vmatpush1.msra.mxu0 %v133
    %317 = vmatprep.subr.mxu0 0.0
    %318 = vmatpush1.msra.mxu0 %v134
    %319 = vmatprep.subr.mxu0 0.0
    %320 = vmatpush1.msra.mxu0 %v135
    %321 = vmatprep.subr.mxu0 0.0
    %322 = vmatpush1.msra.mxu0 %v136
    %323 = vmatprep.subr.mxu0 0.0
    %324 = vmatpush1.msra.mxu0 %v137
    %325 = vmatprep.subr.mxu0 0.0
    %326 = vmatpush1.msra.mxu0 %v138
    %327 = vmatprep.subr.mxu0 0.0
    %328 = vmatpush1.msra.mxu0 %v139
    %329 = vmatprep.subr.mxu0 0.0
    %330 = vmatpush1.msra.mxu0 %v140
    %331 = vmatprep.subr.mxu0 0.0
    %332 = vmatpush1.msra.mxu0 %v141
    %333 = vmatprep.subr.mxu0 0.0
    %334 = vmatpush1.msra.mxu0 %v142
    %335 = vmatprep.subr.mxu0 0.0
    %336 = vmatpush1.msra.mxu0 %v143
    %337 = vmatprep.subr.mxu0 0.0
    %338 = vmatpush1.msra.mxu0 %v144
    %339 = vmatprep.subr.mxu0 0.0
    %340 = vmatpush1.msra.mxu0 %v145
    %341 = vmatprep.subr.mxu0 0.0
    %342 = vmatpush1.msra.mxu0 %v146
    %343 = vmatprep.subr.mxu0 0.0
    %344 = vmatpush1.msra.mxu0 %v147
    %345 = vmatprep.subr.mxu0 0.0
    %346 = vmatpush1.msra.mxu0 %v148
    %347 = vmatprep.subr.mxu0 0.0
    %348 = vmatpush1.msra.mxu0 %v149
    %349 = vmatprep.subr.mxu0 0.0
    %350 = vmatpush1.msra.mxu0 %v150
    %351 = vmatprep.subr.mxu0 0.0
    %352 = vmatpush1.msra.mxu0 %v151
    %353 = vmatprep.subr.mxu0 0.0
    %354 = vmatpush1.msra.mxu0 %v152
    %355 = vmatprep.subr.mxu0 0.0
    %356 = vmatpush1.msra.mxu0 %v153
    %357 = vmatprep.subr.mxu0 0.0
    %358 = vmatpush1.msra.mxu0 %v154
    %359 = vmatprep.subr.mxu0 0.0
    %360 = vmatpush1.msra.mxu0 %v155
    %361 = vmatprep.mubr.f32.mxu0 %v87
    %362 = vmatmul.mubr.f32.gmra.mrb[0].mxu0 %v86
    %v363 = vpop.f32.mrb[0].mxu0
    %v364 = vadd.f32 %v294, %v363
    %v365 = vpop.f32.mrb[0].mxu0
    %366 = vdwg.mxu0
    %367 = vmatprep.subr.mxu0 0.0
    %368 = vmatpush1.msra.mxu0 %v156
    %369 = vmatprep.subr.mxu0 0.0
    %370 = vmatpush1.msra.mxu0 %v157
    %371 = vmatprep.subr.mxu0 0.0
    %372 = vmatpush1.msra.mxu0 %v158
    %373 = vmatprep.subr.mxu0 0.0
    %374 = vmatpush1.msra.mxu0 %v159
    %375 = vmatprep.subr.mxu0 0.0
    %376 = vmatpush1.msra.mxu0 %v160
    %377 = vmatprep.subr.mxu0 0.0
    %378 = vmatpush1.msra.mxu0 %v161
    %379 = vmatprep.subr.mxu0 0.0
    %380 = vmatpush1.msra.mxu0 %v162
    %381 = vmatprep.subr.mxu0 0.0
    %382 = vmatpush1.msra.mxu0 %v163
    %383 = vmatprep.subr.mxu0 0.0
    %384 = vmatpush1.msra.mxu0 %v164
    %385 = vmatprep.subr.mxu0 0.0
    %386 = vmatpush1.msra.mxu0 %v165
    %387 = vmatprep.subr.mxu0 0.0
    %388 = vmatpush1.msra.mxu0 %v166
    %389 = vmatprep.subr.mxu0 0.0
    %390 = vmatpush1.msra.mxu0 %v167
    %391 = vmatprep.subr.mxu0 0.0
    %392 = vmatpush1.msra.mxu0 %v168
    %393 = vmatprep.subr.mxu0 0.0
    %394 = vmatpush1.msra.mxu0 %v169
    %395 = vmatprep.subr.mxu0 0.0
    %396 = vmatpush1.msra.mxu0 %v170
    %397 = vmatprep.subr.mxu0 0.0
    %398 = vmatpush1.msra.mxu0 %v171
    %399 = vmatprep.subr.mxu0 0.0
    %400 = vmatpush1.msra.mxu0 %v172
    %401 = vmatprep.subr.mxu0 0.0
    %402 = vmatpush1.msra.mxu0 %v173
    %403 = vmatprep.subr.mxu0 0.0
    %404 = vmatpush1.msra.mxu0 %v174
    %405 = vmatprep.subr.mxu0 0.0
    %406 = vmatpush1.msra.mxu0 %v175
    %407 = vmatprep.subr.mxu0 0.0
    %408 = vmatpush1.msra.mxu0 %v176
    %409 = vmatprep.subr.mxu0 0.0
    %410 = vmatpush1.msra.mxu0 %v177
    %411 = vmatprep.subr.mxu0 0.0
    %412 = vmatpush1.msra.mxu0 %v178
    %413 = vmatprep.subr.mxu0 0.0
    %414 = vmatpush1.msra.mxu0 %v179
    %415 = vmatprep.subr.mxu0 0.0
    %416 = vmatpush1.msra.mxu0 %v180
    %417 = vmatprep.subr.mxu0 0.0
    %418 = vmatpush1.msra.mxu0 %v181
    %419 = vmatprep.subr.mxu0 0.0
    %420 = vmatpush1.msra.mxu0 %v182
    %421 = vmatprep.subr.mxu0 0.0
    %422 = vmatpush1.msra.mxu0 %v183
    %423 = vmatprep.subr.mxu0 0.0
    %424 = vmatpush1.msra.mxu0 %v184
    %425 = vmatprep.subr.mxu0 0.0
    %426 = vmatpush1.msra.mxu0 %v185
    %427 = vmatprep.subr.mxu0 0.0
    %428 = vmatpush1.msra.mxu0 %v186
    %429 = vmatprep.subr.mxu0 0.0
    %430 = vmatpush1.msra.mxu0 %v187
    %431 = vmatprep.mubr.f32.mxu0 %v89
    %432 = vmatmul.mubr.f32.gmra.mrb[0].mxu0 %v88
    %v433 = vpop.f32.mrb[0].mxu0
    %v434 = vadd.f32 %v364, %v433
    %v435 = vpop.f32.mrb[0].mxu0
    %436 = vdwg.mxu0
    %437 = vmatprep.subr.mxu0 0.0
    %438 = vmatpush1.msra.mxu0 %v188
    %439 = vmatprep.subr.mxu0 0.0
    %440 = vmatpush1.msra.mxu0 %v189
    %441 = vmatprep.subr.mxu0 0.0
    %442 = vmatpush1.msra.mxu0 %v190
    %443 = vmatprep.subr.mxu0 0.0
    %444 = vmatpush1.msra.mxu0 %v191
    %445 = vmatprep.subr.mxu0 0.0
    %446 = vmatpush1.msra.mxu0 %v192
    %447 = vmatprep.subr.mxu0 0.0
    %448 = vmatpush1.msra.mxu0 %v193
    %449 = vmatprep.subr.mxu0 0.0
    %450 = vmatpush1.msra.mxu0 %v194
    %451 = vmatprep.subr.mxu0 0.0
    %452 = vmatpush1.msra.mxu0 %v195
    %453 = vmatprep.subr.mxu0 0.0
    %454 = vmatpush1.msra.mxu0 %v196
    %455 = vmatprep.subr.mxu0 0.0
    %456 = vmatpush1.msra.mxu0 %v197
    %457 = vmatprep.subr.mxu0 0.0
    %458 = vmatpush1.msra.mxu0 %v198
    %459 = vmatprep.subr.mxu0 0.0
    %460 = vmatpush1.msra.mxu0 %v199
    %461 = vmatprep.subr.mxu0 0.0
    %462 = vmatpush1.msra.mxu0 %v200
    %463 = vmatprep.subr.mxu0 0.0
    %464 = vmatpush1.msra.mxu0 %v201
    %465 = vmatprep.subr.mxu0 0.0
    %466 = vmatpush1.msra.mxu0 %v202
    %467 = vmatprep.subr.mxu0 0.0
    %468 = vmatpush1.msra.mxu0 %v203
    %469 = vmatprep.subr.mxu0 0.0
    %470 = vmatpush1.msra.mxu0 %v204
    %471 = vmatprep.subr.mxu0 0.0
    %472 = vmatpush1.msra.mxu0 %v205
    %473 = vmatprep.subr.mxu0 0.0
    %474 = vmatpush1.msra.mxu0 %v206
    %475 = vmatprep.subr.mxu0 0.0
    %476 = vmatpush1.msra.mxu0 %v207
    %477 = vmatprep.subr.mxu0 0.0
    %478 = vmatpush1.msra.mxu0 %v208
    %479 = vmatprep.subr.mxu0 0.0
    %480 = vmatpush1.msra.mxu0 %v209
    %481 = vmatprep.subr.mxu0 0.0
    %482 = vmatpush1.msra.mxu0 %v210
    %483 = vmatprep.subr.mxu0 0.0
    %484 = vmatpush1.msra.mxu0 %v211
    %485 = vmatprep.subr.mxu0 0.0
    %486 = vmatpush1.msra.mxu0 %v212
    %487 = vmatprep.subr.mxu0 0.0
    %488 = vmatpush1.msra.mxu0 %v213
    %489 = vmatprep.subr.mxu0 0.0
    %490 = vmatpush1.msra.mxu0 %v214
    %491 = vmatprep.subr.mxu0 0.0
    %492 = vmatpush1.msra.mxu0 %v215
    %493 = vmatprep.subr.mxu0 0.0
    %494 = vmatpush1.msra.mxu0 %v216
    %495 = vmatprep.subr.mxu0 0.0
    %496 = vmatpush1.msra.mxu0 %v217
    %497 = vmatprep.subr.mxu0 0.0
    %498 = vmatpush1.msra.mxu0 %v218
    %499 = vmatprep.subr.mxu0 0.0
    %500 = vmatpush1.msra.mxu0 %v219
    %501 = vmatprep.mubr.f32.mxu0 %v91
    %502 = vmatmul.mubr.f32.gmra.mrb[0].mxu0 %v90
    %v503 = vpop.f32.mrb[0].mxu0
    %v504 = vadd.f32 %v434, %v503
    %v505 = vpop.f32.mrb[0].mxu0
    %506 = vdwg.mxu0
    %507 = vst [vmem:[#allocation2] sm:$0xff] %v504
    %v508 = vld [vmem:[#allocation10] sm:$0xff]
    %v509 = vld [vmem:[#allocation10 + $0x8] sm:$0xff]
    %v510 = vld [vmem:[#allocation10 + $0x10] sm:$0xff]
    %v511 = vld [vmem:[#allocation10 + $0x18] sm:$0xff]
    %v512 = vld [vmem:[#allocation3] sm:$0x1]
    %v513 = vld [vmem:[#allocation4] sm:$0x1]
    %v514 = vld [vmem:[#allocation2] sm:$0xff]
    %vm515 = vcmask 261120
    %v517 = vsel %vm515, %v512, 0
    %519 = vmatprep.subr.mxu0 0.0
    %520 = vmatpush1.msra.mxu0 %v508
    %521 = vmatprep.subr.mxu0 0.0
    %522 = vmatpush1.msra.mxu0 %v509
    %523 = vmatprep.subr.mxu0 0.0
    %524 = vmatpush1.msra.mxu0 %v510
    %525 = vmatprep.subr.mxu0 0.0
    %526 = vmatpush1.msra.mxu0 %v511
    %527 = vmatprep.subr.mxu0 0.0
    %528 = vmatpush1.msra.mxu0 0.0
    %529 = vmatprep.subr.mxu0 0.0
    %530 = vmatpush1.msra.mxu0 0.0
    %531 = vmatprep.subr.mxu0 0.0
    %532 = vmatpush1.msra.mxu0 0.0
    %533 = vmatprep.subr.mxu0 0.0
    %534 = vmatpush1.msra.mxu0 0.0
    %535 = vmatprep.subr.mxu0 0.0
    %536 = vmatpush1.msra.mxu0 0.0
    %537 = vmatprep.subr.mxu0 0.0
    %538 = vmatpush1.msra.mxu0 0.0
    %539 = vmatprep.subr.mxu0 0.0
    %540 = vmatpush1.msra.mxu0 0.0
    %541 = vmatprep.subr.mxu0 0.0
    %542 = vmatpush1.msra.mxu0 0.0
    %543 = vmatprep.subr.mxu0 0.0
    %544 = vmatpush1.msra.mxu0 0.0
    %545 = vmatprep.subr.mxu0 0.0
    %546 = vmatpush1.msra.mxu0 0.0
    %547 = vmatprep.subr.mxu0 0.0
    %548 = vmatpush1.msra.mxu0 0.0
    %549 = vmatprep.subr.mxu0 0.0
    %550 = vmatpush1.msra.mxu0 0.0
    %551 = vmatprep.subr.mxu0 0.0
    %552 = vmatpush1.msra.mxu0 0.0
    %553 = vmatprep.subr.mxu0 0.0
    %554 = vmatpush1.msra.mxu0 0.0
    %555 = vmatprep.subr.mxu0 0.0
    %556 = vmatpush1.msra.mxu0 0.0
    %557 = vmatprep.subr.mxu0 0.0
    %558 = vmatpush1.msra.mxu0 0.0
    %559 = vmatprep.subr.mxu0 0.0
    %560 = vmatpush1.msra.mxu0 0.0
    %561 = vmatprep.subr.mxu0 0.0
    %562 = vmatpush1.msra.mxu0 0.0
    %563 = vmatprep.subr.mxu0 0.0
    %564 = vmatpush1.msra.mxu0 0.0
    %565 = vmatprep.subr.mxu0 0.0
    %566 = vmatpush1.msra.mxu0 0.0
    %567 = vmatprep.subr.mxu0 0.0
    %568 = vmatpush1.msra.mxu0 0.0
    %569 = vmatprep.subr.mxu0 0.0
    %570 = vmatpush1.msra.mxu0 0.0
    %571 = vmatprep.subr.mxu0 0.0
    %572 = vmatpush1.msra.mxu0 0.0
    %573 = vmatprep.subr.mxu0 0.0
    %574 = vmatpush1.msra.mxu0 0.0
    %575 = vmatprep.subr.mxu0 0.0
    %576 = vmatpush1.msra.mxu0 0.0
    %577 = vmatprep.subr.mxu0 0.0
    %578 = vmatpush1.msra.mxu0 0.0
    %579 = vmatprep.subr.mxu0 0.0
    %580 = vmatpush1.msra.mxu0 0.0
    %581 = vmatprep.subr.mxu0 0.0
    %582 = vmatpush1.msra.mxu0 0.0
    %583 = vmatprep.mubr.f32.mxu0 0.0
    %584 = vmatmul.mubr.f32.gmra.mrb[0].mxu0 %v517
    %v585 = vpop.f32.mrb[0].mxu0
    %v586 = vadd.f32 0.0, %v585
    %v587 = vpop.f32.mrb[0].mxu0
    %588 = vdwg.mxu0
    %v589 = vadd.f32 %v514, %v586
    %v590 = vxor.u32 %v589, 2147483648
    %v591 = vmul.f32 %v590, 1.442695
    %v592 = vpow.pop %v591
    %v593 = vadd.f32 %v592, 1.0
    %v594 = vrcp.pop %v593
    %v595 = vmul.f32 1.0, %v594
    %v596 = vtanh.pop %v589
    %v598 = vlaneseq
    %v599 = vshrl.u32 %v598, 7
    %v600 = vsub.s32 0, %v599
    %v601 = vrot.slane %v513, %v600
    %602 = vrot.lane.b32.xlu0 %v601, 32
    %v603 = vpop.permute.xlu0 %602
    %v605 = vmul.f32 %v595, %v603
    %607 = vrot.lane.b32.xlu0 %v596, 64
    %v608 = vpop.permute.xlu0 %607
    %v610 = vmul.f32 %v595, %v608
    %612 = vrot.lane.b32.xlu0 %v610, 32
    %v613 = vpop.permute.xlu0 %612
    %v615 = vadd.f32 %v605, %v613
    %v616 = vtanh.pop %v615
    %618 = vrot.lane.b32.xlu0 %v616, 64
    %v619 = vpop.permute.xlu0 %618
    %v621 = vmul.f32 %v595, %v619
    %623 = vrot.lane.b32.xlu0 %v621, 32
    %v624 = vpop.permute.xlu0 %623
    %v625 = vsel %vm515, %v624, 0
    %627 = vmatprep.subr.mxu0 0.0
    %628 = vmatpush1.msra.mxu0 %v508
    %629 = vmatprep.subr.mxu0 0.0
    %630 = vmatpush1.msra.mxu0 %v509
    %631 = vmatprep.subr.mxu0 0.0
    %632 = vmatpush1.msra.mxu0 %v510
    %633 = vmatprep.subr.mxu0 0.0
    %634 = vmatpush1.msra.mxu0 %v511
    %635 = vmatprep.subr.mxu0 0.0
    %636 = vmatpush1.msra.mxu0 0.0
    %637 = vmatprep.subr.mxu0 0.0
    %638 = vmatpush1.msra.mxu0 0.0
    %639 = vmatprep.subr.mxu0 0.0
    %640 = vmatpush1.msra.mxu0 0.0
    %641 = vmatprep.subr.mxu0 0.0
    %642 = vmatpush1.msra.mxu0 0.0
    %643 = vmatprep.subr.mxu0 0.0
    %644 = vmatpush1.msra.mxu0 0.0
    %645 = vmatprep.subr.mxu0 0.0
    %646 = vmatpush1.msra.mxu0 0.0
    %647 = vmatprep.subr.mxu0 0.0
    %648 = vmatpush1.msra.mxu0 0.0
    %649 = vmatprep.subr.mxu0 0.0
    %650 = vmatpush1.msra.mxu0 0.0
    %651 = vmatprep.subr.mxu0 0.0
    %652 = vmatpush1.msra.mxu0 0.0
    %653 = vmatprep.subr.mxu0 0.0
    %654 = vmatpush1.msra.mxu0 0.0
    %655 = vmatprep.subr.mxu0 0.0
    %656 = vmatpush1.msra.mxu0 0.0
    %657 = vmatprep.subr.mxu0 0.0
    %658 = vmatpush1.msra.mxu0 0.0
    %659 = vmatprep.subr.mxu0 0.0
    %660 = vmatpush1.msra.mxu0 0.0
    %661 = vmatprep.subr.mxu0 0.0
    %662 = vmatpush1.msra.mxu0 0.0
    %663 = vmatprep.subr.mxu0 0.0
    %664 = vmatpush1.msra.mxu0 0.0
    %665 = vmatprep.subr.mxu0 0.0
    %666 = vmatpush1.msra.mxu0 0.0
    %667 = vmatprep.subr.mxu0 0.0
    %668 = vmatpush1.msra.mxu0 0.0
    %669 = vmatprep.subr.mxu0 0.0
    %670 = vmatpush1.msra.mxu0 0.0
    %671 = vmatprep.subr.mxu0 0.0
    %672 = vmatpush1.msra.mxu0 0.0
    %673 = vmatprep.subr.mxu0 0.0
    %674 = vmatpush1.msra.mxu0 0.0
    %675 = vmatprep.subr.mxu0 0.0
    %676 = vmatpush1.msra.mxu0 0.0
    %677 = vmatprep.subr.mxu0 0.0
    %678 = vmatpush1.msra.mxu0 0.0
    %679 = vmatprep.subr.mxu0 0.0
    %680 = vmatpush1.msra.mxu0 0.0
    %681 = vmatprep.subr.mxu0 0.0
    %682 = vmatpush1.msra.mxu0 0.0
    %683 = vmatprep.subr.mxu0 0.0
    %684 = vmatpush1.msra.mxu0 0.0
    %685 = vmatprep.subr.mxu0 0.0
    %686 = vmatpush1.msra.mxu0 0.0
    %687 = vmatprep.subr.mxu0 0.0
    %688 = vmatpush1.msra.mxu0 0.0
    %689 = vmatprep.subr.mxu0 0.0
    %690 = vmatpush1.msra.mxu0 0.0
    %691 = vmatprep.mubr.f32.mxu0 0.0
    %692 = vmatmul.mubr.f32.gmra.mrb[0].mxu0 %v625
    %v693 = vpop.f32.mrb[0].mxu0
    %v694 = vadd.f32 0.0, %v693
    %v695 = vpop.f32.mrb[0].mxu0
    %696 = vdwg.mxu0
    %v698 = vrot.slane %v694, 7
    %v700 = vadd.f32 %v514, %v698
    %v701 = vxor.u32 %v700, 2147483648
    %v702 = vmul.f32 %v701, 1.442695
    %v703 = vpow.pop %v702
    %v704 = vadd.f32 %v703, 1.0
    %v705 = vrcp.pop %v704
    %v706 = vmul.f32 1.0, %v705
    %v707 = vtanh.pop %v700
    %v709 = vrot.slane %v615, 7
    %v711 = vmul.f32 %v706, %v709
    %713 = vrot.lane.b32.xlu0 %v707, 64
    %v714 = vpop.permute.xlu0 %713
    %v716 = vmul.f32 %v706, %v714
    %718 = vrot.lane.b32.xlu0 %v716, 32
    %v719 = vpop.permute.xlu0 %718
    %v721 = vadd.f32 %v711, %v719
    %v722 = vtanh.pop %v721
    %724 = vrot.lane.b32.xlu0 %v722, 64
    %v725 = vpop.permute.xlu0 %724
    %v727 = vmul.f32 %v706, %v725
    %v729 = vrot.slane %v727, 1
    %730 = vrot.lane.b32.xlu0 %v729, 32
    %v731 = vpop.permute.xlu0 %730
    %v732 = vsel %vm515, %v731, 0
    %734 = vmatprep.subr.mxu0 0.0
    %735 = vmatpush1.msra.mxu0 %v508
    %736 = vmatprep.subr.mxu0 0.0
    %737 = vmatpush1.msra.mxu0 %v509
    %738 = vmatprep.subr.mxu0 0.0
    %739 = vmatpush1.msra.mxu0 %v510
    %740 = vmatprep.subr.mxu0 0.0
    %741 = vmatpush1.msra.mxu0 %v511
    %742 = vmatprep.subr.mxu0 0.0
    %743 = vmatpush1.msra.mxu0 0.0
    %744 = vmatprep.subr.mxu0 0.0
    %745 = vmatpush1.msra.mxu0 0.0
    %746 = vmatprep.subr.mxu0 0.0
    %747 = vmatpush1.msra.mxu0 0.0
    %748 = vmatprep.subr.mxu0 0.0
    %749 = vmatpush1.msra.mxu0 0.0
    %750 = vmatprep.subr.mxu0 0.0
    %751 = vmatpush1.msra.mxu0 0.0
    %752 = vmatprep.subr.mxu0 0.0
    %753 = vmatpush1.msra.mxu0 0.0
    %754 = vmatprep.subr.mxu0 0.0
    %755 = vmatpush1.msra.mxu0 0.0
    %756 = vmatprep.subr.mxu0 0.0
    %757 = vmatpush1.msra.mxu0 0.0
    %758 = vmatprep.subr.mxu0 0.0
    %759 = vmatpush1.msra.mxu0 0.0
    %760 = vmatprep.subr.mxu0 0.0
    %761 = vmatpush1.msra.mxu0 0.0
    %762 = vmatprep.subr.mxu0 0.0
    %763 = vmatpush1.msra.mxu0 0.0
    %764 = vmatprep.subr.mxu0 0.0
    %765 = vmatpush1.msra.mxu0 0.0
    %766 = vmatprep.subr.mxu0 0.0
    %767 = vmatpush1.msra.mxu0 0.0
    %768 = vmatprep.subr.mxu0 0.0
    %769 = vmatpush1.msra.mxu0 0.0
    %770 = vmatprep.subr.mxu0 0.0
    %771 = vmatpush1.msra.mxu0 0.0
    %772 = vmatprep.subr.mxu0 0.0
    %773 = vmatpush1.msra.mxu0 0.0
    %774 = vmatprep.subr.mxu0 0.0
    %775 = vmatpush1.msra.mxu0 0.0
    %776 = vmatprep.subr.mxu0 0.0
    %777 = vmatpush1.msra.mxu0 0.0
    %778 = vmatprep.subr.mxu0 0.0
    %779 = vmatpush1.msra.mxu0 0.0
    %780 = vmatprep.subr.mxu0 0.0
    %781 = vmatpush1.msra.mxu0 0.0
    %782 = vmatprep.subr.mxu0 0.0
    %783 = vmatpush1.msra.mxu0 0.0
    %784 = vmatprep.subr.mxu0 0.0
    %785 = vmatpush1.msra.mxu0 0.0
    %786 = vmatprep.subr.mxu0 0.0
    %787 = vmatpush1.msra.mxu0 0.0
    %788 = vmatprep.subr.mxu0 0.0
    %789 = vmatpush1.msra.mxu0 0.0
    %790 = vmatprep.subr.mxu0 0.0
    %791 = vmatpush1.msra.mxu0 0.0
    %792 = vmatprep.subr.mxu0 0.0
    %793 = vmatpush1.msra.mxu0 0.0
    %794 = vmatprep.subr.mxu0 0.0
    %795 = vmatpush1.msra.mxu0 0.0
    %796 = vmatprep.subr.mxu0 0.0
    %797 = vmatpush1.msra.mxu0 0.0
    %798 = vmatprep.mubr.f32.mxu0 0.0
    %799 = vmatmul.mubr.f32.gmra.mrb[0].mxu0 %v732
    %v800 = vpop.f32.mrb[0].mxu0
    %v801 = vadd.f32 0.0, %v800
    %v802 = vpop.f32.mrb[0].mxu0
    %803 = vdwg.mxu0
    %v805 = vrot.slane %v801, 6
    %v807 = vadd.f32 %v514, %v805
    %v808 = vxor.u32 %v807, 2147483648
    %v809 = vmul.f32 %v808, 1.442695
    %v810 = vpow.pop %v809
    %v811 = vadd.f32 %v810, 1.0
    %v812 = vrcp.pop %v811
    %v813 = vmul.f32 1.0, %v812
    %v814 = vtanh.pop %v807
    %v816 = vrot.slane %v721, 7
    %v818 = vmul.f32 %v813, %v816
    %820 = vrot.lane.b32.xlu0 %v814, 64
    %v821 = vpop.permute.xlu0 %820
    %v823 = vmul.f32 %v813, %v821
    %825 = vrot.lane.b32.xlu0 %v823, 32
    %v826 = vpop.permute.xlu0 %825
    %v828 = vadd.f32 %v818, %v826
    %v829 = vtanh.pop %v828
    %831 = vrot.lane.b32.xlu0 %v829, 64
    %v832 = vpop.permute.xlu0 %831
    %v834 = vmul.f32 %v813, %v832
    %v836 = vrot.slane %v834, 2
    %837 = vrot.lane.b32.xlu0 %v836, 32
    %v838 = vpop.permute.xlu0 %837
    %v839 = vsel %vm515, %v838, 0
    %841 = vmatprep.subr.mxu0 0.0
    %842 = vmatpush1.msra.mxu0 %v508
    %843 = vmatprep.subr.mxu0 0.0
    %844 = vmatpush1.msra.mxu0 %v509
    %845 = vmatprep.subr.mxu0 0.0
    %846 = vmatpush1.msra.mxu0 %v510
    %847 = vmatprep.subr.mxu0 0.0
    %848 = vmatpush1.msra.mxu0 %v511
    %849 = vmatprep.subr.mxu0 0.0
    %850 = vmatpush1.msra.mxu0 0.0
    %851 = vmatprep.subr.mxu0 0.0
    %852 = vmatpush1.msra.mxu0 0.0
    %853 = vmatprep.subr.mxu0 0.0
    %854 = vmatpush1.msra.mxu0 0.0
    %855 = vmatprep.subr.mxu0 0.0
    %856 = vmatpush1.msra.mxu0 0.0
    %857 = vmatprep.subr.mxu0 0.0
    %858 = vmatpush1.msra.mxu0 0.0
    %859 = vmatprep.subr.mxu0 0.0
    %860 = vmatpush1.msra.mxu0 0.0
    %861 = vmatprep.subr.mxu0 0.0
    %862 = vmatpush1.msra.mxu0 0.0
    %863 = vmatprep.subr.mxu0 0.0
    %864 = vmatpush1.msra.mxu0 0.0
    %865 = vmatprep.subr.mxu0 0.0
    %866 = vmatpush1.msra.mxu0 0.0
    %867 = vmatprep.subr.mxu0 0.0
    %868 = vmatpush1.msra.mxu0 0.0
    %869 = vmatprep.subr.mxu0 0.0
    %870 = vmatpush1.msra.mxu0 0.0
    %871 = vmatprep.subr.mxu0 0.0
    %872 = vmatpush1.msra.mxu0 0.0
    %873 = vmatprep.subr.mxu0 0.0
    %874 = vmatpush1.msra.mxu0 0.0
    %875 = vmatprep.subr.mxu0 0.0
    %876 = vmatpush1.msra.mxu0 0.0
    %877 = vmatprep.subr.mxu0 0.0
    %878 = vmatpush1.msra.mxu0 0.0
    %879 = vmatprep.subr.mxu0 0.0
    %880 = vmatpush1.msra.mxu0 0.0
    %881 = vmatprep.subr.mxu0 0.0
    %882 = vmatpush1.msra.mxu0 0.0
    %883 = vmatprep.subr.mxu0 0.0
    %884 = vmatpush1.msra.mxu0 0.0
    %885 = vmatprep.subr.mxu0 0.0
    %886 = vmatpush1.msra.mxu0 0.0
    %887 = vmatprep.subr.mxu0 0.0
    %888 = vmatpush1.msra.mxu0 0.0
    %889 = vmatprep.subr.mxu0 0.0
    %890 = vmatpush1.msra.mxu0 0.0
    %891 = vmatprep.subr.mxu0 0.0
    %892 = vmatpush1.msra.mxu0 0.0
    %893 = vmatprep.subr.mxu0 0.0
    %894 = vmatpush1.msra.mxu0 0.0
    %895 = vmatprep.subr.mxu0 0.0
    %896 = vmatpush1.msra.mxu0 0.0
    %897 = vmatprep.subr.mxu0 0.0
    %898 = vmatpush1.msra.mxu0 0.0
    %899 = vmatprep.subr.mxu0 0.0
    %900 = vmatpush1.msra.mxu0 0.0
    %901 = vmatprep.subr.mxu0 0.0
    %902 = vmatpush1.msra.mxu0 0.0
    %903 = vmatprep.subr.mxu0 0.0
    %904 = vmatpush1.msra.mxu0 0.0
    %905 = vmatprep.mubr.f32.mxu0 0.0
    %906 = vmatmul.mubr.f32.gmra.mrb[0].mxu0 %v839
    %v907 = vpop.f32.mrb[0].mxu0
    %v908 = vadd.f32 0.0, %v907
    %v909 = vpop.f32.mrb[0].mxu0
    %910 = vdwg.mxu0
    %v912 = vrot.slane %v908, 5
    %v914 = vadd.f32 %v514, %v912
    %v915 = vxor.u32 %v914, 2147483648
    %v916 = vmul.f32 %v915, 1.442695
    %v917 = vpow.pop %v916
    %v918 = vadd.f32 %v917, 1.0
    %v919 = vrcp.pop %v918
    %v920 = vmul.f32 1.0, %v919
    %v921 = vtanh.pop %v914
    %v923 = vrot.slane %v828, 7
    %v925 = vmul.f32 %v920, %v923
    %927 = vrot.lane.b32.xlu0 %v921, 64
    %v928 = vpop.permute.xlu0 %927
    %v930 = vmul.f32 %v920, %v928
    %932 = vrot.lane.b32.xlu0 %v930, 32
    %v933 = vpop.permute.xlu0 %932
    %v935 = vadd.f32 %v925, %v933
    %v936 = vtanh.pop %v935
    %938 = vrot.lane.b32.xlu0 %v936, 64
    %v939 = vpop.permute.xlu0 %938
    %v941 = vmul.f32 %v920, %v939
    %v943 = vrot.slane %v941, 3
    %944 = vrot.lane.b32.xlu0 %v943, 32
    %v945 = vpop.permute.xlu0 %944
    %v946 = vsel %vm515, %v945, 0
    %948 = vmatprep.subr.mxu0 0.0
    %949 = vmatpush1.msra.mxu0 %v508
    %950 = vmatprep.subr.mxu0 0.0
    %951 = vmatpush1.msra.mxu0 %v509
    %952 = vmatprep.subr.mxu0 0.0
    %953 = vmatpush1.msra.mxu0 %v510
    %954 = vmatprep.subr.mxu0 0.0
    %955 = vmatpush1.msra.mxu0 %v511
    %956 = vmatprep.subr.mxu0 0.0
    %957 = vmatpush1.msra.mxu0 0.0
    %958 = vmatprep.subr.mxu0 0.0
    %959 = vmatpush1.msra.mxu0 0.0
    %960 = vmatprep.subr.mxu0 0.0
    %961 = vmatpush1.msra.mxu0 0.0
    %962 = vmatprep.subr.mxu0 0.0
    %963 = vmatpush1.msra.mxu0 0.0
    %964 = vmatprep.subr.mxu0 0.0
    %965 = vmatpush1.msra.mxu0 0.0
    %966 = vmatprep.subr.mxu0 0.0
    %967 = vmatpush1.msra.mxu0 0.0
    %968 = vmatprep.subr.mxu0 0.0
    %969 = vmatpush1.msra.mxu0 0.0
    %970 = vmatprep.subr.mxu0 0.0
    %971 = vmatpush1.msra.mxu0 0.0
    %972 = vmatprep.subr.mxu0 0.0
    %973 = vmatpush1.msra.mxu0 0.0
    %974 = vmatprep.subr.mxu0 0.0
    %975 = vmatpush1.msra.mxu0 0.0
    %976 = vmatprep.subr.mxu0 0.0
    %977 = vmatpush1.msra.mxu0 0.0
    %978 = vmatprep.subr.mxu0 0.0
    %979 = vmatpush1.msra.mxu0 0.0
    %980 = vmatprep.subr.mxu0 0.0
    %981 = vmatpush1.msra.mxu0 0.0
    %982 = vmatprep.subr.mxu0 0.0
    %983 = vmatpush1.msra.mxu0 0.0
    %984 = vmatprep.subr.mxu0 0.0
    %985 = vmatpush1.msra.mxu0 0.0
    %986 = vmatprep.subr.mxu0 0.0
    %987 = vmatpush1.msra.mxu0 0.0
    %988 = vmatprep.subr.mxu0 0.0
    %989 = vmatpush1.msra.mxu0 0.0
    %990 = vmatprep.subr.mxu0 0.0
    %991 = vmatpush1.msra.mxu0 0.0
    %992 = vmatprep.subr.mxu0 0.0
    %993 = vmatpush1.msra.mxu0 0.0
    %994 = vmatprep.subr.mxu0 0.0
    %995 = vmatpush1.msra.mxu0 0.0
    %996 = vmatprep.subr.mxu0 0.0
    %997 = vmatpush1.msra.mxu0 0.0
    %998 = vmatprep.subr.mxu0 0.0
    %999 = vmatpush1.msra.mxu0 0.0
    %1000 = vmatprep.subr.mxu0 0.0
    %1001 = vmatpush1.msra.mxu0 0.0
    %1002 = vmatprep.subr.mxu0 0.0
    %1003 = vmatpush1.msra.mxu0 0.0
    %1004 = vmatprep.subr.mxu0 0.0
    %1005 = vmatpush1.msra.mxu0 0.0
    %1006 = vmatprep.subr.mxu0 0.0
    %1007 = vmatpush1.msra.mxu0 0.0
    %1008 = vmatprep.subr.mxu0 0.0
    %1009 = vmatpush1.msra.mxu0 0.0
    %1010 = vmatprep.subr.mxu0 0.0
    %1011 = vmatpush1.msra.mxu0 0.0
    %1012 = vmatprep.mubr.f32.mxu0 0.0
    %1013 = vmatmul.mubr.f32.gmra.mrb[0].mxu0 %v946
    %v1014 = vpop.f32.mrb[0].mxu0
    %v1015 = vadd.f32 0.0, %v1014
    %v1016 = vpop.f32.mrb[0].mxu0
    %1017 = vdwg.mxu0
    %v1019 = vrot.slane %v1015, 4
    %v1021 = vadd.f32 %v514, %v1019
    %v1022 = vxor.u32 %v1021, 2147483648
    %v1023 = vmul.f32 %v1022, 1.442695
    %v1024 = vpow.pop %v1023
    %v1025 = vadd.f32 %v1024, 1.0
    %v1026 = vrcp.pop %v1025
    %v1027 = vmul.f32 1.0, %v1026
    %v1028 = vtanh.pop %v1021
    %v1030 = vrot.slane %v935, 7
    %v1032 = vmul.f32 %v1027, %v1030
    %1034 = vrot.lane.b32.xlu0 %v1028, 64
    %v1035 = vpop.permute.xlu0 %1034
    %v1037 = vmul.f32 %v1027, %v1035
    %1039 = vrot.lane.b32.xlu0 %v1037, 32
    %v1040 = vpop.permute.xlu0 %1039
    %v1042 = vadd.f32 %v1032, %v1040
    %v1043 = vtanh.pop %v1042
    %1045 = vrot.lane.b32.xlu0 %v1043, 64
    %v1046 = vpop.permute.xlu0 %1045
    %v1048 = vmul.f32 %v1027, %v1046
    %v1050 = vrot.slane %v1048, 4
    %1051 = vrot.lane.b32.xlu0 %v1050, 32
    %v1052 = vpop.permute.xlu0 %1051
    %v1053 = vsel %vm515, %v1052, 0
    %1055 = vmatprep.subr.mxu0 0.0
    %1056 = vmatpush1.msra.mxu0 %v508
    %1057 = vmatprep.subr.mxu0 0.0
    %1058 = vmatpush1.msra.mxu0 %v509
    %1059 = vmatprep.subr.mxu0 0.0
    %1060 = vmatpush1.msra.mxu0 %v510
    %1061 = vmatprep.subr.mxu0 0.0
    %1062 = vmatpush1.msra.mxu0 %v511
    %1063 = vmatprep.subr.mxu0 0.0
    %1064 = vmatpush1.msra.mxu0 0.0
    %1065 = vmatprep.subr.mxu0 0.0
    %1066 = vmatpush1.msra.mxu0 0.0
    %1067 = vmatprep.subr.mxu0 0.0
    %1068 = vmatpush1.msra.mxu0 0.0
    %1069 = vmatprep.subr.mxu0 0.0
    %1070 = vmatpush1.msra.mxu0 0.0
    %1071 = vmatprep.subr.mxu0 0.0
    %1072 = vmatpush1.msra.mxu0 0.0
    %1073 = vmatprep.subr.mxu0 0.0
    %1074 = vmatpush1.msra.mxu0 0.0
    %1075 = vmatprep.subr.mxu0 0.0
    %1076 = vmatpush1.msra.mxu0 0.0
    %1077 = vmatprep.subr.mxu0 0.0
    %1078 = vmatpush1.msra.mxu0 0.0
    %1079 = vmatprep.subr.mxu0 0.0
    %1080 = vmatpush1.msra.mxu0 0.0
    %1081 = vmatprep.subr.mxu0 0.0
    %1082 = vmatpush1.msra.mxu0 0.0
    %1083 = vmatprep.subr.mxu0 0.0
    %1084 = vmatpush1.msra.mxu0 0.0
    %1085 = vmatprep.subr.mxu0 0.0
    %1086 = vmatpush1.msra.mxu0 0.0
    %1087 = vmatprep.subr.mxu0 0.0
    %1088 = vmatpush1.msra.mxu0 0.0
    %1089 = vmatprep.subr.mxu0 0.0
    %1090 = vmatpush1.msra.mxu0 0.0
    %1091 = vmatprep.subr.mxu0 0.0
    %1092 = vmatpush1.msra.mxu0 0.0
    %1093 = vmatprep.subr.mxu0 0.0
    %1094 = vmatpush1.msra.mxu0 0.0
    %1095 = vmatprep.subr.mxu0 0.0
    %1096 = vmatpush1.msra.mxu0 0.0
    %1097 = vmatprep.subr.mxu0 0.0
    %1098 = vmatpush1.msra.mxu0 0.0
    %1099 = vmatprep.subr.mxu0 0.0
    %1100 = vmatpush1.msra.mxu0 0.0
    %1101 = vmatprep.subr.mxu0 0.0
    %1102 = vmatpush1.msra.mxu0 0.0
    %1103 = vmatprep.subr.mxu0 0.0
    %1104 = vmatpush1.msra.mxu0 0.0
    %1105 = vmatprep.subr.mxu0 0.0
    %1106 = vmatpush1.msra.mxu0 0.0
    %1107 = vmatprep.subr.mxu0 0.0
    %1108 = vmatpush1.msra.mxu0 0.0
    %1109 = vmatprep.subr.mxu0 0.0
    %1110 = vmatpush1.msra.mxu0 0.0
    %1111 = vmatprep.subr.mxu0 0.0
    %1112 = vmatpush1.msra.mxu0 0.0
    %1113 = vmatprep.subr.mxu0 0.0
    %1114 = vmatpush1.msra.mxu0 0.0
    %1115 = vmatprep.subr.mxu0 0.0
    %1116 = vmatpush1.msra.mxu0 0.0
    %1117 = vmatprep.subr.mxu0 0.0
    %1118 = vmatpush1.msra.mxu0 0.0
    %1119 = vmatprep.mubr.f32.mxu0 0.0
    %1120 = vmatmul.mubr.f32.gmra.mrb[0].mxu0 %v1053
    %v1121 = vpop.f32.mrb[0].mxu0
    %v1122 = vadd.f32 0.0, %v1121
    %v1123 = vpop.f32.mrb[0].mxu0
    %1124 = vdwg.mxu0
    %v1126 = vrot.slane %v1122, 3
    %v1128 = vadd.f32 %v514, %v1126
    %v1129 = vxor.u32 %v1128, 2147483648
    %v1130 = vmul.f32 %v1129, 1.442695
    %v1131 = vpow.pop %v1130
    %v1132 = vadd.f32 %v1131, 1.0
    %v1133 = vrcp.pop %v1132
    %v1134 = vmul.f32 1.0, %v1133
    %v1135 = vtanh.pop %v1128
    %v1137 = vrot.slane %v1042, 7
    %v1139 = vmul.f32 %v1134, %v1137
    %1141 = vrot.lane.b32.xlu0 %v1135, 64
    %v1142 = vpop.permute.xlu0 %1141
    %v1144 = vmul.f32 %v1134, %v1142
    %1146 = vrot.lane.b32.xlu0 %v1144, 32
    %v1147 = vpop.permute.xlu0 %1146
    %v1149 = vadd.f32 %v1139, %v1147
    %v1150 = vtanh.pop %v1149
    %1152 = vrot.lane.b32.xlu0 %v1150, 64
    %v1153 = vpop.permute.xlu0 %1152
    %v1155 = vmul.f32 %v1134, %v1153
    %v1157 = vrot.slane %v1155, 5
    %1158 = vrot.lane.b32.xlu0 %v1157, 32
    %v1159 = vpop.permute.xlu0 %1158
    %v1160 = vsel %vm515, %v1159, 0
    %1162 = vmatprep.subr.mxu0 0.0
    %1163 = vmatpush1.msra.mxu0 %v508
    %1164 = vmatprep.subr.mxu0 0.0
    %1165 = vmatpush1.msra.mxu0 %v509
    %1166 = vmatprep.subr.mxu0 0.0
    %1167 = vmatpush1.msra.mxu0 %v510
    %1168 = vmatprep.subr.mxu0 0.0
    %1169 = vmatpush1.msra.mxu0 %v511
    %1170 = vmatprep.subr.mxu0 0.0
    %1171 = vmatpush1.msra.mxu0 0.0
    %1172 = vmatprep.subr.mxu0 0.0
    %1173 = vmatpush1.msra.mxu0 0.0
    %1174 = vmatprep.subr.mxu0 0.0
    %1175 = vmatpush1.msra.mxu0 0.0
    %1176 = vmatprep.subr.mxu0 0.0
    %1177 = vmatpush1.msra.mxu0 0.0
    %1178 = vmatprep.subr.mxu0 0.0
    %1179 = vmatpush1.msra.mxu0 0.0
    %1180 = vmatprep.subr.mxu0 0.0
    %1181 = vmatpush1.msra.mxu0 0.0
    %1182 = vmatprep.subr.mxu0 0.0
    %1183 = vmatpush1.msra.mxu0 0.0
    %1184 = vmatprep.subr.mxu0 0.0
    %1185 = vmatpush1.msra.mxu0 0.0
    %1186 = vmatprep.subr.mxu0 0.0
    %1187 = vmatpush1.msra.mxu0 0.0
    %1188 = vmatprep.subr.mxu0 0.0
    %1189 = vmatpush1.msra.mxu0 0.0
    %1190 = vmatprep.subr.mxu0 0.0
    %1191 = vmatpush1.msra.mxu0 0.0
    %1192 = vmatprep.subr.mxu0 0.0
    %1193 = vmatpush1.msra.mxu0 0.0
    %1194 = vmatprep.subr.mxu0 0.0
    %1195 = vmatpush1.msra.mxu0 0.0
    %1196 = vmatprep.subr.mxu0 0.0
    %1197 = vmatpush1.msra.mxu0 0.0
    %1198 = vmatprep.subr.mxu0 0.0
    %1199 = vmatpush1.msra.mxu0 0.0
    %1200 = vmatprep.subr.mxu0 0.0
    %1201 = vmatpush1.msra.mxu0 0.0
    %1202 = vmatprep.subr.mxu0 0.0
    %1203 = vmatpush1.msra.mxu0 0.0
    %1204 = vmatprep.subr.mxu0 0.0
    %1205 = vmatpush1.msra.mxu0 0.0
    %1206 = vmatprep.subr.mxu0 0.0
    %1207 = vmatpush1.msra.mxu0 0.0
    %1208 = vmatprep.subr.mxu0 0.0
    %1209 = vmatpush1.msra.mxu0 0.0
    %1210 = vmatprep.subr.mxu0 0.0
    %1211 = vmatpush1.msra.mxu0 0.0
    %1212 = vmatprep.subr.mxu0 0.0
    %1213 = vmatpush1.msra.mxu0 0.0
    %1214 = vmatprep.subr.mxu0 0.0
    %1215 = vmatpush1.msra.mxu0 0.0
    %1216 = vmatprep.subr.mxu0 0.0
    %1217 = vmatpush1.msra.mxu0 0.0
    %1218 = vmatprep.subr.mxu0 0.0
    %1219 = vmatpush1.msra.mxu0 0.0
    %1220 = vmatprep.subr.mxu0 0.0
    %1221 = vmatpush1.msra.mxu0 0.0
    %1222 = vmatprep.subr.mxu0 0.0
    %1223 = vmatpush1.msra.mxu0 0.0
    %1224 = vmatprep.subr.mxu0 0.0
    %1225 = vmatpush1.msra.mxu0 0.0
    %1226 = vmatprep.mubr.f32.mxu0 0.0
    %1227 = vmatmul.mubr.f32.gmra.mrb[0].mxu0 %v1160
    %v1228 = vpop.f32.mrb[0].mxu0
    %v1229 = vadd.f32 0.0, %v1228
    %v1230 = vpop.f32.mrb[0].mxu0
    %1231 = vdwg.mxu0
    %v1233 = vrot.slane %v1229, 2
    %v1235 = vadd.f32 %v514, %v1233
    %v1236 = vxor.u32 %v1235, 2147483648
    %v1237 = vmul.f32 %v1236, 1.442695
    %v1238 = vpow.pop %v1237
    %v1239 = vadd.f32 %v1238, 1.0
    %v1240 = vrcp.pop %v1239
    %v1241 = vmul.f32 1.0, %v1240
    %v1242 = vtanh.pop %v1235
    %v1244 = vrot.slane %v1149, 7
    %v1246 = vmul.f32 %v1241, %v1244
    %1248 = vrot.lane.b32.xlu0 %v1242, 64
    %v1249 = vpop.permute.xlu0 %1248
    %v1251 = vmul.f32 %v1241, %v1249
    %1253 = vrot.lane.b32.xlu0 %v1251, 32
    %v1254 = vpop.permute.xlu0 %1253
    %v1256 = vadd.f32 %v1246, %v1254
    %v1257 = vtanh.pop %v1256
    %1259 = vrot.lane.b32.xlu0 %v1257, 64
    %v1260 = vpop.permute.xlu0 %1259
    %v1262 = vmul.f32 %v1241, %v1260
    %v1264 = vrot.slane %v1262, 6
    %1265 = vrot.lane.b32.xlu0 %v1264, 32
    %v1266 = vpop.permute.xlu0 %1265
    %v1267 = vsel %vm515, %v1266, 0
    %1269 = vmatprep.subr.mxu0 0.0
    %1270 = vmatpush1.msra.mxu0 %v508
    %1271 = vmatprep.subr.mxu0 0.0
    %1272 = vmatpush1.msra.mxu0 %v509
    %1273 = vmatprep.subr.mxu0 0.0
    %1274 = vmatpush1.msra.mxu0 %v510
    %1275 = vmatprep.subr.mxu0 0.0
    %1276 = vmatpush1.msra.mxu0 %v511
    %1277 = vmatprep.subr.mxu0 0.0
    %1278 = vmatpush1.msra.mxu0 0.0
    %1279 = vmatprep.subr.mxu0 0.0
    %1280 = vmatpush1.msra.mxu0 0.0
    %1281 = vmatprep.subr.mxu0 0.0
    %1282 = vmatpush1.msra.mxu0 0.0
    %1283 = vmatprep.subr.mxu0 0.0
    %1284 = vmatpush1.msra.mxu0 0.0
    %1285 = vmatprep.subr.mxu0 0.0
    %1286 = vmatpush1.msra.mxu0 0.0
    %1287 = vmatprep.subr.mxu0 0.0
    %1288 = vmatpush1.msra.mxu0 0.0
    %1289 = vmatprep.subr.mxu0 0.0
    %1290 = vmatpush1.msra.mxu0 0.0
    %1291 = vmatprep.subr.mxu0 0.0
    %1292 = vmatpush1.msra.mxu0 0.0
    %1293 = vmatprep.subr.mxu0 0.0
    %1294 = vmatpush1.msra.mxu0 0.0
    %1295 = vmatprep.subr.mxu0 0.0
    %1296 = vmatpush1.msra.mxu0 0.0
    %1297 = vmatprep.subr.mxu0 0.0
    %1298 = vmatpush1.msra.mxu0 0.0
    %1299 = vmatprep.subr.mxu0 0.0
    %1300 = vmatpush1.msra.mxu0 0.0
    %1301 = vmatprep.subr.mxu0 0.0
    %1302 = vmatpush1.msra.mxu0 0.0
    %1303 = vmatprep.subr.mxu0 0.0
    %1304 = vmatpush1.msra.mxu0 0.0
    %1305 = vmatprep.subr.mxu0 0.0
    %1306 = vmatpush1.msra.mxu0 0.0
    %1307 = vmatprep.subr.mxu0 0.0
    %1308 = vmatpush1.msra.mxu0 0.0
    %1309 = vmatprep.subr.mxu0 0.0
    %1310 = vmatpush1.msra.mxu0 0.0
    %1311 = vmatprep.subr.mxu0 0.0
    %1312 = vmatpush1.msra.mxu0 0.0
    %1313 = vmatprep.subr.mxu0 0.0
    %1314 = vmatpush1.msra.mxu0 0.0
    %1315 = vmatprep.subr.mxu0 0.0
    %1316 = vmatpush1.msra.mxu0 0.0
    %1317 = vmatprep.subr.mxu0 0.0
    %1318 = vmatpush1.msra.mxu0 0.0
    %1319 = vmatprep.subr.mxu0 0.0
    %1320 = vmatpush1.msra.mxu0 0.0
    %1321 = vmatprep.subr.mxu0 0.0
    %1322 = vmatpush1.msra.mxu0 0.0
    %1323 = vmatprep.subr.mxu0 0.0
    %1324 = vmatpush1.msra.mxu0 0.0
    %1325 = vmatprep.subr.mxu0 0.0
    %1326 = vmatpush1.msra.mxu0 0.0
    %1327 = vmatprep.subr.mxu0 0.0
    %1328 = vmatpush1.msra.mxu0 0.0
    %1329 = vmatprep.subr.mxu0 0.0
    %1330 = vmatpush1.msra.mxu0 0.0
    %1331 = vmatprep.subr.mxu0 0.0
    %1332 = vmatpush1.msra.mxu0 0.0
    %1333 = vmatprep.mubr.f32.mxu0 0.0
    %1334 = vmatmul.mubr.f32.gmra.mrb[0].mxu0 %v1267
    %v1335 = vpop.f32.mrb[0].mxu0
    %v1336 = vadd.f32 0.0, %v1335
    %v1337 = vpop.f32.mrb[0].mxu0
    %1338 = vdwg.mxu0
    %v1340 = vrot.slane %v1336, 1
    %v1342 = vadd.f32 %v514, %v1340
    %v1343 = vxor.u32 %v1342, 2147483648
    %v1344 = vmul.f32 %v1343, 1.442695
    %v1345 = vpow.pop %v1344
    %v1346 = vadd.f32 %v1345, 1.0
    %v1347 = vrcp.pop %v1346
    %v1348 = vmul.f32 1.0, %v1347
    %v1349 = vtanh.pop %v1342
    %v1351 = vrot.slane %v1256, 7
    %v1353 = vmul.f32 %v1348, %v1351
    %1355 = vrot.lane.b32.xlu0 %v1349, 64
    %v1356 = vpop.permute.xlu0 %1355
    %v1358 = vmul.f32 %v1348, %v1356
    %1360 = vrot.lane.b32.xlu0 %v1358, 32
    %v1361 = vpop.permute.xlu0 %1360
    %v1363 = vadd.f32 %v1353, %v1361
    %v1364 = vtanh.pop %v1363
    %1366 = vrot.lane.b32.xlu0 %v1364, 64
    %v1367 = vpop.permute.xlu0 %1366
    %v1369 = vmul.f32 %v1348, %v1367
    %1371 = vrot.lane.b32.xlu0 %v1369, 32
    %v1372 = vpop.permute.xlu0 %1371
    %vm1374 = vcmask 261127
    %1375 = vst.msk [vmem:[#allocation3 - $0x7] sm:$0x80] %vm1374, %v1372
    %1377 = vrot.lane.b32.xlu0 %v1363, 96
    %v1378 = vpop.permute.xlu0 %1377
    %1380 = vst.msk [vmem:[#allocation4 - $0x7] sm:$0x80] %vm1374, %v1378
    // Predicated region
    $region46: #{tpu_custom_call.1} parent=1 // pred_check
      %p1381 = pneg %p77
    $region47: #{tpu_custom_call.1} parent=1 // pred_check_branch
      %1383 = sbr.rel (%p1381) target = $region49
    $region48: #{tpu_custom_call.1} parent=1 // pred_region
      %v1384 = vld [vmem:[#allocation11] sm:$0xff]
      %v1385 = vld [vmem:[#allocation11 + $0x8] sm:$0xff]
      %v1386 = vld [vmem:[#allocation11 + $0x10] sm:$0xff]
      %v1387 = vld [vmem:[#allocation11 + $0x18] sm:$0xff]
      %v1388 = vld [vmem:[%s5] sm:$0x1]
      %v1389 = vrot.slane %v1369, 7
      %1390 = vrot.lane.b32.xlu0 %v1389, 32
      %v1391 = vpop.permute.xlu0 %1390
      %v1392 = vsel %vm515, %v1391, 0
      %1394 = vmatprep.subr.mxu0 0.0
      %1395 = vmatpush1.msra.mxu0 %v1384
      %1396 = vmatprep.subr.mxu0 0.0
      %1397 = vmatpush1.msra.mxu0 %v1385
      %1398 = vmatprep.subr.mxu0 0.0
      %1399 = vmatpush1.msra.mxu0 %v1386
      %1400 = vmatprep.subr.mxu0 0.0
      %1401 = vmatpush1.msra.mxu0 %v1387
      %1402 = vmatprep.subr.mxu0 0.0
      %1403 = vmatpush1.msra.mxu0 0.0
      %1404 = vmatprep.subr.mxu0 0.0
      %1405 = vmatpush1.msra.mxu0 0.0
      %1406 = vmatprep.subr.mxu0 0.0
      %1407 = vmatpush1.msra.mxu0 0.0
      %1408 = vmatprep.subr.mxu0 0.0
      %1409 = vmatpush1.msra.mxu0 0.0
      %1410 = vmatprep.subr.mxu0 0.0
      %1411 = vmatpush1.msra.mxu0 0.0
      %1412 = vmatprep.subr.mxu0 0.0
      %1413 = vmatpush1.msra.mxu0 0.0
      %1414 = vmatprep.subr.mxu0 0.0
      %1415 = vmatpush1.msra.mxu0 0.0
      %1416 = vmatprep.subr.mxu0 0.0
      %1417 = vmatpush1.msra.mxu0 0.0
      %1418 = vmatprep.subr.mxu0 0.0
      %1419 = vmatpush1.msra.mxu0 0.0
      %1420 = vmatprep.subr.mxu0 0.0
      %1421 = vmatpush1.msra.mxu0 0.0
      %1422 = vmatprep.subr.mxu0 0.0
      %1423 = vmatpush1.msra.mxu0 0.0
      %1424 = vmatprep.subr.mxu0 0.0
      %1425 = vmatpush1.msra.mxu0 0.0
      %1426 = vmatprep.subr.mxu0 0.0
      %1427 = vmatpush1.msra.mxu0 0.0
      %1428 = vmatprep.subr.mxu0 0.0
      %1429 = vmatpush1.msra.mxu0 0.0
      %1430 = vmatprep.subr.mxu0 0.0
      %1431 = vmatpush1.msra.mxu0 0.0
      %1432 = vmatprep.subr.mxu0 0.0
      %1433 = vmatpush1.msra.mxu0 0.0
      %1434 = vmatprep.subr.mxu0 0.0
      %1435 = vmatpush1.msra.mxu0 0.0
      %1436 = vmatprep.subr.mxu0 0.0
      %1437 = vmatpush1.msra.mxu0 0.0
      %1438 = vmatprep.subr.mxu0 0.0
      %1439 = vmatpush1.msra.mxu0 0.0
      %1440 = vmatprep.subr.mxu0 0.0
      %1441 = vmatpush1.msra.mxu0 0.0
      %1442 = vmatprep.subr.mxu0 0.0
      %1443 = vmatpush1.msra.mxu0 0.0
      %1444 = vmatprep.subr.mxu0 0.0
      %1445 = vmatpush1.msra.mxu0 0.0
      %1446 = vmatprep.subr.mxu0 0.0
      %1447 = vmatpush1.msra.mxu0 0.0
      %1448 = vmatprep.subr.mxu0 0.0
      %1449 = vmatpush1.msra.mxu0 0.0
      %1450 = vmatprep.subr.mxu0 0.0
      %1451 = vmatpush1.msra.mxu0 0.0
      %1452 = vmatprep.subr.mxu0 0.0
      %1453 = vmatpush1.msra.mxu0 0.0
      %1454 = vmatprep.subr.mxu0 0.0
      %1455 = vmatpush1.msra.mxu0 0.0
      %1456 = vmatprep.subr.mxu0 0.0
      %1457 = vmatpush1.msra.mxu0 0.0
      %1458 = vmatprep.mubr.f32.mxu0 0.0
      %1459 = vmatmul.mubr.f32.gmra.mrb[0].mxu0 %v1392
      %v1460 = vpop.f32.mrb[0].mxu0
      %v1461 = vadd.f32 %v1388, %v1460
      %v1462 = vpop.f32.mrb[0].mxu0
      %1463 = vdwg.mxu0
      %1464 = vst [vmem:[#allocation13] sm:$0x1] %v1461
    $region49: #{tpu_custom_call.1} parent=1 // pred_fallthru
      _
    // Predicated region
    $region50: #{tpu_custom_call.1} parent=1 // pred_check
      _
    $region51: #{tpu_custom_call.1} parent=1 // pred_check_branch
      %1466 = sbr.rel (0) target = $region53
    $region52: #{tpu_custom_call.1} parent=1 // pred_region
      %s1468 = ssub.s32 16, 16
      %1469 = vsyncadd [#allocation7], %s1468
      %s1471 = sshll.u32 [#allocation13], 4
      %s1472 = int_to_ptr.vmem [resolvable:$true] %s1471
      %1474 = dma.vmem_to_hbm [thread:$0]  %s1472, 16, %s6, [#allocation7]
    $region53: #{tpu_custom_call.1} parent=1 // pred_fallthru
      _
    // Predicated region
    $region54: #{tpu_custom_call.1} parent=1 // pred_check
      _
    $region55: #{tpu_custom_call.1} parent=1 // pred_check_branch
      %1476 = sbr.rel (0) target = $region57
    $region56: #{tpu_custom_call.1} parent=1 // pred_region
      %1477 = dma.done [#allocation7], 16
    $region57: #{tpu_custom_call.1} parent=1 // pred_fallthru
      _
    %1478 = vsyncpa [#allocation6], 1
    %1479 = vsyncpa [#allocation9], 1
    %1480 = vsyncpa [#allocation12], 1
    %1481 = vsyncpa [#allocation7], 1

</llo_original>
